<compile_context>
chip_gen: v7x
topology: tpu7x:2x2x1
jax: 0.10.0
libtpu: 0.0.40
codegen_flags: <defaults>
</compile_context>

<pallas_src>
import numpy as np
import jax
import jax.numpy as jnp
from jax import lax
from jax.experimental import pallas as pl
from jax.experimental.pallas import tpu as pltpu


def _sigmoid(z):
    # exp -> EUP; exact reciprocal keeps the divide off the hot VALU path.
    return pl.reciprocal(1.0 + jnp.exp(-z), approx=False)


def _make_attention_kernel(H, W, Nb):
    HW = H * W
    K = 7  # 7x7 spatial conv, padding 3

    def kernel(x_ref, w1t_ref, b1_ref, w2_ref, b2_ref, mask_ref,
               wsa_ref, bsa_ref, o_ref):
        w1t = w1t_ref[...]        # (C, Cr)
        b1 = b1_ref[...]          # (1, Cr)
        w2 = w2_ref[...]          # (C, Cr)
        b2 = b2_ref[...]          # (C, 1)
        bias_sa = bsa_ref[0]      # scalar (SMEM)

        for i in range(Nb):
            x = x_ref[i]          # (C, HW), HW lane-dense

            # ---- channel attention: tiny FCs as bcast-mul + reduce (VPU) ----
            ca_mean = jnp.mean(x, axis=1, keepdims=True)                 # (C, 1)
            hid = jnp.sum(w1t * ca_mean, axis=0, keepdims=True) + b1     # (1, Cr)
            hid = jnp.maximum(hid, 0.0)
            ca = jnp.sum(w2 * hid, axis=1, keepdims=True) + b2           # (C, 1)
            ca = _sigmoid(ca)

            # ---- spatial attention: 7x7 conv as 49 shifted MACs ----
            avg_map = jnp.mean(x, axis=0, keepdims=True)                 # (1, HW)
            max_map = jnp.max(x, axis=0, keepdims=True)                  # (1, HW)

            acc = jnp.zeros((1, HW), jnp.float32) + bias_sa
            for k in range(K * K):
                dh = k // K - 3
                dw = k % K - 3
                s = (-(dh * W + dw)) % HW
                if s == 0:
                    sh_avg, sh_max = avg_map, max_map
                else:
                    sh_avg = pltpu.roll(avg_map, shift=s, axis=1)
                    sh_max = pltpu.roll(max_map, shift=s, axis=1)
                contrib = wsa_ref[0, k] * sh_avg + wsa_ref[1, k] * sh_max
                acc = acc + mask_ref[pl.ds(k, 1), :] * contrib
            sa = _sigmoid(acc)                                           # (1, HW)

            # ---- fuse: x * channel-attention + spatial-attention ----
            o_ref[i] = x * ca + sa

    return kernel


def _build_boundary_masks(H, W):
    """(49, HW) {0,1} masks; mask[k, h*W+w] == 1 iff (h+dh, w+dw) is in-bounds
    for the k-th 7x7 tap (dh = k//7 - 3, dw = k%7 - 3).  Static in H, W."""
    HW = H * W
    hh, ww = np.meshgrid(np.arange(H), np.arange(W), indexing="ij")
    hh = hh.reshape(-1)
    ww = ww.reshape(-1)
    masks = np.zeros((49, HW), np.float32)
    for k in range(49):
        dh, dw = k // 7 - 3, k % 7 - 3
        valid = (hh + dh >= 0) & (hh + dh < H) & (ww + dw >= 0) & (ww + dw < W)
        masks[k] = valid.astype(np.float32)
    return jnp.asarray(masks)


def _pick_batch_block(N, max_nb=4):
    """Batch elements per grid step: amortize per-step pipeline overhead while
    keeping >= 2 grid steps when possible (both v7x TensorCores get work)."""
    best = 1
    for nb in range(1, min(N, max_nb) + 1):
        if N % nb == 0 and (N // nb >= 2 or N == 1):
            best = nb
    return best


def attention_layer_pallas(x_nchw, params):
    N, C, H, W = x_nchw.shape
    HW = H * W
    Cr = params["w1"].shape[0]
    Nb = _pick_batch_block(N)

    x_l = x_nchw.reshape(N, C, HW)                       # free: no transpose

    w1t = jnp.asarray(params["w1"], jnp.float32).T       # (C, Cr)
    b1r = jnp.asarray(params["b1"], jnp.float32).reshape(1, Cr)
    w2m = jnp.asarray(params["w2"], jnp.float32)          # (C, Cr)
    b2r = jnp.asarray(params["b2"], jnp.float32).reshape(C, 1)
    wsa = jnp.asarray(params["wsa"], jnp.float32).reshape(2, 49)   # (1,2,7,7)->(2,49)
    bsa = jnp.asarray(params["bsa"], jnp.float32).reshape(-1)      # (1,)
    masks = _build_boundary_masks(H, W)                   # (49, HW)

    kernel = _make_attention_kernel(H, W, Nb)

    def fixed(shape):
        return pl.BlockSpec(shape, lambda n: (0,) * len(shape))

    out = pl.pallas_call(
        kernel,
        out_shape=jax.ShapeDtypeStruct((N, C, HW), jnp.float32),
        grid=(N // Nb,),
        in_specs=[
            pl.BlockSpec((Nb, C, HW), lambda n: (n, 0, 0)),          # x
            fixed((C, Cr)),                                          # w1^T
            fixed((1, Cr)),                                          # b1
            fixed((C, Cr)),                                          # w2
            fixed((C, 1)),                                           # b2
            fixed((49, HW)),                                         # boundary masks
            pl.BlockSpec(memory_space=pltpu.MemorySpace.SMEM),       # 7x7 weights (2,49)
            pl.BlockSpec(memory_space=pltpu.MemorySpace.SMEM),       # conv bias (1,)
        ],
        out_specs=pl.BlockSpec((Nb, C, HW), lambda n: (n, 0, 0)),
        compiler_params=pltpu.CompilerParams(dimension_semantics=("parallel",)),
    )(x_l, w1t, b1r, w2m, b2r, masks, wsa, bsa)

    return out.reshape(N, C, H, W)


def attention_layer_ref(x, params):
    """Pure-JAX reference matching the PyTorch forward exactly (NCHW)."""
    w1, b1 = params["w1"], params["b1"]   # (Cr, C), (Cr,)
    w2, b2 = params["w2"], params["b2"]   # (C, Cr), (C,)
    wsa, bsa = params["wsa"], params["bsa"]

    ca = jnp.mean(x, axis=(2, 3), keepdims=True)                                   # (N,C,1,1)
    h = jnp.einsum("rc,ncij->nrij", w1, ca, precision=lax.Precision.HIGHEST)
    h = jnp.maximum(h + b1[None, :, None, None], 0.0)
    ca = jnp.einsum("cr,nrij->ncij", w2, h, precision=lax.Precision.HIGHEST)
    ca = jax.nn.sigmoid(ca + b2[None, :, None, None])

    avgout = jnp.mean(x, axis=1, keepdims=True)
    maxout = jnp.max(x, axis=1, keepdims=True)
    sa_in = jnp.concatenate([avgout, maxout], axis=1)
    sa = lax.conv_general_dilated(
        sa_in, wsa, window_strides=(1, 1), padding=[(3, 3), (3, 3)],
        dimension_numbers=("NCHW", "OIHW", "NCHW"),
        precision=lax.Precision.HIGHEST,
    )
    sa = jax.nn.sigmoid(sa + bsa[None, :, None, None])
    return x * ca + sa


if __name__ == "__main__":
    N, C, H, W = 2, 32, 16, 16
    reduction = 16
    Cr = C // reduction

    key = jax.random.PRNGKey(0)
    k = jax.random.split(key, 7)
    x = jax.random.normal(k[0], (N, C, H, W), jnp.float32)

    params = {
        # Conv2d(C, C//r, 1) weight (C//r, C, 1, 1) squeezed -> (Cr, C)
        "w1": jax.random.normal(k[1], (Cr, C), jnp.float32) * 0.2,
        "b1": jax.random.normal(k[2], (Cr,), jnp.float32) * 0.1,
        # Conv2d(C//r, C, 1) weight (C, C//r, 1, 1) squeezed -> (C, Cr)
        "w2": jax.random.normal(k[3], (C, Cr), jnp.float32) * 0.2,
        "b2": jax.random.normal(k[4], (C,), jnp.float32) * 0.1,
        # Conv2d(2, 1, 7, padding=3)
        "wsa": jax.random.normal(k[5], (1, 2, 7, 7), jnp.float32) * 0.1,
        "bsa": jax.random.normal(k[6], (1,), jnp.float32) * 0.1,
    }

    out = attention_layer_pallas(x, params)
    out = jax.block_until_ready(out)

    ref = jax.block_until_ready(attention_layer_ref(x, params))
    np.testing.assert_allclose(np.asarray(out), np.asarray(ref), rtol=1e-3, atol=1e-3)

    print("KERNEL_OK")
</pallas_src>

<mosaic_0001>
module attributes {stable_mosaic.version = 11 : i64} {
  func.func @kernel(%arg0: i32, %arg1: memref<1x32x256xf32, #tpu.memory_space<vmem>>, %arg2: memref<32x2xf32, #tpu.memory_space<vmem>>, %arg3: memref<1x2xf32, #tpu.memory_space<vmem>>, %arg4: memref<32x2xf32, #tpu.memory_space<vmem>>, %arg5: memref<32x1xf32, #tpu.memory_space<vmem>>, %arg6: memref<49x256xf32, #tpu.memory_space<vmem>>, %arg7: memref<2x49xf32, #tpu.memory_space<smem>>, %arg8: memref<1xf32, #tpu.memory_space<smem>>, %arg9: memref<1x32x256xf32, #tpu.memory_space<vmem>>) attributes {dimension_semantics = [#tpu.dimension_semantics<parallel>], iteration_bounds = array<i64: 2>, scalar_prefetch = 0 : i64, scratch_operands = 0 : i64, tpu.core_type = #tpu.core_type<tc>, window_params = [{transform_indices = @transform_0, window_bounds = array<i64: 1, 32, 256>}, {pipeline_mode = #tpu.pipeline_mode<synchronous>, transform_indices = @transform_1, window_bounds = array<i64: 32, 2>}, {pipeline_mode = #tpu.pipeline_mode<synchronous>, transform_indices = @transform_2, window_bounds = array<i64: 1, 2>}, {pipeline_mode = #tpu.pipeline_mode<synchronous>, transform_indices = @transform_3, window_bounds = array<i64: 32, 2>}, {pipeline_mode = #tpu.pipeline_mode<synchronous>, transform_indices = @transform_4, window_bounds = array<i64: 32, 1>}, {pipeline_mode = #tpu.pipeline_mode<synchronous>, transform_indices = @transform_5, window_bounds = array<i64: 49, 256>}, {transform_indices = @transform_6, window_bounds = array<i64: 2, 49>}, {transform_indices = @transform_7, window_bounds = array<i64: 1>}, {transform_indices = @transform_8, window_bounds = array<i64: 1, 32, 256>}]} {
    %c0 = arith.constant 0 : index
    %c0_0 = arith.constant 0 : index
    %0 = vector.load %arg2[%c0, %c0_0] : memref<32x2xf32, #tpu.memory_space<vmem>>, vector<32x2xf32>
    %c0_1 = arith.constant 0 : index
    %c0_2 = arith.constant 0 : index
    %1 = vector.load %arg3[%c0_1, %c0_2] : memref<1x2xf32, #tpu.memory_space<vmem>>, vector<1x2xf32>
    %c0_3 = arith.constant 0 : index
    %c0_4 = arith.constant 0 : index
    %2 = vector.load %arg4[%c0_3, %c0_4] : memref<32x2xf32, #tpu.memory_space<vmem>>, vector<32x2xf32>
    %c0_5 = arith.constant 0 : index
    %c0_6 = arith.constant 0 : index
    %3 = vector.load %arg5[%c0_5, %c0_6] : memref<32x1xf32, #tpu.memory_space<vmem>>, vector<32x1xf32>
    %c0_7 = arith.constant 0 : index
    %4 = memref.load %arg8[%c0_7] : memref<1xf32, #tpu.memory_space<smem>>
    %c0_8 = arith.constant 0 : index
    %c0_9 = arith.constant 0 : index
    %c0_10 = arith.constant 0 : index
    %5 = vector.load %arg1[%c0_8, %c0_9, %c0_10] : memref<1x32x256xf32, #tpu.memory_space<vmem>>, vector<1x32x256xf32>
    %6 = vector.shape_cast %5 : vector<1x32x256xf32> to vector<32x256xf32>
    %cst = arith.constant dense<0.000000e+00> : vector<32xf32>
    %7 = vector.multi_reduction <add>, %6, %cst [1] : vector<32x256xf32> to vector<32xf32>
    %8 = vector.shape_cast %7 : vector<32xf32> to vector<32x1xf32>
    %cst_11 = arith.constant 2.560000e+02 : f32
    %9 = vector.broadcast %cst_11 : f32 to vector<32x1xf32>
    %10 = arith.divf %8, %9 : vector<32x1xf32>
    %11 = vector.broadcast %10 : vector<32x1xf32> to vector<32x2xf32>
    %12 = arith.mulf %0, %11 : vector<32x2xf32>
    %cst_12 = arith.constant dense<0.000000e+00> : vector<2xf32>
    %13 = vector.multi_reduction <add>, %12, %cst_12 [0] : vector<32x2xf32> to vector<2xf32>
    %14 = vector.shape_cast %13 : vector<2xf32> to vector<1x2xf32>
    %15 = arith.addf %14, %1 : vector<1x2xf32>
    %cst_13 = arith.constant 0.000000e+00 : f32
    %16 = vector.broadcast %cst_13 : f32 to vector<1x2xf32>
    %17 = arith.maximumf %15, %16 : vector<1x2xf32>
    %18 = vector.broadcast %17 : vector<1x2xf32> to vector<32x2xf32>
    %19 = arith.mulf %2, %18 : vector<32x2xf32>
    %cst_14 = arith.constant dense<0.000000e+00> : vector<32xf32>
    %20 = vector.multi_reduction <add>, %19, %cst_14 [1] : vector<32x2xf32> to vector<32xf32>
    %21 = vector.shape_cast %20 : vector<32xf32> to vector<32x1xf32>
    %22 = arith.addf %21, %3 : vector<32x1xf32>
    %cst_15 = arith.constant 0.000000e+00 : f32
    %23 = vector.broadcast %cst_15 : f32 to vector<32x1xf32>
    %24 = arith.subf %23, %22 : vector<32x1xf32>
    %25 = math.exp %24 : vector<32x1xf32>
    %cst_16 = arith.constant 1.000000e+00 : f32
    %26 = vector.broadcast %cst_16 : f32 to vector<32x1xf32>
    %27 = arith.addf %26, %25 : vector<32x1xf32>
    %28 = tpu.reciprocal %27 : vector<32x1xf32> -> vector<32x1xf32>
    %cst_17 = arith.constant dense<0.000000e+00> : vector<256xf32>
    %29 = vector.multi_reduction <add>, %6, %cst_17 [0] : vector<32x256xf32> to vector<256xf32>
    %30 = vector.shape_cast %29 : vector<256xf32> to vector<1x256xf32>
    %cst_18 = arith.constant 3.200000e+01 : f32
    %31 = vector.broadcast %cst_18 : f32 to vector<1x256xf32>
    %32 = arith.divf %30, %31 : vector<1x256xf32>
    %cst_19 = arith.constant dense<0xFF800000> : vector<256xf32>
    %33 = vector.multi_reduction <maximumf>, %6, %cst_19 [0] : vector<32x256xf32> to vector<256xf32>
    %34 = vector.shape_cast %33 : vector<256xf32> to vector<1x256xf32>
    %cst_20 = arith.constant 0.000000e+00 : f32
    %35 = vector.broadcast %cst_20 : f32 to vector<1x256xf32>
    %36 = vector.broadcast %4 : f32 to vector<1x256xf32>
    %37 = arith.addf %35, %36 : vector<1x256xf32>
    %c51_i32 = arith.constant 51 : i32
    %38 = tpu.dynamic_rotate %32 by %c51_i32 dim 1 : vector<1x256xf32>, i32 -> vector<1x256xf32>
    %c51_i32_21 = arith.constant 51 : i32
    %39 = tpu.dynamic_rotate %34 by %c51_i32_21 dim 1 : vector<1x256xf32>, i32 -> vector<1x256xf32>
    %c0_22 = arith.constant 0 : index
    %c0_23 = arith.constant 0 : index
    %40 = memref.load %arg7[%c0_22, %c0_23] : memref<2x49xf32, #tpu.memory_space<smem>>
    %41 = vector.broadcast %40 : f32 to vector<1x256xf32>
    %42 = arith.mulf %41, %38 : vector<1x256xf32>
    %c1 = arith.constant 1 : index
    %c0_24 = arith.constant 0 : index
    %43 = memref.load %arg7[%c1, %c0_24] : memref<2x49xf32, #tpu.memory_space<smem>>
    %44 = vector.broadcast %43 : f32 to vector<1x256xf32>
    %45 = arith.mulf %44, %39 : vector<1x256xf32>
    %46 = arith.addf %42, %45 : vector<1x256xf32>
    %c0_25 = arith.constant 0 : index
    %c0_26 = arith.constant 0 : index
    %47 = vector.load %arg6[%c0_25, %c0_26] : memref<49x256xf32, #tpu.memory_space<vmem>>, vector<1x256xf32>
    %48 = arith.mulf %47, %46 : vector<1x256xf32>
    %49 = arith.addf %37, %48 : vector<1x256xf32>
    %c50_i32 = arith.constant 50 : i32
    %50 = tpu.dynamic_rotate %32 by %c50_i32 dim 1 : vector<1x256xf32>, i32 -> vector<1x256xf32>
    %c50_i32_27 = arith.constant 50 : i32
    %51 = tpu.dynamic_rotate %34 by %c50_i32_27 dim 1 : vector<1x256xf32>, i32 -> vector<1x256xf32>
    %c0_28 = arith.constant 0 : index
    %c1_29 = arith.constant 1 : index
    %52 = memref.load %arg7[%c0_28, %c1_29] : memref<2x49xf32, #tpu.memory_space<smem>>
    %53 = vector.broadcast %52 : f32 to vector<1x256xf32>
    %54 = arith.mulf %53, %50 : vector<1x256xf32>
    %c1_30 = arith.constant 1 : index
    %c1_31 = arith.constant 1 : index
    %55 = memref.load %arg7[%c1_30, %c1_31] : memref<2x49xf32, #tpu.memory_space<smem>>
    %56 = vector.broadcast %55 : f32 to vector<1x256xf32>
    %57 = arith.mulf %56, %51 : vector<1x256xf32>
    %58 = arith.addf %54, %57 : vector<1x256xf32>
    %c1_32 = arith.constant 1 : index
    %c0_33 = arith.constant 0 : index
    %59 = vector.load %arg6[%c1_32, %c0_33] : memref<49x256xf32, #tpu.memory_space<vmem>>, vector<1x256xf32>
    %60 = arith.mulf %59, %58 : vector<1x256xf32>
    %61 = arith.addf %49, %60 : vector<1x256xf32>
    %c49_i32 = arith.constant 49 : i32
    %62 = tpu.dynamic_rotate %32 by %c49_i32 dim 1 : vector<1x256xf32>, i32 -> vector<1x256xf32>
    %c49_i32_34 = arith.constant 49 : i32
    %63 = tpu.dynamic_rotate %34 by %c49_i32_34 dim 1 : vector<1x256xf32>, i32 -> vector<1x256xf32>
    %c0_35 = arith.constant 0 : index
    %c2 = arith.constant 2 : index
    %64 = memref.load %arg7[%c0_35, %c2] : memref<2x49xf32, #tpu.memory_space<smem>>
    %65 = vector.broadcast %64 : f32 to vector<1x256xf32>
    %66 = arith.mulf %65, %62 : vector<1x256xf32>
    %c1_36 = arith.constant 1 : index
    %c2_37 = arith.constant 2 : index
    %67 = memref.load %arg7[%c1_36, %c2_37] : memref<2x49xf32, #tpu.memory_space<smem>>
    %68 = vector.broadcast %67 : f32 to vector<1x256xf32>
    %69 = arith.mulf %68, %63 : vector<1x256xf32>
    %70 = arith.addf %66, %69 : vector<1x256xf32>
    %c2_38 = arith.constant 2 : index
    %c0_39 = arith.constant 0 : index
    %71 = vector.load %arg6[%c2_38, %c0_39] : memref<49x256xf32, #tpu.memory_space<vmem>>, vector<1x256xf32>
    %72 = arith.mulf %71, %70 : vector<1x256xf32>
    %73 = arith.addf %61, %72 : vector<1x256xf32>
    %c48_i32 = arith.constant 48 : i32
    %74 = tpu.dynamic_rotate %32 by %c48_i32 dim 1 : vector<1x256xf32>, i32 -> vector<1x256xf32>
    %c48_i32_40 = arith.constant 48 : i32
    %75 = tpu.dynamic_rotate %34 by %c48_i32_40 dim 1 : vector<1x256xf32>, i32 -> vector<1x256xf32>
    %c0_41 = arith.constant 0 : index
    %c3 = arith.constant 3 : index
    %76 = memref.load %arg7[%c0_41, %c3] : memref<2x49xf32, #tpu.memory_space<smem>>
    %77 = vector.broadcast %76 : f32 to vector<1x256xf32>
    %78 = arith.mulf %77, %74 : vector<1x256xf32>
    %c1_42 = arith.constant 1 : index
    %c3_43 = arith.constant 3 : index
    %79 = memref.load %arg7[%c1_42, %c3_43] : memref<2x49xf32, #tpu.memory_space<smem>>
    %80 = vector.broadcast %79 : f32 to vector<1x256xf32>
    %81 = arith.mulf %80, %75 : vector<1x256xf32>
    %82 = arith.addf %78, %81 : vector<1x256xf32>
    %c3_44 = arith.constant 3 : index
    %c0_45 = arith.constant 0 : index
    %83 = vector.load %arg6[%c3_44, %c0_45] : memref<49x256xf32, #tpu.memory_space<vmem>>, vector<1x256xf32>
    %84 = arith.mulf %83, %82 : vector<1x256xf32>
    %85 = arith.addf %73, %84 : vector<1x256xf32>
    %c47_i32 = arith.constant 47 : i32
    %86 = tpu.dynamic_rotate %32 by %c47_i32 dim 1 : vector<1x256xf32>, i32 -> vector<1x256xf32>
    %c47_i32_46 = arith.constant 47 : i32
    %87 = tpu.dynamic_rotate %34 by %c47_i32_46 dim 1 : vector<1x256xf32>, i32 -> vector<1x256xf32>
    %c0_47 = arith.constant 0 : index
    %c4 = arith.constant 4 : index
    %88 = memref.load %arg7[%c0_47, %c4] : memref<2x49xf32, #tpu.memory_space<smem>>
    %89 = vector.broadcast %88 : f32 to vector<1x256xf32>
    %90 = arith.mulf %89, %86 : vector<1x256xf32>
    %c1_48 = arith.constant 1 : index
    %c4_49 = arith.constant 4 : index
    %91 = memref.load %arg7[%c1_48, %c4_49] : memref<2x49xf32, #tpu.memory_space<smem>>
    %92 = vector.broadcast %91 : f32 to vector<1x256xf32>
    %93 = arith.mulf %92, %87 : vector<1x256xf32>
    %94 = arith.addf %90, %93 : vector<1x256xf32>
    %c4_50 = arith.constant 4 : index
    %c0_51 = arith.constant 0 : index
    %95 = vector.load %arg6[%c4_50, %c0_51] : memref<49x256xf32, #tpu.memory_space<vmem>>, vector<1x256xf32>
    %96 = arith.mulf %95, %94 : vector<1x256xf32>
    %97 = arith.addf %85, %96 : vector<1x256xf32>
    %c46_i32 = arith.constant 46 : i32
    %98 = tpu.dynamic_rotate %32 by %c46_i32 dim 1 : vector<1x256xf32>, i32 -> vector<1x256xf32>
    %c46_i32_52 = arith.constant 46 : i32
    %99 = tpu.dynamic_rotate %34 by %c46_i32_52 dim 1 : vector<1x256xf32>, i32 -> vector<1x256xf32>
    %c0_53 = arith.constant 0 : index
    %c5 = arith.constant 5 : index
    %100 = memref.load %arg7[%c0_53, %c5] : memref<2x49xf32, #tpu.memory_space<smem>>
    %101 = vector.broadcast %100 : f32 to vector<1x256xf32>
    %102 = arith.mulf %101, %98 : vector<1x256xf32>
    %c1_54 = arith.constant 1 : index
    %c5_55 = arith.constant 5 : index
    %103 = memref.load %arg7[%c1_54, %c5_55] : memref<2x49xf32, #tpu.memory_space<smem>>
    %104 = vector.broadcast %103 : f32 to vector<1x256xf32>
    %105 = arith.mulf %104, %99 : vector<1x256xf32>
    %106 = arith.addf %102, %105 : vector<1x256xf32>
    %c5_56 = arith.constant 5 : index
    %c0_57 = arith.constant 0 : index
    %107 = vector.load %arg6[%c5_56, %c0_57] : memref<49x256xf32, #tpu.memory_space<vmem>>, vector<1x256xf32>
    %108 = arith.mulf %107, %106 : vector<1x256xf32>
    %109 = arith.addf %97, %108 : vector<1x256xf32>
    %c45_i32 = arith.constant 45 : i32
    %110 = tpu.dynamic_rotate %32 by %c45_i32 dim 1 : vector<1x256xf32>, i32 -> vector<1x256xf32>
    %c45_i32_58 = arith.constant 45 : i32
    %111 = tpu.dynamic_rotate %34 by %c45_i32_58 dim 1 : vector<1x256xf32>, i32 -> vector<1x256xf32>
    %c0_59 = arith.constant 0 : index
    %c6 = arith.constant 6 : index
    %112 = memref.load %arg7[%c0_59, %c6] : memref<2x49xf32, #tpu.memory_space<smem>>
    %113 = vector.broadcast %112 : f32 to vector<1x256xf32>
    %114 = arith.mulf %113, %110 : vector<1x256xf32>
    %c1_60 = arith.constant 1 : index
    %c6_61 = arith.constant 6 : index
    %115 = memref.load %arg7[%c1_60, %c6_61] : memref<2x49xf32, #tpu.memory_space<smem>>
    %116 = vector.broadcast %115 : f32 to vector<1x256xf32>
    %117 = arith.mulf %116, %111 : vector<1x256xf32>
    %118 = arith.addf %114, %117 : vector<1x256xf32>
    %c6_62 = arith.constant 6 : index
    %c0_63 = arith.constant 0 : index
    %119 = vector.load %arg6[%c6_62, %c0_63] : memref<49x256xf32, #tpu.memory_space<vmem>>, vector<1x256xf32>
    %120 = arith.mulf %119, %118 : vector<1x256xf32>
    %121 = arith.addf %109, %120 : vector<1x256xf32>
    %c35_i32 = arith.constant 35 : i32
    %122 = tpu.dynamic_rotate %32 by %c35_i32 dim 1 : vector<1x256xf32>, i32 -> vector<1x256xf32>
    %c35_i32_64 = arith.constant 35 : i32
    %123 = tpu.dynamic_rotate %34 by %c35_i32_64 dim 1 : vector<1x256xf32>, i32 -> vector<1x256xf32>
    %c0_65 = arith.constant 0 : index
    %c7 = arith.constant 7 : index
    %124 = memref.load %arg7[%c0_65, %c7] : memref<2x49xf32, #tpu.memory_space<smem>>
    %125 = vector.broadcast %124 : f32 to vector<1x256xf32>
    %126 = arith.mulf %125, %122 : vector<1x256xf32>
    %c1_66 = arith.constant 1 : index
    %c7_67 = arith.constant 7 : index
    %127 = memref.load %arg7[%c1_66, %c7_67] : memref<2x49xf32, #tpu.memory_space<smem>>
    %128 = vector.broadcast %127 : f32 to vector<1x256xf32>
    %129 = arith.mulf %128, %123 : vector<1x256xf32>
    %130 = arith.addf %126, %129 : vector<1x256xf32>
    %c7_68 = arith.constant 7 : index
    %c0_69 = arith.constant 0 : index
    %131 = vector.load %arg6[%c7_68, %c0_69] : memref<49x256xf32, #tpu.memory_space<vmem>>, vector<1x256xf32>
    %132 = arith.mulf %131, %130 : vector<1x256xf32>
    %133 = arith.addf %121, %132 : vector<1x256xf32>
    %c34_i32 = arith.constant 34 : i32
    %134 = tpu.dynamic_rotate %32 by %c34_i32 dim 1 : vector<1x256xf32>, i32 -> vector<1x256xf32>
    %c34_i32_70 = arith.constant 34 : i32
    %135 = tpu.dynamic_rotate %34 by %c34_i32_70 dim 1 : vector<1x256xf32>, i32 -> vector<1x256xf32>
    %c0_71 = arith.constant 0 : index
    %c8 = arith.constant 8 : index
    %136 = memref.load %arg7[%c0_71, %c8] : memref<2x49xf32, #tpu.memory_space<smem>>
    %137 = vector.broadcast %136 : f32 to vector<1x256xf32>
    %138 = arith.mulf %137, %134 : vector<1x256xf32>
    %c1_72 = arith.constant 1 : index
    %c8_73 = arith.constant 8 : index
    %139 = memref.load %arg7[%c1_72, %c8_73] : memref<2x49xf32, #tpu.memory_space<smem>>
    %140 = vector.broadcast %139 : f32 to vector<1x256xf32>
    %141 = arith.mulf %140, %135 : vector<1x256xf32>
    %142 = arith.addf %138, %141 : vector<1x256xf32>
    %c8_74 = arith.constant 8 : index
    %c0_75 = arith.constant 0 : index
    %143 = vector.load %arg6[%c8_74, %c0_75] : memref<49x256xf32, #tpu.memory_space<vmem>>, vector<1x256xf32>
    %144 = arith.mulf %143, %142 : vector<1x256xf32>
    %145 = arith.addf %133, %144 : vector<1x256xf32>
    %c33_i32 = arith.constant 33 : i32
    %146 = tpu.dynamic_rotate %32 by %c33_i32 dim 1 : vector<1x256xf32>, i32 -> vector<1x256xf32>
    %c33_i32_76 = arith.constant 33 : i32
    %147 = tpu.dynamic_rotate %34 by %c33_i32_76 dim 1 : vector<1x256xf32>, i32 -> vector<1x256xf32>
    %c0_77 = arith.constant 0 : index
    %c9 = arith.constant 9 : index
    %148 = memref.load %arg7[%c0_77, %c9] : memref<2x49xf32, #tpu.memory_space<smem>>
    %149 = vector.broadcast %148 : f32 to vector<1x256xf32>
    %150 = arith.mulf %149, %146 : vector<1x256xf32>
    %c1_78 = arith.constant 1 : index
    %c9_79 = arith.constant 9 : index
    %151 = memref.load %arg7[%c1_78, %c9_79] : memref<2x49xf32, #tpu.memory_space<smem>>
    %152 = vector.broadcast %151 : f32 to vector<1x256xf32>
    %153 = arith.mulf %152, %147 : vector<1x256xf32>
    %154 = arith.addf %150, %153 : vector<1x256xf32>
    %c9_80 = arith.constant 9 : index
    %c0_81 = arith.constant 0 : index
    %155 = vector.load %arg6[%c9_80, %c0_81] : memref<49x256xf32, #tpu.memory_space<vmem>>, vector<1x256xf32>
    %156 = arith.mulf %155, %154 : vector<1x256xf32>
    %157 = arith.addf %145, %156 : vector<1x256xf32>
    %c32_i32 = arith.constant 32 : i32
    %158 = tpu.dynamic_rotate %32 by %c32_i32 dim 1 : vector<1x256xf32>, i32 -> vector<1x256xf32>
    %c32_i32_82 = arith.constant 32 : i32
    %159 = tpu.dynamic_rotate %34 by %c32_i32_82 dim 1 : vector<1x256xf32>, i32 -> vector<1x256xf32>
    %c0_83 = arith.constant 0 : index
    %c10 = arith.constant 10 : index
    %160 = memref.load %arg7[%c0_83, %c10] : memref<2x49xf32, #tpu.memory_space<smem>>
    %161 = vector.broadcast %160 : f32 to vector<1x256xf32>
    %162 = arith.mulf %161, %158 : vector<1x256xf32>
    %c1_84 = arith.constant 1 : index
    %c10_85 = arith.constant 10 : index
    %163 = memref.load %arg7[%c1_84, %c10_85] : memref<2x49xf32, #tpu.memory_space<smem>>
    %164 = vector.broadcast %163 : f32 to vector<1x256xf32>
    %165 = arith.mulf %164, %159 : vector<1x256xf32>
    %166 = arith.addf %162, %165 : vector<1x256xf32>
    %c10_86 = arith.constant 10 : index
    %c0_87 = arith.constant 0 : index
    %167 = vector.load %arg6[%c10_86, %c0_87] : memref<49x256xf32, #tpu.memory_space<vmem>>, vector<1x256xf32>
    %168 = arith.mulf %167, %166 : vector<1x256xf32>
    %169 = arith.addf %157, %168 : vector<1x256xf32>
    %c31_i32 = arith.constant 31 : i32
    %170 = tpu.dynamic_rotate %32 by %c31_i32 dim 1 : vector<1x256xf32>, i32 -> vector<1x256xf32>
    %c31_i32_88 = arith.constant 31 : i32
    %171 = tpu.dynamic_rotate %34 by %c31_i32_88 dim 1 : vector<1x256xf32>, i32 -> vector<1x256xf32>
    %c0_89 = arith.constant 0 : index
    %c11 = arith.constant 11 : index
    %172 = memref.load %arg7[%c0_89, %c11] : memref<2x49xf32, #tpu.memory_space<smem>>
    %173 = vector.broadcast %172 : f32 to vector<1x256xf32>
    %174 = arith.mulf %173, %170 : vector<1x256xf32>
    %c1_90 = arith.constant 1 : index
    %c11_91 = arith.constant 11 : index
    %175 = memref.load %arg7[%c1_90, %c11_91] : memref<2x49xf32, #tpu.memory_space<smem>>
    %176 = vector.broadcast %175 : f32 to vector<1x256xf32>
    %177 = arith.mulf %176, %171 : vector<1x256xf32>
    %178 = arith.addf %174, %177 : vector<1x256xf32>
    %c11_92 = arith.constant 11 : index
    %c0_93 = arith.constant 0 : index
    %179 = vector.load %arg6[%c11_92, %c0_93] : memref<49x256xf32, #tpu.memory_space<vmem>>, vector<1x256xf32>
    %180 = arith.mulf %179, %178 : vector<1x256xf32>
    %181 = arith.addf %169, %180 : vector<1x256xf32>
    %c30_i32 = arith.constant 30 : i32
    %182 = tpu.dynamic_rotate %32 by %c30_i32 dim 1 : vector<1x256xf32>, i32 -> vector<1x256xf32>
    %c30_i32_94 = arith.constant 30 : i32
    %183 = tpu.dynamic_rotate %34 by %c30_i32_94 dim 1 : vector<1x256xf32>, i32 -> vector<1x256xf32>
    %c0_95 = arith.constant 0 : index
    %c12 = arith.constant 12 : index
    %184 = memref.load %arg7[%c0_95, %c12] : memref<2x49xf32, #tpu.memory_space<smem>>
    %185 = vector.broadcast %184 : f32 to vector<1x256xf32>
    %186 = arith.mulf %185, %182 : vector<1x256xf32>
    %c1_96 = arith.constant 1 : index
    %c12_97 = arith.constant 12 : index
    %187 = memref.load %arg7[%c1_96, %c12_97] : memref<2x49xf32, #tpu.memory_space<smem>>
    %188 = vector.broadcast %187 : f32 to vector<1x256xf32>
    %189 = arith.mulf %188, %183 : vector<1x256xf32>
    %190 = arith.addf %186, %189 : vector<1x256xf32>
    %c12_98 = arith.constant 12 : index
    %c0_99 = arith.constant 0 : index
    %191 = vector.load %arg6[%c12_98, %c0_99] : memref<49x256xf32, #tpu.memory_space<vmem>>, vector<1x256xf32>
    %192 = arith.mulf %191, %190 : vector<1x256xf32>
    %193 = arith.addf %181, %192 : vector<1x256xf32>
    %c29_i32 = arith.constant 29 : i32
    %194 = tpu.dynamic_rotate %32 by %c29_i32 dim 1 : vector<1x256xf32>, i32 -> vector<1x256xf32>
    %c29_i32_100 = arith.constant 29 : i32
    %195 = tpu.dynamic_rotate %34 by %c29_i32_100 dim 1 : vector<1x256xf32>, i32 -> vector<1x256xf32>
    %c0_101 = arith.constant 0 : index
    %c13 = arith.constant 13 : index
    %196 = memref.load %arg7[%c0_101, %c13] : memref<2x49xf32, #tpu.memory_space<smem>>
    %197 = vector.broadcast %196 : f32 to vector<1x256xf32>
    %198 = arith.mulf %197, %194 : vector<1x256xf32>
    %c1_102 = arith.constant 1 : index
    %c13_103 = arith.constant 13 : index
    %199 = memref.load %arg7[%c1_102, %c13_103] : memref<2x49xf32, #tpu.memory_space<smem>>
    %200 = vector.broadcast %199 : f32 to vector<1x256xf32>
    %201 = arith.mulf %200, %195 : vector<1x256xf32>
    %202 = arith.addf %198, %201 : vector<1x256xf32>
    %c13_104 = arith.constant 13 : index
    %c0_105 = arith.constant 0 : index
    %203 = vector.load %arg6[%c13_104, %c0_105] : memref<49x256xf32, #tpu.memory_space<vmem>>, vector<1x256xf32>
    %204 = arith.mulf %203, %202 : vector<1x256xf32>
    %205 = arith.addf %193, %204 : vector<1x256xf32>
    %c19_i32 = arith.constant 19 : i32
    %206 = tpu.dynamic_rotate %32 by %c19_i32 dim 1 : vector<1x256xf32>, i32 -> vector<1x256xf32>
    %c19_i32_106 = arith.constant 19 : i32
    %207 = tpu.dynamic_rotate %34 by %c19_i32_106 dim 1 : vector<1x256xf32>, i32 -> vector<1x256xf32>
    %c0_107 = arith.constant 0 : index
    %c14 = arith.constant 14 : index
    %208 = memref.load %arg7[%c0_107, %c14] : memref<2x49xf32, #tpu.memory_space<smem>>
    %209 = vector.broadcast %208 : f32 to vector<1x256xf32>
    %210 = arith.mulf %209, %206 : vector<1x256xf32>
    %c1_108 = arith.constant 1 : index
    %c14_109 = arith.constant 14 : index
    %211 = memref.load %arg7[%c1_108, %c14_109] : memref<2x49xf32, #tpu.memory_space<smem>>
    %212 = vector.broadcast %211 : f32 to vector<1x256xf32>
    %213 = arith.mulf %212, %207 : vector<1x256xf32>
    %214 = arith.addf %210, %213 : vector<1x256xf32>
    %c14_110 = arith.constant 14 : index
    %c0_111 = arith.constant 0 : index
    %215 = vector.load %arg6[%c14_110, %c0_111] : memref<49x256xf32, #tpu.memory_space<vmem>>, vector<1x256xf32>
    %216 = arith.mulf %215, %214 : vector<1x256xf32>
    %217 = arith.addf %205, %216 : vector<1x256xf32>
    %c18_i32 = arith.constant 18 : i32
    %218 = tpu.dynamic_rotate %32 by %c18_i32 dim 1 : vector<1x256xf32>, i32 -> vector<1x256xf32>
    %c18_i32_112 = arith.constant 18 : i32
    %219 = tpu.dynamic_rotate %34 by %c18_i32_112 dim 1 : vector<1x256xf32>, i32 -> vector<1x256xf32>
    %c0_113 = arith.constant 0 : index
    %c15 = arith.constant 15 : index
    %220 = memref.load %arg7[%c0_113, %c15] : memref<2x49xf32, #tpu.memory_space<smem>>
    %221 = vector.broadcast %220 : f32 to vector<1x256xf32>
    %222 = arith.mulf %221, %218 : vector<1x256xf32>
    %c1_114 = arith.constant 1 : index
    %c15_115 = arith.constant 15 : index
    %223 = memref.load %arg7[%c1_114, %c15_115] : memref<2x49xf32, #tpu.memory_space<smem>>
    %224 = vector.broadcast %223 : f32 to vector<1x256xf32>
    %225 = arith.mulf %224, %219 : vector<1x256xf32>
    %226 = arith.addf %222, %225 : vector<1x256xf32>
    %c15_116 = arith.constant 15 : index
    %c0_117 = arith.constant 0 : index
    %227 = vector.load %arg6[%c15_116, %c0_117] : memref<49x256xf32, #tpu.memory_space<vmem>>, vector<1x256xf32>
    %228 = arith.mulf %227, %226 : vector<1x256xf32>
    %229 = arith.addf %217, %228 : vector<1x256xf32>
    %c17_i32 = arith.constant 17 : i32
    %230 = tpu.dynamic_rotate %32 by %c17_i32 dim 1 : vector<1x256xf32>, i32 -> vector<1x256xf32>
    %c17_i32_118 = arith.constant 17 : i32
    %231 = tpu.dynamic_rotate %34 by %c17_i32_118 dim 1 : vector<1x256xf32>, i32 -> vector<1x256xf32>
    %c0_119 = arith.constant 0 : index
    %c16 = arith.constant 16 : index
    %232 = memref.load %arg7[%c0_119, %c16] : memref<2x49xf32, #tpu.memory_space<smem>>
    %233 = vector.broadcast %232 : f32 to vector<1x256xf32>
    %234 = arith.mulf %233, %230 : vector<1x256xf32>
    %c1_120 = arith.constant 1 : index
    %c16_121 = arith.constant 16 : index
    %235 = memref.load %arg7[%c1_120, %c16_121] : memref<2x49xf32, #tpu.memory_space<smem>>
    %236 = vector.broadcast %235 : f32 to vector<1x256xf32>
    %237 = arith.mulf %236, %231 : vector<1x256xf32>
    %238 = arith.addf %234, %237 : vector<1x256xf32>
    %c16_122 = arith.constant 16 : index
    %c0_123 = arith.constant 0 : index
    %239 = vector.load %arg6[%c16_122, %c0_123] : memref<49x256xf32, #tpu.memory_space<vmem>>, vector<1x256xf32>
    %240 = arith.mulf %239, %238 : vector<1x256xf32>
    %241 = arith.addf %229, %240 : vector<1x256xf32>
    %c16_i32 = arith.constant 16 : i32
    %242 = tpu.dynamic_rotate %32 by %c16_i32 dim 1 : vector<1x256xf32>, i32 -> vector<1x256xf32>
    %c16_i32_124 = arith.constant 16 : i32
    %243 = tpu.dynamic_rotate %34 by %c16_i32_124 dim 1 : vector<1x256xf32>, i32 -> vector<1x256xf32>
    %c0_125 = arith.constant 0 : index
    %c17 = arith.constant 17 : index
    %244 = memref.load %arg7[%c0_125, %c17] : memref<2x49xf32, #tpu.memory_space<smem>>
    %245 = vector.broadcast %244 : f32 to vector<1x256xf32>
    %246 = arith.mulf %245, %242 : vector<1x256xf32>
    %c1_126 = arith.constant 1 : index
    %c17_127 = arith.constant 17 : index
    %247 = memref.load %arg7[%c1_126, %c17_127] : memref<2x49xf32, #tpu.memory_space<smem>>
    %248 = vector.broadcast %247 : f32 to vector<1x256xf32>
    %249 = arith.mulf %248, %243 : vector<1x256xf32>
    %250 = arith.addf %246, %249 : vector<1x256xf32>
    %c17_128 = arith.constant 17 : index
    %c0_129 = arith.constant 0 : index
    %251 = vector.load %arg6[%c17_128, %c0_129] : memref<49x256xf32, #tpu.memory_space<vmem>>, vector<1x256xf32>
    %252 = arith.mulf %251, %250 : vector<1x256xf32>
    %253 = arith.addf %241, %252 : vector<1x256xf32>
    %c15_i32 = arith.constant 15 : i32
    %254 = tpu.dynamic_rotate %32 by %c15_i32 dim 1 : vector<1x256xf32>, i32 -> vector<1x256xf32>
    %c15_i32_130 = arith.constant 15 : i32
    %255 = tpu.dynamic_rotate %34 by %c15_i32_130 dim 1 : vector<1x256xf32>, i32 -> vector<1x256xf32>
    %c0_131 = arith.constant 0 : index
    %c18 = arith.constant 18 : index
    %256 = memref.load %arg7[%c0_131, %c18] : memref<2x49xf32, #tpu.memory_space<smem>>
    %257 = vector.broadcast %256 : f32 to vector<1x256xf32>
    %258 = arith.mulf %257, %254 : vector<1x256xf32>
    %c1_132 = arith.constant 1 : index
    %c18_133 = arith.constant 18 : index
    %259 = memref.load %arg7[%c1_132, %c18_133] : memref<2x49xf32, #tpu.memory_space<smem>>
    %260 = vector.broadcast %259 : f32 to vector<1x256xf32>
    %261 = arith.mulf %260, %255 : vector<1x256xf32>
    %262 = arith.addf %258, %261 : vector<1x256xf32>
    %c18_134 = arith.constant 18 : index
    %c0_135 = arith.constant 0 : index
    %263 = vector.load %arg6[%c18_134, %c0_135] : memref<49x256xf32, #tpu.memory_space<vmem>>, vector<1x256xf32>
    %264 = arith.mulf %263, %262 : vector<1x256xf32>
    %265 = arith.addf %253, %264 : vector<1x256xf32>
    %c14_i32 = arith.constant 14 : i32
    %266 = tpu.dynamic_rotate %32 by %c14_i32 dim 1 : vector<1x256xf32>, i32 -> vector<1x256xf32>
    %c14_i32_136 = arith.constant 14 : i32
    %267 = tpu.dynamic_rotate %34 by %c14_i32_136 dim 1 : vector<1x256xf32>, i32 -> vector<1x256xf32>
    %c0_137 = arith.constant 0 : index
    %c19 = arith.constant 19 : index
    %268 = memref.load %arg7[%c0_137, %c19] : memref<2x49xf32, #tpu.memory_space<smem>>
    %269 = vector.broadcast %268 : f32 to vector<1x256xf32>
    %270 = arith.mulf %269, %266 : vector<1x256xf32>
    %c1_138 = arith.constant 1 : index
    %c19_139 = arith.constant 19 : index
    %271 = memref.load %arg7[%c1_138, %c19_139] : memref<2x49xf32, #tpu.memory_space<smem>>
    %272 = vector.broadcast %271 : f32 to vector<1x256xf32>
    %273 = arith.mulf %272, %267 : vector<1x256xf32>
    %274 = arith.addf %270, %273 : vector<1x256xf32>
    %c19_140 = arith.constant 19 : index
    %c0_141 = arith.constant 0 : index
    %275 = vector.load %arg6[%c19_140, %c0_141] : memref<49x256xf32, #tpu.memory_space<vmem>>, vector<1x256xf32>
    %276 = arith.mulf %275, %274 : vector<1x256xf32>
    %277 = arith.addf %265, %276 : vector<1x256xf32>
    %c13_i32 = arith.constant 13 : i32
    %278 = tpu.dynamic_rotate %32 by %c13_i32 dim 1 : vector<1x256xf32>, i32 -> vector<1x256xf32>
    %c13_i32_142 = arith.constant 13 : i32
    %279 = tpu.dynamic_rotate %34 by %c13_i32_142 dim 1 : vector<1x256xf32>, i32 -> vector<1x256xf32>
    %c0_143 = arith.constant 0 : index
    %c20 = arith.constant 20 : index
    %280 = memref.load %arg7[%c0_143, %c20] : memref<2x49xf32, #tpu.memory_space<smem>>
    %281 = vector.broadcast %280 : f32 to vector<1x256xf32>
    %282 = arith.mulf %281, %278 : vector<1x256xf32>
    %c1_144 = arith.constant 1 : index
    %c20_145 = arith.constant 20 : index
    %283 = memref.load %arg7[%c1_144, %c20_145] : memref<2x49xf32, #tpu.memory_space<smem>>
    %284 = vector.broadcast %283 : f32 to vector<1x256xf32>
    %285 = arith.mulf %284, %279 : vector<1x256xf32>
    %286 = arith.addf %282, %285 : vector<1x256xf32>
    %c20_146 = arith.constant 20 : index
    %c0_147 = arith.constant 0 : index
    %287 = vector.load %arg6[%c20_146, %c0_147] : memref<49x256xf32, #tpu.memory_space<vmem>>, vector<1x256xf32>
    %288 = arith.mulf %287, %286 : vector<1x256xf32>
    %289 = arith.addf %277, %288 : vector<1x256xf32>
    %c3_i32 = arith.constant 3 : i32
    %290 = tpu.dynamic_rotate %32 by %c3_i32 dim 1 : vector<1x256xf32>, i32 -> vector<1x256xf32>
    %c3_i32_148 = arith.constant 3 : i32
    %291 = tpu.dynamic_rotate %34 by %c3_i32_148 dim 1 : vector<1x256xf32>, i32 -> vector<1x256xf32>
    %c0_149 = arith.constant 0 : index
    %c21 = arith.constant 21 : index
    %292 = memref.load %arg7[%c0_149, %c21] : memref<2x49xf32, #tpu.memory_space<smem>>
    %293 = vector.broadcast %292 : f32 to vector<1x256xf32>
    %294 = arith.mulf %293, %290 : vector<1x256xf32>
    %c1_150 = arith.constant 1 : index
    %c21_151 = arith.constant 21 : index
    %295 = memref.load %arg7[%c1_150, %c21_151] : memref<2x49xf32, #tpu.memory_space<smem>>
    %296 = vector.broadcast %295 : f32 to vector<1x256xf32>
    %297 = arith.mulf %296, %291 : vector<1x256xf32>
    %298 = arith.addf %294, %297 : vector<1x256xf32>
    %c21_152 = arith.constant 21 : index
    %c0_153 = arith.constant 0 : index
    %299 = vector.load %arg6[%c21_152, %c0_153] : memref<49x256xf32, #tpu.memory_space<vmem>>, vector<1x256xf32>
    %300 = arith.mulf %299, %298 : vector<1x256xf32>
    %301 = arith.addf %289, %300 : vector<1x256xf32>
    %c2_i32 = arith.constant 2 : i32
    %302 = tpu.dynamic_rotate %32 by %c2_i32 dim 1 : vector<1x256xf32>, i32 -> vector<1x256xf32>
    %c2_i32_154 = arith.constant 2 : i32
    %303 = tpu.dynamic_rotate %34 by %c2_i32_154 dim 1 : vector<1x256xf32>, i32 -> vector<1x256xf32>
    %c0_155 = arith.constant 0 : index
    %c22 = arith.constant 22 : index
    %304 = memref.load %arg7[%c0_155, %c22] : memref<2x49xf32, #tpu.memory_space<smem>>
    %305 = vector.broadcast %304 : f32 to vector<1x256xf32>
    %306 = arith.mulf %305, %302 : vector<1x256xf32>
    %c1_156 = arith.constant 1 : index
    %c22_157 = arith.constant 22 : index
    %307 = memref.load %arg7[%c1_156, %c22_157] : memref<2x49xf32, #tpu.memory_space<smem>>
    %308 = vector.broadcast %307 : f32 to vector<1x256xf32>
    %309 = arith.mulf %308, %303 : vector<1x256xf32>
    %310 = arith.addf %306, %309 : vector<1x256xf32>
    %c22_158 = arith.constant 22 : index
    %c0_159 = arith.constant 0 : index
    %311 = vector.load %arg6[%c22_158, %c0_159] : memref<49x256xf32, #tpu.memory_space<vmem>>, vector<1x256xf32>
    %312 = arith.mulf %311, %310 : vector<1x256xf32>
    %313 = arith.addf %301, %312 : vector<1x256xf32>
    %c1_i32 = arith.constant 1 : i32
    %314 = tpu.dynamic_rotate %32 by %c1_i32 dim 1 : vector<1x256xf32>, i32 -> vector<1x256xf32>
    %c1_i32_160 = arith.constant 1 : i32
    %315 = tpu.dynamic_rotate %34 by %c1_i32_160 dim 1 : vector<1x256xf32>, i32 -> vector<1x256xf32>
    %c0_161 = arith.constant 0 : index
    %c23 = arith.constant 23 : index
    %316 = memref.load %arg7[%c0_161, %c23] : memref<2x49xf32, #tpu.memory_space<smem>>
    %317 = vector.broadcast %316 : f32 to vector<1x256xf32>
    %318 = arith.mulf %317, %314 : vector<1x256xf32>
    %c1_162 = arith.constant 1 : index
    %c23_163 = arith.constant 23 : index
    %319 = memref.load %arg7[%c1_162, %c23_163] : memref<2x49xf32, #tpu.memory_space<smem>>
    %320 = vector.broadcast %319 : f32 to vector<1x256xf32>
    %321 = arith.mulf %320, %315 : vector<1x256xf32>
    %322 = arith.addf %318, %321 : vector<1x256xf32>
    %c23_164 = arith.constant 23 : index
    %c0_165 = arith.constant 0 : index
    %323 = vector.load %arg6[%c23_164, %c0_165] : memref<49x256xf32, #tpu.memory_space<vmem>>, vector<1x256xf32>
    %324 = arith.mulf %323, %322 : vector<1x256xf32>
    %325 = arith.addf %313, %324 : vector<1x256xf32>
    %c0_166 = arith.constant 0 : index
    %c24 = arith.constant 24 : index
    %326 = memref.load %arg7[%c0_166, %c24] : memref<2x49xf32, #tpu.memory_space<smem>>
    %327 = vector.broadcast %326 : f32 to vector<1x256xf32>
    %328 = arith.mulf %327, %32 : vector<1x256xf32>
    %c1_167 = arith.constant 1 : index
    %c24_168 = arith.constant 24 : index
    %329 = memref.load %arg7[%c1_167, %c24_168] : memref<2x49xf32, #tpu.memory_space<smem>>
    %330 = vector.broadcast %329 : f32 to vector<1x256xf32>
    %331 = arith.mulf %330, %34 : vector<1x256xf32>
    %332 = arith.addf %328, %331 : vector<1x256xf32>
    %c24_169 = arith.constant 24 : index
    %c0_170 = arith.constant 0 : index
    %333 = vector.load %arg6[%c24_169, %c0_170] : memref<49x256xf32, #tpu.memory_space<vmem>>, vector<1x256xf32>
    %334 = arith.mulf %333, %332 : vector<1x256xf32>
    %335 = arith.addf %325, %334 : vector<1x256xf32>
    %c255_i32 = arith.constant 255 : i32
    %336 = tpu.dynamic_rotate %32 by %c255_i32 dim 1 : vector<1x256xf32>, i32 -> vector<1x256xf32>
    %c255_i32_171 = arith.constant 255 : i32
    %337 = tpu.dynamic_rotate %34 by %c255_i32_171 dim 1 : vector<1x256xf32>, i32 -> vector<1x256xf32>
    %c0_172 = arith.constant 0 : index
    %c25 = arith.constant 25 : index
    %338 = memref.load %arg7[%c0_172, %c25] : memref<2x49xf32, #tpu.memory_space<smem>>
    %339 = vector.broadcast %338 : f32 to vector<1x256xf32>
    %340 = arith.mulf %339, %336 : vector<1x256xf32>
    %c1_173 = arith.constant 1 : index
    %c25_174 = arith.constant 25 : index
    %341 = memref.load %arg7[%c1_173, %c25_174] : memref<2x49xf32, #tpu.memory_space<smem>>
    %342 = vector.broadcast %341 : f32 to vector<1x256xf32>
    %343 = arith.mulf %342, %337 : vector<1x256xf32>
    %344 = arith.addf %340, %343 : vector<1x256xf32>
    %c25_175 = arith.constant 25 : index
    %c0_176 = arith.constant 0 : index
    %345 = vector.load %arg6[%c25_175, %c0_176] : memref<49x256xf32, #tpu.memory_space<vmem>>, vector<1x256xf32>
    %346 = arith.mulf %345, %344 : vector<1x256xf32>
    %347 = arith.addf %335, %346 : vector<1x256xf32>
    %c254_i32 = arith.constant 254 : i32
    %348 = tpu.dynamic_rotate %32 by %c254_i32 dim 1 : vector<1x256xf32>, i32 -> vector<1x256xf32>
    %c254_i32_177 = arith.constant 254 : i32
    %349 = tpu.dynamic_rotate %34 by %c254_i32_177 dim 1 : vector<1x256xf32>, i32 -> vector<1x256xf32>
    %c0_178 = arith.constant 0 : index
    %c26 = arith.constant 26 : index
    %350 = memref.load %arg7[%c0_178, %c26] : memref<2x49xf32, #tpu.memory_space<smem>>
    %351 = vector.broadcast %350 : f32 to vector<1x256xf32>
    %352 = arith.mulf %351, %348 : vector<1x256xf32>
    %c1_179 = arith.constant 1 : index
    %c26_180 = arith.constant 26 : index
    %353 = memref.load %arg7[%c1_179, %c26_180] : memref<2x49xf32, #tpu.memory_space<smem>>
    %354 = vector.broadcast %353 : f32 to vector<1x256xf32>
    %355 = arith.mulf %354, %349 : vector<1x256xf32>
    %356 = arith.addf %352, %355 : vector<1x256xf32>
    %c26_181 = arith.constant 26 : index
    %c0_182 = arith.constant 0 : index
    %357 = vector.load %arg6[%c26_181, %c0_182] : memref<49x256xf32, #tpu.memory_space<vmem>>, vector<1x256xf32>
    %358 = arith.mulf %357, %356 : vector<1x256xf32>
    %359 = arith.addf %347, %358 : vector<1x256xf32>
    %c253_i32 = arith.constant 253 : i32
    %360 = tpu.dynamic_rotate %32 by %c253_i32 dim 1 : vector<1x256xf32>, i32 -> vector<1x256xf32>
    %c253_i32_183 = arith.constant 253 : i32
    %361 = tpu.dynamic_rotate %34 by %c253_i32_183 dim 1 : vector<1x256xf32>, i32 -> vector<1x256xf32>
    %c0_184 = arith.constant 0 : index
    %c27 = arith.constant 27 : index
    %362 = memref.load %arg7[%c0_184, %c27] : memref<2x49xf32, #tpu.memory_space<smem>>
    %363 = vector.broadcast %362 : f32 to vector<1x256xf32>
    %364 = arith.mulf %363, %360 : vector<1x256xf32>
    %c1_185 = arith.constant 1 : index
    %c27_186 = arith.constant 27 : index
    %365 = memref.load %arg7[%c1_185, %c27_186] : memref<2x49xf32, #tpu.memory_space<smem>>
    %366 = vector.broadcast %365 : f32 to vector<1x256xf32>
    %367 = arith.mulf %366, %361 : vector<1x256xf32>
    %368 = arith.addf %364, %367 : vector<1x256xf32>
    %c27_187 = arith.constant 27 : index
    %c0_188 = arith.constant 0 : index
    %369 = vector.load %arg6[%c27_187, %c0_188] : memref<49x256xf32, #tpu.memory_space<vmem>>, vector<1x256xf32>
    %370 = arith.mulf %369, %368 : vector<1x256xf32>
    %371 = arith.addf %359, %370 : vector<1x256xf32>
    %c243_i32 = arith.constant 243 : i32
    %372 = tpu.dynamic_rotate %32 by %c243_i32 dim 1 : vector<1x256xf32>, i32 -> vector<1x256xf32>
    %c243_i32_189 = arith.constant 243 : i32
    %373 = tpu.dynamic_rotate %34 by %c243_i32_189 dim 1 : vector<1x256xf32>, i32 -> vector<1x256xf32>
    %c0_190 = arith.constant 0 : index
    %c28 = arith.constant 28 : index
    %374 = memref.load %arg7[%c0_190, %c28] : memref<2x49xf32, #tpu.memory_space<smem>>
    %375 = vector.broadcast %374 : f32 to vector<1x256xf32>
    %376 = arith.mulf %375, %372 : vector<1x256xf32>
    %c1_191 = arith.constant 1 : index
    %c28_192 = arith.constant 28 : index
    %377 = memref.load %arg7[%c1_191, %c28_192] : memref<2x49xf32, #tpu.memory_space<smem>>
    %378 = vector.broadcast %377 : f32 to vector<1x256xf32>
    %379 = arith.mulf %378, %373 : vector<1x256xf32>
    %380 = arith.addf %376, %379 : vector<1x256xf32>
    %c28_193 = arith.constant 28 : index
    %c0_194 = arith.constant 0 : index
    %381 = vector.load %arg6[%c28_193, %c0_194] : memref<49x256xf32, #tpu.memory_space<vmem>>, vector<1x256xf32>
    %382 = arith.mulf %381, %380 : vector<1x256xf32>
    %383 = arith.addf %371, %382 : vector<1x256xf32>
    %c242_i32 = arith.constant 242 : i32
    %384 = tpu.dynamic_rotate %32 by %c242_i32 dim 1 : vector<1x256xf32>, i32 -> vector<1x256xf32>
    %c242_i32_195 = arith.constant 242 : i32
    %385 = tpu.dynamic_rotate %34 by %c242_i32_195 dim 1 : vector<1x256xf32>, i32 -> vector<1x256xf32>
    %c0_196 = arith.constant 0 : index
    %c29 = arith.constant 29 : index
    %386 = memref.load %arg7[%c0_196, %c29] : memref<2x49xf32, #tpu.memory_space<smem>>
    %387 = vector.broadcast %386 : f32 to vector<1x256xf32>
    %388 = arith.mulf %387, %384 : vector<1x256xf32>
    %c1_197 = arith.constant 1 : index
    %c29_198 = arith.constant 29 : index
    %389 = memref.load %arg7[%c1_197, %c29_198] : memref<2x49xf32, #tpu.memory_space<smem>>
    %390 = vector.broadcast %389 : f32 to vector<1x256xf32>
    %391 = arith.mulf %390, %385 : vector<1x256xf32>
    %392 = arith.addf %388, %391 : vector<1x256xf32>
    %c29_199 = arith.constant 29 : index
    %c0_200 = arith.constant 0 : index
    %393 = vector.load %arg6[%c29_199, %c0_200] : memref<49x256xf32, #tpu.memory_space<vmem>>, vector<1x256xf32>
    %394 = arith.mulf %393, %392 : vector<1x256xf32>
    %395 = arith.addf %383, %394 : vector<1x256xf32>
    %c241_i32 = arith.constant 241 : i32
    %396 = tpu.dynamic_rotate %32 by %c241_i32 dim 1 : vector<1x256xf32>, i32 -> vector<1x256xf32>
    %c241_i32_201 = arith.constant 241 : i32
    %397 = tpu.dynamic_rotate %34 by %c241_i32_201 dim 1 : vector<1x256xf32>, i32 -> vector<1x256xf32>
    %c0_202 = arith.constant 0 : index
    %c30 = arith.constant 30 : index
    %398 = memref.load %arg7[%c0_202, %c30] : memref<2x49xf32, #tpu.memory_space<smem>>
    %399 = vector.broadcast %398 : f32 to vector<1x256xf32>
    %400 = arith.mulf %399, %396 : vector<1x256xf32>
    %c1_203 = arith.constant 1 : index
    %c30_204 = arith.constant 30 : index
    %401 = memref.load %arg7[%c1_203, %c30_204] : memref<2x49xf32, #tpu.memory_space<smem>>
    %402 = vector.broadcast %401 : f32 to vector<1x256xf32>
    %403 = arith.mulf %402, %397 : vector<1x256xf32>
    %404 = arith.addf %400, %403 : vector<1x256xf32>
    %c30_205 = arith.constant 30 : index
    %c0_206 = arith.constant 0 : index
    %405 = vector.load %arg6[%c30_205, %c0_206] : memref<49x256xf32, #tpu.memory_space<vmem>>, vector<1x256xf32>
    %406 = arith.mulf %405, %404 : vector<1x256xf32>
    %407 = arith.addf %395, %406 : vector<1x256xf32>
    %c240_i32 = arith.constant 240 : i32
    %408 = tpu.dynamic_rotate %32 by %c240_i32 dim 1 : vector<1x256xf32>, i32 -> vector<1x256xf32>
    %c240_i32_207 = arith.constant 240 : i32
    %409 = tpu.dynamic_rotate %34 by %c240_i32_207 dim 1 : vector<1x256xf32>, i32 -> vector<1x256xf32>
    %c0_208 = arith.constant 0 : index
    %c31 = arith.constant 31 : index
    %410 = memref.load %arg7[%c0_208, %c31] : memref<2x49xf32, #tpu.memory_space<smem>>
    %411 = vector.broadcast %410 : f32 to vector<1x256xf32>
    %412 = arith.mulf %411, %408 : vector<1x256xf32>
    %c1_209 = arith.constant 1 : index
    %c31_210 = arith.constant 31 : index
    %413 = memref.load %arg7[%c1_209, %c31_210] : memref<2x49xf32, #tpu.memory_space<smem>>
    %414 = vector.broadcast %413 : f32 to vector<1x256xf32>
    %415 = arith.mulf %414, %409 : vector<1x256xf32>
    %416 = arith.addf %412, %415 : vector<1x256xf32>
    %c31_211 = arith.constant 31 : index
    %c0_212 = arith.constant 0 : index
    %417 = vector.load %arg6[%c31_211, %c0_212] : memref<49x256xf32, #tpu.memory_space<vmem>>, vector<1x256xf32>
    %418 = arith.mulf %417, %416 : vector<1x256xf32>
    %419 = arith.addf %407, %418 : vector<1x256xf32>
    %c239_i32 = arith.constant 239 : i32
    %420 = tpu.dynamic_rotate %32 by %c239_i32 dim 1 : vector<1x256xf32>, i32 -> vector<1x256xf32>
    %c239_i32_213 = arith.constant 239 : i32
    %421 = tpu.dynamic_rotate %34 by %c239_i32_213 dim 1 : vector<1x256xf32>, i32 -> vector<1x256xf32>
    %c0_214 = arith.constant 0 : index
    %c32 = arith.constant 32 : index
    %422 = memref.load %arg7[%c0_214, %c32] : memref<2x49xf32, #tpu.memory_space<smem>>
    %423 = vector.broadcast %422 : f32 to vector<1x256xf32>
    %424 = arith.mulf %423, %420 : vector<1x256xf32>
    %c1_215 = arith.constant 1 : index
    %c32_216 = arith.constant 32 : index
    %425 = memref.load %arg7[%c1_215, %c32_216] : memref<2x49xf32, #tpu.memory_space<smem>>
    %426 = vector.broadcast %425 : f32 to vector<1x256xf32>
    %427 = arith.mulf %426, %421 : vector<1x256xf32>
    %428 = arith.addf %424, %427 : vector<1x256xf32>
    %c32_217 = arith.constant 32 : index
    %c0_218 = arith.constant 0 : index
    %429 = vector.load %arg6[%c32_217, %c0_218] : memref<49x256xf32, #tpu.memory_space<vmem>>, vector<1x256xf32>
    %430 = arith.mulf %429, %428 : vector<1x256xf32>
    %431 = arith.addf %419, %430 : vector<1x256xf32>
    %c238_i32 = arith.constant 238 : i32
    %432 = tpu.dynamic_rotate %32 by %c238_i32 dim 1 : vector<1x256xf32>, i32 -> vector<1x256xf32>
    %c238_i32_219 = arith.constant 238 : i32
    %433 = tpu.dynamic_rotate %34 by %c238_i32_219 dim 1 : vector<1x256xf32>, i32 -> vector<1x256xf32>
    %c0_220 = arith.constant 0 : index
    %c33 = arith.constant 33 : index
    %434 = memref.load %arg7[%c0_220, %c33] : memref<2x49xf32, #tpu.memory_space<smem>>
    %435 = vector.broadcast %434 : f32 to vector<1x256xf32>
    %436 = arith.mulf %435, %432 : vector<1x256xf32>
    %c1_221 = arith.constant 1 : index
    %c33_222 = arith.constant 33 : index
    %437 = memref.load %arg7[%c1_221, %c33_222] : memref<2x49xf32, #tpu.memory_space<smem>>
    %438 = vector.broadcast %437 : f32 to vector<1x256xf32>
    %439 = arith.mulf %438, %433 : vector<1x256xf32>
    %440 = arith.addf %436, %439 : vector<1x256xf32>
    %c33_223 = arith.constant 33 : index
    %c0_224 = arith.constant 0 : index
    %441 = vector.load %arg6[%c33_223, %c0_224] : memref<49x256xf32, #tpu.memory_space<vmem>>, vector<1x256xf32>
    %442 = arith.mulf %441, %440 : vector<1x256xf32>
    %443 = arith.addf %431, %442 : vector<1x256xf32>
    %c237_i32 = arith.constant 237 : i32
    %444 = tpu.dynamic_rotate %32 by %c237_i32 dim 1 : vector<1x256xf32>, i32 -> vector<1x256xf32>
    %c237_i32_225 = arith.constant 237 : i32
    %445 = tpu.dynamic_rotate %34 by %c237_i32_225 dim 1 : vector<1x256xf32>, i32 -> vector<1x256xf32>
    %c0_226 = arith.constant 0 : index
    %c34 = arith.constant 34 : index
    %446 = memref.load %arg7[%c0_226, %c34] : memref<2x49xf32, #tpu.memory_space<smem>>
    %447 = vector.broadcast %446 : f32 to vector<1x256xf32>
    %448 = arith.mulf %447, %444 : vector<1x256xf32>
    %c1_227 = arith.constant 1 : index
    %c34_228 = arith.constant 34 : index
    %449 = memref.load %arg7[%c1_227, %c34_228] : memref<2x49xf32, #tpu.memory_space<smem>>
    %450 = vector.broadcast %449 : f32 to vector<1x256xf32>
    %451 = arith.mulf %450, %445 : vector<1x256xf32>
    %452 = arith.addf %448, %451 : vector<1x256xf32>
    %c34_229 = arith.constant 34 : index
    %c0_230 = arith.constant 0 : index
    %453 = vector.load %arg6[%c34_229, %c0_230] : memref<49x256xf32, #tpu.memory_space<vmem>>, vector<1x256xf32>
    %454 = arith.mulf %453, %452 : vector<1x256xf32>
    %455 = arith.addf %443, %454 : vector<1x256xf32>
    %c227_i32 = arith.constant 227 : i32
    %456 = tpu.dynamic_rotate %32 by %c227_i32 dim 1 : vector<1x256xf32>, i32 -> vector<1x256xf32>
    %c227_i32_231 = arith.constant 227 : i32
    %457 = tpu.dynamic_rotate %34 by %c227_i32_231 dim 1 : vector<1x256xf32>, i32 -> vector<1x256xf32>
    %c0_232 = arith.constant 0 : index
    %c35 = arith.constant 35 : index
    %458 = memref.load %arg7[%c0_232, %c35] : memref<2x49xf32, #tpu.memory_space<smem>>
    %459 = vector.broadcast %458 : f32 to vector<1x256xf32>
    %460 = arith.mulf %459, %456 : vector<1x256xf32>
    %c1_233 = arith.constant 1 : index
    %c35_234 = arith.constant 35 : index
    %461 = memref.load %arg7[%c1_233, %c35_234] : memref<2x49xf32, #tpu.memory_space<smem>>
    %462 = vector.broadcast %461 : f32 to vector<1x256xf32>
    %463 = arith.mulf %462, %457 : vector<1x256xf32>
    %464 = arith.addf %460, %463 : vector<1x256xf32>
    %c35_235 = arith.constant 35 : index
    %c0_236 = arith.constant 0 : index
    %465 = vector.load %arg6[%c35_235, %c0_236] : memref<49x256xf32, #tpu.memory_space<vmem>>, vector<1x256xf32>
    %466 = arith.mulf %465, %464 : vector<1x256xf32>
    %467 = arith.addf %455, %466 : vector<1x256xf32>
    %c226_i32 = arith.constant 226 : i32
    %468 = tpu.dynamic_rotate %32 by %c226_i32 dim 1 : vector<1x256xf32>, i32 -> vector<1x256xf32>
    %c226_i32_237 = arith.constant 226 : i32
    %469 = tpu.dynamic_rotate %34 by %c226_i32_237 dim 1 : vector<1x256xf32>, i32 -> vector<1x256xf32>
    %c0_238 = arith.constant 0 : index
    %c36 = arith.constant 36 : index
    %470 = memref.load %arg7[%c0_238, %c36] : memref<2x49xf32, #tpu.memory_space<smem>>
    %471 = vector.broadcast %470 : f32 to vector<1x256xf32>
    %472 = arith.mulf %471, %468 : vector<1x256xf32>
    %c1_239 = arith.constant 1 : index
    %c36_240 = arith.constant 36 : index
    %473 = memref.load %arg7[%c1_239, %c36_240] : memref<2x49xf32, #tpu.memory_space<smem>>
    %474 = vector.broadcast %473 : f32 to vector<1x256xf32>
    %475 = arith.mulf %474, %469 : vector<1x256xf32>
    %476 = arith.addf %472, %475 : vector<1x256xf32>
    %c36_241 = arith.constant 36 : index
    %c0_242 = arith.constant 0 : index
    %477 = vector.load %arg6[%c36_241, %c0_242] : memref<49x256xf32, #tpu.memory_space<vmem>>, vector<1x256xf32>
    %478 = arith.mulf %477, %476 : vector<1x256xf32>
    %479 = arith.addf %467, %478 : vector<1x256xf32>
    %c225_i32 = arith.constant 225 : i32
    %480 = tpu.dynamic_rotate %32 by %c225_i32 dim 1 : vector<1x256xf32>, i32 -> vector<1x256xf32>
    %c225_i32_243 = arith.constant 225 : i32
    %481 = tpu.dynamic_rotate %34 by %c225_i32_243 dim 1 : vector<1x256xf32>, i32 -> vector<1x256xf32>
    %c0_244 = arith.constant 0 : index
    %c37 = arith.constant 37 : index
    %482 = memref.load %arg7[%c0_244, %c37] : memref<2x49xf32, #tpu.memory_space<smem>>
    %483 = vector.broadcast %482 : f32 to vector<1x256xf32>
    %484 = arith.mulf %483, %480 : vector<1x256xf32>
    %c1_245 = arith.constant 1 : index
    %c37_246 = arith.constant 37 : index
    %485 = memref.load %arg7[%c1_245, %c37_246] : memref<2x49xf32, #tpu.memory_space<smem>>
    %486 = vector.broadcast %485 : f32 to vector<1x256xf32>
    %487 = arith.mulf %486, %481 : vector<1x256xf32>
    %488 = arith.addf %484, %487 : vector<1x256xf32>
    %c37_247 = arith.constant 37 : index
    %c0_248 = arith.constant 0 : index
    %489 = vector.load %arg6[%c37_247, %c0_248] : memref<49x256xf32, #tpu.memory_space<vmem>>, vector<1x256xf32>
    %490 = arith.mulf %489, %488 : vector<1x256xf32>
    %491 = arith.addf %479, %490 : vector<1x256xf32>
    %c224_i32 = arith.constant 224 : i32
    %492 = tpu.dynamic_rotate %32 by %c224_i32 dim 1 : vector<1x256xf32>, i32 -> vector<1x256xf32>
    %c224_i32_249 = arith.constant 224 : i32
    %493 = tpu.dynamic_rotate %34 by %c224_i32_249 dim 1 : vector<1x256xf32>, i32 -> vector<1x256xf32>
    %c0_250 = arith.constant 0 : index
    %c38 = arith.constant 38 : index
    %494 = memref.load %arg7[%c0_250, %c38] : memref<2x49xf32, #tpu.memory_space<smem>>
    %495 = vector.broadcast %494 : f32 to vector<1x256xf32>
    %496 = arith.mulf %495, %492 : vector<1x256xf32>
    %c1_251 = arith.constant 1 : index
    %c38_252 = arith.constant 38 : index
    %497 = memref.load %arg7[%c1_251, %c38_252] : memref<2x49xf32, #tpu.memory_space<smem>>
    %498 = vector.broadcast %497 : f32 to vector<1x256xf32>
    %499 = arith.mulf %498, %493 : vector<1x256xf32>
    %500 = arith.addf %496, %499 : vector<1x256xf32>
    %c38_253 = arith.constant 38 : index
    %c0_254 = arith.constant 0 : index
    %501 = vector.load %arg6[%c38_253, %c0_254] : memref<49x256xf32, #tpu.memory_space<vmem>>, vector<1x256xf32>
    %502 = arith.mulf %501, %500 : vector<1x256xf32>
    %503 = arith.addf %491, %502 : vector<1x256xf32>
    %c223_i32 = arith.constant 223 : i32
    %504 = tpu.dynamic_rotate %32 by %c223_i32 dim 1 : vector<1x256xf32>, i32 -> vector<1x256xf32>
    %c223_i32_255 = arith.constant 223 : i32
    %505 = tpu.dynamic_rotate %34 by %c223_i32_255 dim 1 : vector<1x256xf32>, i32 -> vector<1x256xf32>
    %c0_256 = arith.constant 0 : index
    %c39 = arith.constant 39 : index
    %506 = memref.load %arg7[%c0_256, %c39] : memref<2x49xf32, #tpu.memory_space<smem>>
    %507 = vector.broadcast %506 : f32 to vector<1x256xf32>
    %508 = arith.mulf %507, %504 : vector<1x256xf32>
    %c1_257 = arith.constant 1 : index
    %c39_258 = arith.constant 39 : index
    %509 = memref.load %arg7[%c1_257, %c39_258] : memref<2x49xf32, #tpu.memory_space<smem>>
    %510 = vector.broadcast %509 : f32 to vector<1x256xf32>
    %511 = arith.mulf %510, %505 : vector<1x256xf32>
    %512 = arith.addf %508, %511 : vector<1x256xf32>
    %c39_259 = arith.constant 39 : index
    %c0_260 = arith.constant 0 : index
    %513 = vector.load %arg6[%c39_259, %c0_260] : memref<49x256xf32, #tpu.memory_space<vmem>>, vector<1x256xf32>
    %514 = arith.mulf %513, %512 : vector<1x256xf32>
    %515 = arith.addf %503, %514 : vector<1x256xf32>
    %c222_i32 = arith.constant 222 : i32
    %516 = tpu.dynamic_rotate %32 by %c222_i32 dim 1 : vector<1x256xf32>, i32 -> vector<1x256xf32>
    %c222_i32_261 = arith.constant 222 : i32
    %517 = tpu.dynamic_rotate %34 by %c222_i32_261 dim 1 : vector<1x256xf32>, i32 -> vector<1x256xf32>
    %c0_262 = arith.constant 0 : index
    %c40 = arith.constant 40 : index
    %518 = memref.load %arg7[%c0_262, %c40] : memref<2x49xf32, #tpu.memory_space<smem>>
    %519 = vector.broadcast %518 : f32 to vector<1x256xf32>
    %520 = arith.mulf %519, %516 : vector<1x256xf32>
    %c1_263 = arith.constant 1 : index
    %c40_264 = arith.constant 40 : index
    %521 = memref.load %arg7[%c1_263, %c40_264] : memref<2x49xf32, #tpu.memory_space<smem>>
    %522 = vector.broadcast %521 : f32 to vector<1x256xf32>
    %523 = arith.mulf %522, %517 : vector<1x256xf32>
    %524 = arith.addf %520, %523 : vector<1x256xf32>
    %c40_265 = arith.constant 40 : index
    %c0_266 = arith.constant 0 : index
    %525 = vector.load %arg6[%c40_265, %c0_266] : memref<49x256xf32, #tpu.memory_space<vmem>>, vector<1x256xf32>
    %526 = arith.mulf %525, %524 : vector<1x256xf32>
    %527 = arith.addf %515, %526 : vector<1x256xf32>
    %c221_i32 = arith.constant 221 : i32
    %528 = tpu.dynamic_rotate %32 by %c221_i32 dim 1 : vector<1x256xf32>, i32 -> vector<1x256xf32>
    %c221_i32_267 = arith.constant 221 : i32
    %529 = tpu.dynamic_rotate %34 by %c221_i32_267 dim 1 : vector<1x256xf32>, i32 -> vector<1x256xf32>
    %c0_268 = arith.constant 0 : index
    %c41 = arith.constant 41 : index
    %530 = memref.load %arg7[%c0_268, %c41] : memref<2x49xf32, #tpu.memory_space<smem>>
    %531 = vector.broadcast %530 : f32 to vector<1x256xf32>
    %532 = arith.mulf %531, %528 : vector<1x256xf32>
    %c1_269 = arith.constant 1 : index
    %c41_270 = arith.constant 41 : index
    %533 = memref.load %arg7[%c1_269, %c41_270] : memref<2x49xf32, #tpu.memory_space<smem>>
    %534 = vector.broadcast %533 : f32 to vector<1x256xf32>
    %535 = arith.mulf %534, %529 : vector<1x256xf32>
    %536 = arith.addf %532, %535 : vector<1x256xf32>
    %c41_271 = arith.constant 41 : index
    %c0_272 = arith.constant 0 : index
    %537 = vector.load %arg6[%c41_271, %c0_272] : memref<49x256xf32, #tpu.memory_space<vmem>>, vector<1x256xf32>
    %538 = arith.mulf %537, %536 : vector<1x256xf32>
    %539 = arith.addf %527, %538 : vector<1x256xf32>
    %c211_i32 = arith.constant 211 : i32
    %540 = tpu.dynamic_rotate %32 by %c211_i32 dim 1 : vector<1x256xf32>, i32 -> vector<1x256xf32>
    %c211_i32_273 = arith.constant 211 : i32
    %541 = tpu.dynamic_rotate %34 by %c211_i32_273 dim 1 : vector<1x256xf32>, i32 -> vector<1x256xf32>
    %c0_274 = arith.constant 0 : index
    %c42 = arith.constant 42 : index
    %542 = memref.load %arg7[%c0_274, %c42] : memref<2x49xf32, #tpu.memory_space<smem>>
    %543 = vector.broadcast %542 : f32 to vector<1x256xf32>
    %544 = arith.mulf %543, %540 : vector<1x256xf32>
    %c1_275 = arith.constant 1 : index
    %c42_276 = arith.constant 42 : index
    %545 = memref.load %arg7[%c1_275, %c42_276] : memref<2x49xf32, #tpu.memory_space<smem>>
    %546 = vector.broadcast %545 : f32 to vector<1x256xf32>
    %547 = arith.mulf %546, %541 : vector<1x256xf32>
    %548 = arith.addf %544, %547 : vector<1x256xf32>
    %c42_277 = arith.constant 42 : index
    %c0_278 = arith.constant 0 : index
    %549 = vector.load %arg6[%c42_277, %c0_278] : memref<49x256xf32, #tpu.memory_space<vmem>>, vector<1x256xf32>
    %550 = arith.mulf %549, %548 : vector<1x256xf32>
    %551 = arith.addf %539, %550 : vector<1x256xf32>
    %c210_i32 = arith.constant 210 : i32
    %552 = tpu.dynamic_rotate %32 by %c210_i32 dim 1 : vector<1x256xf32>, i32 -> vector<1x256xf32>
    %c210_i32_279 = arith.constant 210 : i32
    %553 = tpu.dynamic_rotate %34 by %c210_i32_279 dim 1 : vector<1x256xf32>, i32 -> vector<1x256xf32>
    %c0_280 = arith.constant 0 : index
    %c43 = arith.constant 43 : index
    %554 = memref.load %arg7[%c0_280, %c43] : memref<2x49xf32, #tpu.memory_space<smem>>
    %555 = vector.broadcast %554 : f32 to vector<1x256xf32>
    %556 = arith.mulf %555, %552 : vector<1x256xf32>
    %c1_281 = arith.constant 1 : index
    %c43_282 = arith.constant 43 : index
    %557 = memref.load %arg7[%c1_281, %c43_282] : memref<2x49xf32, #tpu.memory_space<smem>>
    %558 = vector.broadcast %557 : f32 to vector<1x256xf32>
    %559 = arith.mulf %558, %553 : vector<1x256xf32>
    %560 = arith.addf %556, %559 : vector<1x256xf32>
    %c43_283 = arith.constant 43 : index
    %c0_284 = arith.constant 0 : index
    %561 = vector.load %arg6[%c43_283, %c0_284] : memref<49x256xf32, #tpu.memory_space<vmem>>, vector<1x256xf32>
    %562 = arith.mulf %561, %560 : vector<1x256xf32>
    %563 = arith.addf %551, %562 : vector<1x256xf32>
    %c209_i32 = arith.constant 209 : i32
    %564 = tpu.dynamic_rotate %32 by %c209_i32 dim 1 : vector<1x256xf32>, i32 -> vector<1x256xf32>
    %c209_i32_285 = arith.constant 209 : i32
    %565 = tpu.dynamic_rotate %34 by %c209_i32_285 dim 1 : vector<1x256xf32>, i32 -> vector<1x256xf32>
    %c0_286 = arith.constant 0 : index
    %c44 = arith.constant 44 : index
    %566 = memref.load %arg7[%c0_286, %c44] : memref<2x49xf32, #tpu.memory_space<smem>>
    %567 = vector.broadcast %566 : f32 to vector<1x256xf32>
    %568 = arith.mulf %567, %564 : vector<1x256xf32>
    %c1_287 = arith.constant 1 : index
    %c44_288 = arith.constant 44 : index
    %569 = memref.load %arg7[%c1_287, %c44_288] : memref<2x49xf32, #tpu.memory_space<smem>>
    %570 = vector.broadcast %569 : f32 to vector<1x256xf32>
    %571 = arith.mulf %570, %565 : vector<1x256xf32>
    %572 = arith.addf %568, %571 : vector<1x256xf32>
    %c44_289 = arith.constant 44 : index
    %c0_290 = arith.constant 0 : index
    %573 = vector.load %arg6[%c44_289, %c0_290] : memref<49x256xf32, #tpu.memory_space<vmem>>, vector<1x256xf32>
    %574 = arith.mulf %573, %572 : vector<1x256xf32>
    %575 = arith.addf %563, %574 : vector<1x256xf32>
    %c208_i32 = arith.constant 208 : i32
    %576 = tpu.dynamic_rotate %32 by %c208_i32 dim 1 : vector<1x256xf32>, i32 -> vector<1x256xf32>
    %c208_i32_291 = arith.constant 208 : i32
    %577 = tpu.dynamic_rotate %34 by %c208_i32_291 dim 1 : vector<1x256xf32>, i32 -> vector<1x256xf32>
    %c0_292 = arith.constant 0 : index
    %c45 = arith.constant 45 : index
    %578 = memref.load %arg7[%c0_292, %c45] : memref<2x49xf32, #tpu.memory_space<smem>>
    %579 = vector.broadcast %578 : f32 to vector<1x256xf32>
    %580 = arith.mulf %579, %576 : vector<1x256xf32>
    %c1_293 = arith.constant 1 : index
    %c45_294 = arith.constant 45 : index
    %581 = memref.load %arg7[%c1_293, %c45_294] : memref<2x49xf32, #tpu.memory_space<smem>>
    %582 = vector.broadcast %581 : f32 to vector<1x256xf32>
    %583 = arith.mulf %582, %577 : vector<1x256xf32>
    %584 = arith.addf %580, %583 : vector<1x256xf32>
    %c45_295 = arith.constant 45 : index
    %c0_296 = arith.constant 0 : index
    %585 = vector.load %arg6[%c45_295, %c0_296] : memref<49x256xf32, #tpu.memory_space<vmem>>, vector<1x256xf32>
    %586 = arith.mulf %585, %584 : vector<1x256xf32>
    %587 = arith.addf %575, %586 : vector<1x256xf32>
    %c207_i32 = arith.constant 207 : i32
    %588 = tpu.dynamic_rotate %32 by %c207_i32 dim 1 : vector<1x256xf32>, i32 -> vector<1x256xf32>
    %c207_i32_297 = arith.constant 207 : i32
    %589 = tpu.dynamic_rotate %34 by %c207_i32_297 dim 1 : vector<1x256xf32>, i32 -> vector<1x256xf32>
    %c0_298 = arith.constant 0 : index
    %c46 = arith.constant 46 : index
    %590 = memref.load %arg7[%c0_298, %c46] : memref<2x49xf32, #tpu.memory_space<smem>>
    %591 = vector.broadcast %590 : f32 to vector<1x256xf32>
    %592 = arith.mulf %591, %588 : vector<1x256xf32>
    %c1_299 = arith.constant 1 : index
    %c46_300 = arith.constant 46 : index
    %593 = memref.load %arg7[%c1_299, %c46_300] : memref<2x49xf32, #tpu.memory_space<smem>>
    %594 = vector.broadcast %593 : f32 to vector<1x256xf32>
    %595 = arith.mulf %594, %589 : vector<1x256xf32>
    %596 = arith.addf %592, %595 : vector<1x256xf32>
    %c46_301 = arith.constant 46 : index
    %c0_302 = arith.constant 0 : index
    %597 = vector.load %arg6[%c46_301, %c0_302] : memref<49x256xf32, #tpu.memory_space<vmem>>, vector<1x256xf32>
    %598 = arith.mulf %597, %596 : vector<1x256xf32>
    %599 = arith.addf %587, %598 : vector<1x256xf32>
    %c206_i32 = arith.constant 206 : i32
    %600 = tpu.dynamic_rotate %32 by %c206_i32 dim 1 : vector<1x256xf32>, i32 -> vector<1x256xf32>
    %c206_i32_303 = arith.constant 206 : i32
    %601 = tpu.dynamic_rotate %34 by %c206_i32_303 dim 1 : vector<1x256xf32>, i32 -> vector<1x256xf32>
    %c0_304 = arith.constant 0 : index
    %c47 = arith.constant 47 : index
    %602 = memref.load %arg7[%c0_304, %c47] : memref<2x49xf32, #tpu.memory_space<smem>>
    %603 = vector.broadcast %602 : f32 to vector<1x256xf32>
    %604 = arith.mulf %603, %600 : vector<1x256xf32>
    %c1_305 = arith.constant 1 : index
    %c47_306 = arith.constant 47 : index
    %605 = memref.load %arg7[%c1_305, %c47_306] : memref<2x49xf32, #tpu.memory_space<smem>>
    %606 = vector.broadcast %605 : f32 to vector<1x256xf32>
    %607 = arith.mulf %606, %601 : vector<1x256xf32>
    %608 = arith.addf %604, %607 : vector<1x256xf32>
    %c47_307 = arith.constant 47 : index
    %c0_308 = arith.constant 0 : index
    %609 = vector.load %arg6[%c47_307, %c0_308] : memref<49x256xf32, #tpu.memory_space<vmem>>, vector<1x256xf32>
    %610 = arith.mulf %609, %608 : vector<1x256xf32>
    %611 = arith.addf %599, %610 : vector<1x256xf32>
    %c205_i32 = arith.constant 205 : i32
    %612 = tpu.dynamic_rotate %32 by %c205_i32 dim 1 : vector<1x256xf32>, i32 -> vector<1x256xf32>
    %c205_i32_309 = arith.constant 205 : i32
    %613 = tpu.dynamic_rotate %34 by %c205_i32_309 dim 1 : vector<1x256xf32>, i32 -> vector<1x256xf32>
    %c0_310 = arith.constant 0 : index
    %c48 = arith.constant 48 : index
    %614 = memref.load %arg7[%c0_310, %c48] : memref<2x49xf32, #tpu.memory_space<smem>>
    %615 = vector.broadcast %614 : f32 to vector<1x256xf32>
    %616 = arith.mulf %615, %612 : vector<1x256xf32>
    %c1_311 = arith.constant 1 : index
    %c48_312 = arith.constant 48 : index
    %617 = memref.load %arg7[%c1_311, %c48_312] : memref<2x49xf32, #tpu.memory_space<smem>>
    %618 = vector.broadcast %617 : f32 to vector<1x256xf32>
    %619 = arith.mulf %618, %613 : vector<1x256xf32>
    %620 = arith.addf %616, %619 : vector<1x256xf32>
    %c48_313 = arith.constant 48 : index
    %c0_314 = arith.constant 0 : index
    %621 = vector.load %arg6[%c48_313, %c0_314] : memref<49x256xf32, #tpu.memory_space<vmem>>, vector<1x256xf32>
    %622 = arith.mulf %621, %620 : vector<1x256xf32>
    %623 = arith.addf %611, %622 : vector<1x256xf32>
    %cst_315 = arith.constant 0.000000e+00 : f32
    %624 = vector.broadcast %cst_315 : f32 to vector<1x256xf32>
    %625 = arith.subf %624, %623 : vector<1x256xf32>
    %626 = math.exp %625 : vector<1x256xf32>
    %cst_316 = arith.constant 1.000000e+00 : f32
    %627 = vector.broadcast %cst_316 : f32 to vector<1x256xf32>
    %628 = arith.addf %627, %626 : vector<1x256xf32>
    %629 = tpu.reciprocal %628 : vector<1x256xf32> -> vector<1x256xf32>
    %630 = vector.broadcast %28 : vector<32x1xf32> to vector<32x256xf32>
    %631 = arith.mulf %6, %630 : vector<32x256xf32>
    %632 = vector.broadcast %629 : vector<1x256xf32> to vector<32x256xf32>
    %633 = arith.addf %631, %632 : vector<32x256xf32>
    %c0_317 = arith.constant 0 : index
    %c0_318 = arith.constant 0 : index
    %c0_319 = arith.constant 0 : index
    %634 = vector.load %arg9[%c0_317, %c0_318, %c0_319] : memref<1x32x256xf32, #tpu.memory_space<vmem>>, vector<1x32x256xf32>
    %635 = vector.shape_cast %634 : vector<1x32x256xf32> to vector<32x256xf32>
    %636 = vector.shape_cast %633 : vector<32x256xf32> to vector<1x32x256xf32>
    tpu.vector_store %arg9[%c0_317, %c0_318, %c0_319], %636 {strides = array<i32>} : memref<1x32x256xf32, #tpu.memory_space<vmem>>, vector<1x32x256xf32>,
    return
  }
  func.func @transform_0(%arg0: i32) -> (i32, i32, i32) {
    %c0_i32 = arith.constant 0 : i32
    %c0_i32_0 = arith.constant 0 : i32
    %c0_i32_1 = arith.constant 0 : i32
    return %arg0, %c0_i32, %c0_i32_0 : i32, i32, i32
  }
  func.func @transform_1(%arg0: i32) -> (i32, i32) {
    %c0_i32 = arith.constant 0 : i32
    %c0_i32_0 = arith.constant 0 : i32
    %c0_i32_1 = arith.constant 0 : i32
    return %c0_i32, %c0_i32_0 : i32, i32
  }
  func.func @transform_2(%arg0: i32) -> (i32, i32) {
    %c0_i32 = arith.constant 0 : i32
    %c0_i32_0 = arith.constant 0 : i32
    %c0_i32_1 = arith.constant 0 : i32
    return %c0_i32, %c0_i32_0 : i32, i32
  }
  func.func @transform_3(%arg0: i32) -> (i32, i32) {
    %c0_i32 = arith.constant 0 : i32
    %c0_i32_0 = arith.constant 0 : i32
    %c0_i32_1 = arith.constant 0 : i32
    return %c0_i32, %c0_i32_0 : i32, i32
  }
  func.func @transform_4(%arg0: i32) -> (i32, i32) {
    %c0_i32 = arith.constant 0 : i32
    %c0_i32_0 = arith.constant 0 : i32
    %c0_i32_1 = arith.constant 0 : i32
    return %c0_i32, %c0_i32_0 : i32, i32
  }
  func.func @transform_5(%arg0: i32) -> (i32, i32) {
    %c0_i32 = arith.constant 0 : i32
    %c0_i32_0 = arith.constant 0 : i32
    %c0_i32_1 = arith.constant 0 : i32
    return %c0_i32, %c0_i32_0 : i32, i32
  }
  func.func @transform_6(%arg0: i32) -> (i32, i32) {
    %c0_i32 = arith.constant 0 : i32
    %c0_i32_0 = arith.constant 0 : i32
    %c0_i32_1 = arith.constant 0 : i32
    return %c0_i32, %c0_i32_0 : i32, i32
  }
  func.func @transform_7(%arg0: i32) -> i32 {
    %c0_i32 = arith.constant 0 : i32
    %c0_i32_0 = arith.constant 0 : i32
    return %c0_i32 : i32
  }
  func.func @transform_8(%arg0: i32) -> (i32, i32, i32) {
    %c0_i32 = arith.constant 0 : i32
    %c0_i32_0 = arith.constant 0 : i32
    %c0_i32_1 = arith.constant 0 : i32
    return %arg0, %c0_i32, %c0_i32_0 : i32, i32, i32
  }
}

</mosaic_0001>

<llo_original>
// kernel: tpu_custom_call.1
$region0: #{tpu_custom_call.1}
  #allocation0 [shape = 'u32[]', space=smem, size = 0x4, offset = 0x4, fixed_abs, tag = 'smem constant byte address 0x4 - core index']
  #allocation1 [shape = 'u32[144,128]{1,0:T(1,128)}', space=vmem, size = 0x12000, scoped, tag = 'internal scratch']
  #allocation2 [shape = 'f32[1]{0:T(128)S(6)}', space=smem, size = 0x200, scoped, tag = 'scoped memory for tpu_custom_call.1']
  %s0 = inlined_call_operand.hbm [shape: f32[2,32,256], index: 0, kind: input, shape index: {}]
  %s1 = inlined_call_operand.vmem [shape: f32[32,2], index: 1, kind: input, shape index: {}]
  %s2 = inlined_call_operand.vmem [shape: f32[1,2], index: 2, kind: input, shape index: {}]
  %s3 = inlined_call_operand.vmem [shape: f32[32,2], index: 3, kind: input, shape index: {}]
  %s4 = inlined_call_operand.vmem [shape: f32[32,1], index: 4, kind: input, shape index: {}]
  %s5 = inlined_call_operand.vmem [shape: f32[49,256], index: 5, kind: input, shape index: {}]
  %s6 = inlined_call_operand.vmem [shape: f32[2,49], index: 6, kind: input, shape index: {}]
  %s7 = inlined_call_operand.<no memory space> [shape: f32[1], index: 7, kind: input, shape index: {}]
  %s8 = inlined_call_operand.hbm [shape: f32[2,32,256], index: 8, kind: output, shape index: {}]
  %s9 = sld [smem:[#allocation0]]
  $region73: #{tpu_custom_call.1} parent=0
    _
  %s11 = ssub.s32 1, %s9
  %s12 = scalar_select 0, %s11, %s9
  %13 = sst [smem:[#allocation2]] %s7
  $region1: #{tpu_custom_call.1} parent=0
    #allocation3 [shape = 'u8[65536]{0}', space=vmem, size = 0x10000, scoped, tag = 'input window, operand 0']
    #allocation4 [shape = 's32[2]{0}', space=sflag, size = 0x8, scoped, tag = 'scoped memory for tpu_custom_call.1']
    #allocation5 [shape = 's32[2]{0}', space=sflag, size = 0x8, scoped, tag = 'scoped memory for tpu_custom_call.1']
    #allocation6 [shape = 's32[2]{0}', space=sflag, size = 0x8, scoped, tag = 'scoped memory for tpu_custom_call.1']
    #allocation7 [shape = 'u8[1024]{0}', space=smem, size = 0x400, scoped, tag = 'input window, operand 6, single buffered']
    #allocation8 [shape = 'u8[65536]{0}', space=vmem, size = 0x10000, scoped, tag = 'output window, operand 0']
    %14 = vsyncpa [#allocation4], 0
    %s15 = scalar_lea.sflag [#allocation4], 1
    %16 = vsyncpa %s15, 0
    %17 = vsyncpa [#allocation6], 0
    %18 = vsyncpa [#allocation5], 0
    %s19 = scalar_lea.sflag [#allocation5], 1
    %20 = vsyncpa %s19, 0
    loop: start=0, step=1, limit=4
    $region2: #{tpu_custom_call.1} parent=1 // loop_pre_header
      _
    $region3: #{tpu_custom_call.1} parent=1 // loop_header
      %s22 = sphi 0, %s26
      %p23 = scmp.ge.s32.totalorder %s22, 4
      %s32 = sphi 0, %s34
      %s35 = sphi 0, %s32
      %s36 = sphi 0, %s35
      %s52 = sphi 0, %s36
      %s56 = sphi 0, %s56
      %s58 = sphi 0, %s56
      %s59 = sphi 0, %s58
      %s73 = sphi 0, %s59
      %s77 = sphi 0, %s77
      %s79 = sphi 0, %s77
      %s80 = sphi 0, %s79
      %s94 = sphi 0, %s80
      %s98 = sphi 0, %s98
      %s100 = sphi 0, %s98
      %s101 = sphi 0, %s100
      %s115 = sphi 0, %s101
      %s119 = sphi 0, %s119
      %s121 = sphi 0, %s119
      %s122 = sphi 0, %s121
      %s136 = sphi 0, %s122
      %s140 = sphi 0, %s140
      %s142 = sphi 0, %s140
      %s143 = sphi 0, %s142
      %s157 = sphi 0, %s143
      %s161 = sphi 0, %s161
      %s163 = sphi 0, %s161
      %s164 = sphi 0, %s163
      %s178 = sphi 0, %s164
      %s182 = sphi 0, %s182
      %s184 = sphi 0, %s182
      %s185 = sphi 0, %s184
      %s199 = sphi 0, %s185
      %s205 = sphi 0, %s207
      %s208 = sphi 0, %s205
      %s209 = sphi 0, %s208
      %s225 = sphi 0, %s209
    $region4: #{tpu_custom_call.1} parent=1 // loop_header_branch
      %25 = sbr.rel (%p23) target = $region8
    $region5: #{tpu_custom_call.1} parent=1 // loop_body
      %s27 = ssub.s32 %s22, 1
      %s28 = ssub.s32 %s22, 2
      %s29 = sadd.s32 %s22, 1
      %s30 = ssub.s32 %s22, %s29
      %p31 = scmp.eq.s32.totalorder %s30, 0
      %s33 = sadd.s32 %s32, 1
      %s34 = scalar_select %p31, %s32, %s33
      %p37 = pneg %p31
      %p38 = scmp.eq.s32.totalorder %s22, 1
      %p39 = por %p37, %p38
      %p40 = scmp.ne.s32.totalorder %s32, %s35
      %p41 = scmp.eq.s32.totalorder %s22, 0
      %p42 = por %p40, %p41
      %p43 = scmp.ne.s32.totalorder %s32, %s35
      %p44 = scmp.eq.s32.totalorder %s27, 1
      %p45 = por %p43, %p44
      %p46 = scmp.ne.s32.totalorder %s35, %s36
      %p47 = scmp.eq.s32.totalorder %s27, 0
      %p48 = por %p46, %p47
      %p49 = scmp.ne.s32.totalorder %s35, %s36
      %p50 = scmp.eq.s32.totalorder %s28, 1
      %p51 = por %p49, %p50
      %p53 = scmp.ne.s32.totalorder %s36, %s52
      %p54 = scmp.eq.s32.totalorder %s28, 0
      %p55 = por %p53, %p54
      %s57 = sadd.s32 %s56, 1
      %p60 = scmp.eq.s32.totalorder %s22, 1
      %p61 = scmp.ne.s32.totalorder %s56, %s58
      %p62 = scmp.eq.s32.totalorder %s22, 0
      %p63 = por %p61, %p62
      %p64 = scmp.ne.s32.totalorder %s56, %s58
      %p65 = scmp.eq.s32.totalorder %s27, 1
      %p66 = por %p64, %p65
      %p67 = scmp.ne.s32.totalorder %s58, %s59
      %p68 = scmp.eq.s32.totalorder %s27, 0
      %p69 = por %p67, %p68
      %p70 = scmp.ne.s32.totalorder %s58, %s59
      %p71 = scmp.eq.s32.totalorder %s28, 1
      %p72 = por %p70, %p71
      %p74 = scmp.ne.s32.totalorder %s59, %s73
      %p75 = scmp.eq.s32.totalorder %s28, 0
      %p76 = por %p74, %p75
      %s78 = sadd.s32 %s77, 1
      %p81 = scmp.eq.s32.totalorder %s22, 1
      %p82 = scmp.ne.s32.totalorder %s77, %s79
      %p83 = scmp.eq.s32.totalorder %s22, 0
      %p84 = por %p82, %p83
      %p85 = scmp.ne.s32.totalorder %s77, %s79
      %p86 = scmp.eq.s32.totalorder %s27, 1
      %p87 = por %p85, %p86
      %p88 = scmp.ne.s32.totalorder %s79, %s80
      %p89 = scmp.eq.s32.totalorder %s27, 0
      %p90 = por %p88, %p89
      %p91 = scmp.ne.s32.totalorder %s79, %s80
      %p92 = scmp.eq.s32.totalorder %s28, 1
      %p93 = por %p91, %p92
      %p95 = scmp.ne.s32.totalorder %s80, %s94
      %p96 = scmp.eq.s32.totalorder %s28, 0
      %p97 = por %p95, %p96
      %s99 = sadd.s32 %s98, 1
      %p102 = scmp.eq.s32.totalorder %s22, 1
      %p103 = scmp.ne.s32.totalorder %s98, %s100
      %p104 = scmp.eq.s32.totalorder %s22, 0
      %p105 = por %p103, %p104
      %p106 = scmp.ne.s32.totalorder %s98, %s100
      %p107 = scmp.eq.s32.totalorder %s27, 1
      %p108 = por %p106, %p107
      %p109 = scmp.ne.s32.totalorder %s100, %s101
      %p110 = scmp.eq.s32.totalorder %s27, 0
      %p111 = por %p109, %p110
      %p112 = scmp.ne.s32.totalorder %s100, %s101
      %p113 = scmp.eq.s32.totalorder %s28, 1
      %p114 = por %p112, %p113
      %p116 = scmp.ne.s32.totalorder %s101, %s115
      %p117 = scmp.eq.s32.totalorder %s28, 0
      %p118 = por %p116, %p117
      %s120 = sadd.s32 %s119, 1
      %p123 = scmp.eq.s32.totalorder %s22, 1
      %p124 = scmp.ne.s32.totalorder %s119, %s121
      %p125 = scmp.eq.s32.totalorder %s22, 0
      %p126 = por %p124, %p125
      %p127 = scmp.ne.s32.totalorder %s119, %s121
      %p128 = scmp.eq.s32.totalorder %s27, 1
      %p129 = por %p127, %p128
      %p130 = scmp.ne.s32.totalorder %s121, %s122
      %p131 = scmp.eq.s32.totalorder %s27, 0
      %p132 = por %p130, %p131
      %p133 = scmp.ne.s32.totalorder %s121, %s122
      %p134 = scmp.eq.s32.totalorder %s28, 1
      %p135 = por %p133, %p134
      %p137 = scmp.ne.s32.totalorder %s122, %s136
      %p138 = scmp.eq.s32.totalorder %s28, 0
      %p139 = por %p137, %p138
      %s141 = sadd.s32 %s140, 1
      %p144 = scmp.eq.s32.totalorder %s22, 1
      %p145 = scmp.ne.s32.totalorder %s140, %s142
      %p146 = scmp.eq.s32.totalorder %s22, 0
      %p147 = por %p145, %p146
      %p148 = scmp.ne.s32.totalorder %s140, %s142
      %p149 = scmp.eq.s32.totalorder %s27, 1
      %p150 = por %p148, %p149
      %p151 = scmp.ne.s32.totalorder %s142, %s143
      %p152 = scmp.eq.s32.totalorder %s27, 0
      %p153 = por %p151, %p152
      %p154 = scmp.ne.s32.totalorder %s142, %s143
      %p155 = scmp.eq.s32.totalorder %s28, 1
      %p156 = por %p154, %p155
      %p158 = scmp.ne.s32.totalorder %s143, %s157
      %p159 = scmp.eq.s32.totalorder %s28, 0
      %p160 = por %p158, %p159
      %s162 = sadd.s32 %s161, 1
      %p165 = scmp.eq.s32.totalorder %s22, 1
      %p166 = scmp.ne.s32.totalorder %s161, %s163
      %p167 = scmp.eq.s32.totalorder %s22, 0
      %p168 = por %p166, %p167
      %p169 = scmp.ne.s32.totalorder %s161, %s163
      %p170 = scmp.eq.s32.totalorder %s27, 1
      %p171 = por %p169, %p170
      %p172 = scmp.ne.s32.totalorder %s163, %s164
      %p173 = scmp.eq.s32.totalorder %s27, 0
      %p174 = por %p172, %p173
      %p175 = scmp.ne.s32.totalorder %s163, %s164
      %p176 = scmp.eq.s32.totalorder %s28, 1
      %p177 = por %p175, %p176
      %p179 = scmp.ne.s32.totalorder %s164, %s178
      %p180 = scmp.eq.s32.totalorder %s28, 0
      %p181 = por %p179, %p180
      %s183 = sadd.s32 %s182, 1
      %p186 = scmp.eq.s32.totalorder %s22, 1
      %p187 = scmp.ne.s32.totalorder %s182, %s184
      %p188 = scmp.eq.s32.totalorder %s22, 0
      %p189 = por %p187, %p188
      %p190 = scmp.ne.s32.totalorder %s182, %s184
      %p191 = scmp.eq.s32.totalorder %s27, 1
      %p192 = por %p190, %p191
      %p193 = scmp.ne.s32.totalorder %s184, %s185
      %p194 = scmp.eq.s32.totalorder %s27, 0
      %p195 = por %p193, %p194
      %p196 = scmp.ne.s32.totalorder %s184, %s185
      %p197 = scmp.eq.s32.totalorder %s28, 1
      %p198 = por %p196, %p197
      %p200 = scmp.ne.s32.totalorder %s185, %s199
      %p201 = scmp.eq.s32.totalorder %s28, 0
      %p202 = por %p200, %p201
      %s203 = ssub.s32 %s22, %s29
      %p204 = scmp.eq.s32.totalorder %s203, 0
      %s206 = sadd.s32 %s205, 1
      %s207 = scalar_select %p204, %s205, %s206
      %p210 = pneg %p204
      %p211 = scmp.eq.s32.totalorder %s22, 1
      %p212 = por %p210, %p211
      %p213 = scmp.ne.s32.totalorder %s205, %s208
      %p214 = scmp.eq.s32.totalorder %s22, 0
      %p215 = por %p213, %p214
      %p216 = scmp.ne.s32.totalorder %s205, %s208
      %p217 = scmp.eq.s32.totalorder %s27, 1
      %p218 = por %p216, %p217
      %p219 = scmp.ne.s32.totalorder %s208, %s209
      %p220 = scmp.eq.s32.totalorder %s27, 0
      %p221 = por %p219, %p220
      %p222 = scmp.ne.s32.totalorder %s208, %s209
      %p223 = scmp.eq.s32.totalorder %s28, 1
      %p224 = por %p222, %p223
      %p226 = scmp.ne.s32.totalorder %s209, %s225
      %p227 = scmp.eq.s32.totalorder %s28, 0
      %p228 = por %p226, %p227
      %p229 = scmp.le.s32.totalorder 1, %s22
      %p230 = scmp.lt.s32.totalorder %s22, 3
      %p231 = pnand %p229, %p230
      %p232 = pneg %p231
      // Predicated region
      $region9: #{tpu_custom_call.1} parent=5 // pred_check
        _
      $region10: #{tpu_custom_call.1} parent=5 // pred_check_branch
        %234 = sbr.rel (%p231) target = $region12
      $region11: #{tpu_custom_call.1} parent=5 // pred_region
        %s235 = ssub.s32 %s22, 1
        // Predicated region
        $region13: #{tpu_custom_call.1} parent=11 // pred_check
          %p236 = pneg %p69
        $region14: #{tpu_custom_call.1} parent=11 // pred_check_branch
          %238 = sbr.rel (%p236) target = $region16
        $region15: #{tpu_custom_call.1} parent=11 // pred_region
          _
        $region16: #{tpu_custom_call.1} parent=11 // pred_fallthru
          _
        // Predicated region
        $region17: #{tpu_custom_call.1} parent=11 // pred_check
          %p239 = pneg %p90
        $region18: #{tpu_custom_call.1} parent=11 // pred_check_branch
          %241 = sbr.rel (%p239) target = $region20
        $region19: #{tpu_custom_call.1} parent=11 // pred_region
          _
        $region20: #{tpu_custom_call.1} parent=11 // pred_fallthru
          _
        // Predicated region
        $region21: #{tpu_custom_call.1} parent=11 // pred_check
          %p242 = pneg %p111
        $region22: #{tpu_custom_call.1} parent=11 // pred_check_branch
          %244 = sbr.rel (%p242) target = $region24
        $region23: #{tpu_custom_call.1} parent=11 // pred_region
          _
        $region24: #{tpu_custom_call.1} parent=11 // pred_fallthru
          _
        // Predicated region
        $region25: #{tpu_custom_call.1} parent=11 // pred_check
          %p245 = pneg %p132
        $region26: #{tpu_custom_call.1} parent=11 // pred_check_branch
          %247 = sbr.rel (%p245) target = $region28
        $region27: #{tpu_custom_call.1} parent=11 // pred_region
          _
        $region28: #{tpu_custom_call.1} parent=11 // pred_fallthru
          _
        // Predicated region
        $region29: #{tpu_custom_call.1} parent=11 // pred_check
          %p248 = pneg %p153
        $region30: #{tpu_custom_call.1} parent=11 // pred_check_branch
          %250 = sbr.rel (%p248) target = $region32
        $region31: #{tpu_custom_call.1} parent=11 // pred_region
          _
        $region32: #{tpu_custom_call.1} parent=11 // pred_fallthru
          _
        // Predicated region
        $region33: #{tpu_custom_call.1} parent=11 // pred_check
          %p251 = pneg %p174
        $region34: #{tpu_custom_call.1} parent=11 // pred_check_branch
          %253 = sbr.rel (%p251) target = $region36
        $region35: #{tpu_custom_call.1} parent=11 // pred_region
          %s255 = ssub.s32 32, 32
          %256 = vsyncadd [#allocation6], %s255
          %s258 = sshll.u32 %s6, 4
          %s259 = int_to_ptr.vmem [resolvable:$true] %s258
          %261 = dma.vmem_to_smem %s259, 32, [#allocation7], [#allocation6]
        $region36: #{tpu_custom_call.1} parent=11 // pred_fallthru
          _
        // Predicated region
        $region37: #{tpu_custom_call.1} parent=11 // pred_check
          %p262 = pneg %p195
        $region38: #{tpu_custom_call.1} parent=11 // pred_check_branch
          %264 = sbr.rel (%p262) target = $region40
        $region39: #{tpu_custom_call.1} parent=11 // pred_region
          _
        $region40: #{tpu_custom_call.1} parent=11 // pred_fallthru
          _
      $region12: #{tpu_custom_call.1} parent=5 // pred_fallthru
        _
      %p265 = scmp.lt.s32.totalorder %s22, 2
      // Predicated region
      $region41: #{tpu_custom_call.1} parent=5 // pred_check
        %p266 = pneg %p265
      $region42: #{tpu_custom_call.1} parent=5 // pred_check_branch
        %268 = sbr.rel (%p266) target = $region44
      $region43: #{tpu_custom_call.1} parent=5 // pred_region
        // Predicated region
        $region45: #{tpu_custom_call.1} parent=43 // pred_check
          %p269 = pneg %p42
        $region46: #{tpu_custom_call.1} parent=43 // pred_check_branch
          %271 = sbr.rel (%p269) target = $region48
        $region47: #{tpu_custom_call.1} parent=43 // pred_region
          %s272 = sand.u32 %s32, 1
          %s273 = scalar_lea.sflag [#allocation4], %s272
          %s274 = sand.u32 %s32, 1
          %s275 = smul.addr %s274, 64
          %s276 = scalar_lea.vmem [#allocation3], %s275
          %s278 = ssub.s32 1024, 1024
          %279 = vsyncadd %s273, %s278
          %s280 = smul.addr %s22, 8
          %s281 = smul.addr %s280, 128
          %s282 = scalar_lea.hbm %s0, %s281
          %s283 = sshll.u32 %s276, 4
          %s284 = int_to_ptr.vmem [resolvable:$true] %s283
          %289 = dma.hbm_to_vmem [thread:$0]  %s282, 1024, %s284, %s273, 256, 256, 16
        $region48: #{tpu_custom_call.1} parent=43 // pred_fallthru
          _
      $region44: #{tpu_custom_call.1} parent=5 // pred_fallthru
        _
      %p290 = scmp.le.s32.totalorder 1, %s22
      %p291 = scmp.lt.s32.totalorder %s22, 3
      %p292 = pnand %p290, %p291
      %p293 = pneg %p292
      // Predicated region
      $region49: #{tpu_custom_call.1} parent=5 // pred_check
        _
      $region50: #{tpu_custom_call.1} parent=5 // pred_check_branch
        %295 = sbr.rel (%p292) target = $region52
      $region51: #{tpu_custom_call.1} parent=5 // pred_region
        %s296 = ssub.s32 %s22, 1
        %s297 = sand.u32 %s35, 1
        %s298 = scalar_lea.sflag [#allocation4], %s297
        %s299 = sand.u32 %s35, 1
        %s300 = smul.addr %s299, 64
        %s301 = scalar_lea.vmem [#allocation3], %s300
        // Predicated region
        $region53: #{tpu_custom_call.1} parent=51 // pred_check
          %p302 = pneg %p48
        $region54: #{tpu_custom_call.1} parent=51 // pred_check_branch
          %304 = sbr.rel (%p302) target = $region56
        $region55: #{tpu_custom_call.1} parent=51 // pred_region
          %305 = dma.done %s298, 1024
        $region56: #{tpu_custom_call.1} parent=51 // pred_fallthru
          _
        // Predicated region
        $region57: #{tpu_custom_call.1} parent=51 // pred_check
          %p306 = pneg %p174
        $region58: #{tpu_custom_call.1} parent=51 // pred_check_branch
          %308 = sbr.rel (%p306) target = $region60
        $region59: #{tpu_custom_call.1} parent=51 // pred_region
          %309 = dma.done [#allocation6], 32
        $region60: #{tpu_custom_call.1} parent=51 // pred_fallthru
          _
        %310 = sfence
        %s311 = sand.u32 %s35, 1
        %s312 = scalar_lea.sflag [#allocation4], %s311
        %s313 = sand.u32 %s35, 1
        %s314 = smul.addr %s313, 64
        %s315 = scalar_lea.vmem [#allocation3], %s314
        %p316 = pneg %p48
        %p317 = pneg %p45
        %p318 = pneg %p69
        %p319 = pneg %p66
        %p320 = pneg %p90
        %p321 = pneg %p87
        %p322 = pneg %p111
        %p323 = pneg %p108
        %p324 = pneg %p132
        %p325 = pneg %p129
        %p326 = pneg %p153
        %p327 = pneg %p150
        %p328 = pneg %p174
        %p329 = pneg %p171
        %p330 = pneg %p195
        %p331 = pneg %p192
        %p332 = pneg %p221
        %p333 = pneg %p218
        %s334 = sand.u32 %s208, 1
        %s335 = scalar_lea.sflag [#allocation5], %s334
        %s336 = sand.u32 %s208, 1
        %s337 = smul.addr %s336, 64
        %s338 = scalar_lea.vmem [#allocation8], %s337
        %v339 = vld [vmem:[%s1] sm:$0xff]
        %v340 = vld [vmem:[%s1 + $0x8] sm:$0xff]
        %v341 = vld [vmem:[%s1 + $0x10] sm:$0xff]
        %v342 = vld [vmem:[%s1 + $0x18] sm:$0xff]
        %v343 = vld [vmem:[%s2] sm:$0x1]
        %v344 = vld [vmem:[%s3] sm:$0xff]
        %v345 = vld [vmem:[%s3 + $0x8] sm:$0xff]
        %v346 = vld [vmem:[%s3 + $0x10] sm:$0xff]
        %v347 = vld [vmem:[%s3 + $0x18] sm:$0xff]
        %v348 = vld [vmem:[%s4] sm:$0xff]
        %v349 = vld [vmem:[%s4 + $0x8] sm:$0xff]
        %v350 = vld [vmem:[%s4 + $0x10] sm:$0xff]
        %v351 = vld [vmem:[%s4 + $0x18] sm:$0xff]
        %s352 = sld [smem:[#allocation2]]
        %v353 = vld [vmem:[%s301] sm:$0xff]
        %v354 = vld [vmem:[%s301 + $0x8] sm:$0xff]
        %v355 = vld [vmem:[%s301 + $0x10] sm:$0xff]
        %v356 = vld [vmem:[%s301 + $0x18] sm:$0xff]
        %v357 = vld [vmem:[%s301 + $0x20] sm:$0xff]
        %v358 = vld [vmem:[%s301 + $0x28] sm:$0xff]
        %v359 = vld [vmem:[%s301 + $0x30] sm:$0xff]
        %v360 = vld [vmem:[%s301 + $0x38] sm:$0xff]
        %v361 = vadd.f32 %v353, %v354
        %362 = vadd.xlane.f32.xlu0 %v361
        %v363 = vpop.xlane.xlu0 %362
        %v364 = vadd.f32 %v355, %v356
        %365 = vadd.xlane.f32.xlu0 %v364
        %v366 = vpop.xlane.xlu0 %365
        %v367 = vadd.f32 %v357, %v358
        %368 = vadd.xlane.f32.xlu0 %v367
        %v369 = vpop.xlane.xlu0 %368
        %v370 = vadd.f32 %v359, %v360
        %371 = vadd.xlane.f32.xlu0 %v370
        %v372 = vpop.xlane.xlu0 %371
        %v373 = vrcp.pop 256.0
        %v374 = vmul.f32 %v363, %v373
        %v375 = vmul.f32 %v366, %v373
        %v376 = vmul.f32 %v369, %v373
        %v377 = vmul.f32 %v372, %v373
        %v378 = vmul.f32 %v339, %v374
        %v379 = vmul.f32 %v340, %v375
        %v380 = vmul.f32 %v341, %v376
        %v381 = vmul.f32 %v342, %v377
        %vm382 = vcmask 15360
        %v383 = vsel %vm382, %v378, 0.0
        %v384 = vsel %vm382, %v379, 0.0
        %v385 = vadd.f32 %v383, %v384
        %v386 = vsel %vm382, %v380, 0.0
        %v387 = vadd.f32 %v385, %v386
        %v388 = vsel %vm382, %v381, 0.0
        %v389 = vadd.f32 %v387, %v388
        %v390 = vrot.slane %v389, 4
        %v391 = vadd.f32 %v389, %v390
        %v392 = vrot.slane %v391, 2
        %v393 = vadd.f32 %v391, %v392
        %v394 = vrot.slane %v393, 1
        %v395 = vadd.f32 %v393, %v394
        %v396 = vadd.f32 %v395, %v343
        %v397 = vmax.f32 %v396, 0.0
        %v398 = vlaneseq
        %v399 = vshrl.u32 %v398, 7
        %v400 = vsub.s32 0, %v399
        %v401 = vrot.slane %v397, %v400
        %v402 = vmul.f32 %v344, %v401
        %v403 = vmul.f32 %v345, %v401
        %v404 = vmul.f32 %v346, %v401
        %v405 = vmul.f32 %v347, %v401
        %v406 = vsel %vm382, %v402, 0.0
        %407 = vadd.xlane.f32.xlu0 %v406
        %v408 = vpop.xlane.xlu0 %407
        %v409 = vsel %vm382, %v403, 0.0
        %410 = vadd.xlane.f32.xlu0 %v409
        %v411 = vpop.xlane.xlu0 %410
        %v412 = vsel %vm382, %v404, 0.0
        %413 = vadd.xlane.f32.xlu0 %v412
        %v414 = vpop.xlane.xlu0 %413
        %v415 = vsel %vm382, %v405, 0.0
        %416 = vadd.xlane.f32.xlu0 %v415
        %v417 = vpop.xlane.xlu0 %416
        %v418 = vadd.f32 %v408, %v348
        %v419 = vadd.f32 %v411, %v349
        %v420 = vadd.f32 %v414, %v350
        %v421 = vadd.f32 %v417, %v351
        %v422 = vsub.f32 0.0, %v418
        %v423 = vsub.f32 0.0, %v419
        %v424 = vsub.f32 0.0, %v420
        %v425 = vsub.f32 0.0, %v421
        %v426 = vmul.f32 %v422, 1.442695
        %v427 = vpow.pop %v426
        %v428 = vmul.f32 %v423, 1.442695
        %v429 = vpow.pop %v428
        %v430 = vmul.f32 %v424, 1.442695
        %v431 = vpow.pop %v430
        %v432 = vmul.f32 %v425, 1.442695
        %v433 = vpow.pop %v432
        %v434 = vadd.f32 %v427, 1.0
        %v435 = vadd.f32 %v429, 1.0
        %v436 = vadd.f32 %v431, 1.0
        %v437 = vadd.f32 %v433, 1.0
        %v438 = vrcp.pop %v434
        %v439 = vrcp.pop %v435
        %v440 = vrcp.pop %v436
        %v441 = vrcp.pop %v437
        %v442 = vadd.f32 %v353, %v355
        %v443 = vadd.f32 %v442, %v357
        %v444 = vadd.f32 %v443, %v359
        %v445 = vrot.slane %v444, 4
        %v446 = vadd.f32 %v444, %v445
        %v447 = vrot.slane %v446, 2
        %v448 = vadd.f32 %v446, %v447
        %v449 = vrot.slane %v448, 1
        %v450 = vadd.f32 %v448, %v449
        %v451 = vadd.f32 %v354, %v356
        %v452 = vadd.f32 %v451, %v358
        %v453 = vadd.f32 %v452, %v360
        %v454 = vrot.slane %v453, 4
        %v455 = vadd.f32 %v453, %v454
        %v456 = vrot.slane %v455, 2
        %v457 = vadd.f32 %v455, %v456
        %v458 = vrot.slane %v457, 1
        %v459 = vadd.f32 %v457, %v458
        %v460 = vrcp.pop 32.0
        %v461 = vmul.f32 %v450, %v460
        %v462 = vmul.f32 %v459, %v460
        %v463 = vmax.f32 %v353, %v357
        %v464 = vmax.f32 %v355, %v359
        %v465 = vmax.f32 %v463, %v464
        %v466 = vrot.slane %v465, 4
        %v467 = vmax.f32 %v465, %v466
        %v468 = vrot.slane %v467, 2
        %v469 = vmax.f32 %v467, %v468
        %v470 = vrot.slane %v469, 1
        %v471 = vmax.f32 %v469, %v470
        %v472 = vmax.f32 %v354, %v358
        %v473 = vmax.f32 %v356, %v360
        %v474 = vmax.f32 %v472, %v473
        %v475 = vrot.slane %v474, 4
        %v476 = vmax.f32 %v474, %v475
        %v477 = vrot.slane %v476, 2
        %v478 = vmax.f32 %v476, %v477
        %v479 = vrot.slane %v478, 1
        %v480 = vmax.f32 %v478, %v479
        %v481 = vstv %s352
        %v482 = vadd.f32 %v481, 0.0
        %483 = vrot.lane.b32.xlu0 %v461, 51
        %v484 = vpop.permute.xlu0 %483
        %485 = vrot.lane.b32.xlu0 %v462, 51
        %v486 = vpop.permute.xlu0 %485
        %v487 = vlaneseq
        %v488 = vand.u32 %v487, 127
        %vm489 = vcmp.lt.s32.totalorder %v488, 51
        %v490 = vsel %vm489, %v484, %v486
        %v491 = vsel %vm489, %v486, %v484
        %492 = vrot.lane.b32.xlu0 %v471, 51
        %v493 = vpop.permute.xlu0 %492
        %494 = vrot.lane.b32.xlu0 %v480, 51
        %v495 = vpop.permute.xlu0 %494
        %v496 = vsel %vm489, %v493, %v495
        %v497 = vsel %vm489, %v495, %v493
        %s498 = sld [smem:[#allocation7]]
        %v499 = vstv %s498
        %v500 = vmul.f32 %v499, %v491
        %v501 = vmul.f32 %v499, %v490
        %s502 = sld [smem:[#allocation7 + $0x80]]
        %v503 = vstv %s502
        %v504 = vmul.f32 %v503, %v497
        %v505 = vmul.f32 %v503, %v496
        %v506 = vadd.f32 %v500, %v504
        %v507 = vadd.f32 %v501, %v505
        %v508 = vld [vmem:[%s5] ss:$8 sm:$0x3]
        %v511 = vcombine.low %v506, %v507
        %v513 = vunpack.c.l.s4 1966171168
        %v514 = vunpack.c.0.s8 %v513
        %v515 = vlaneseq
        %v516 = vshrl.u32 %v515, 7
        %v517 = vsub.s32 %v514, %v516
        %v518 = vrot.slane %v511, %v517
        %v520 = vunpack.c.l.s4 1966171168
        %v521 = vunpack.c.0.s8 %v520
        %v522 = vlaneseq
        %v523 = vshrl.u32 %v522, 7
        %v524 = vsub.s32 %v521, %v523
        %v525 = vrot.slane %v518, %v524
        %v527 = vmul.f32 %v508, %v525
        %v528 = vadd.f32 %v482, %v527
        %529 = vrot.lane.b32.xlu0 %v461, 50
        %v530 = vpop.permute.xlu0 %529
        %531 = vrot.lane.b32.xlu0 %v462, 50
        %v532 = vpop.permute.xlu0 %531
        %vm533 = vcmp.lt.s32.totalorder %v488, 50
        %v534 = vsel %vm533, %v530, %v532
        %v535 = vsel %vm533, %v532, %v530
        %536 = vrot.lane.b32.xlu0 %v471, 50
        %v537 = vpop.permute.xlu0 %536
        %538 = vrot.lane.b32.xlu0 %v480, 50
        %v539 = vpop.permute.xlu0 %538
        %v540 = vsel %vm533, %v537, %v539
        %v541 = vsel %vm533, %v539, %v537
        %s542 = sld [smem:[#allocation7 + $0x1]]
        %v543 = vstv %s542
        %v544 = vmul.f32 %v543, %v535
        %v545 = vmul.f32 %v543, %v534
        %s546 = sld [smem:[#allocation7 + $0x81]]
        %v547 = vstv %s546
        %v548 = vmul.f32 %v547, %v541
        %v549 = vmul.f32 %v547, %v540
        %v550 = vadd.f32 %v544, %v548
        %v551 = vadd.f32 %v545, %v549
        %s552 = scalar_lea.vmem %s5, 1
        %v553 = vld [vmem:[%s552] ss:$8 sm:$0x3]
        %v556 = vcombine.low %v550, %v551
        %v558 = vunpack.c.l.s4 1966171168
        %v559 = vunpack.c.0.s8 %v558
        %v560 = vlaneseq
        %v561 = vshrl.u32 %v560, 7
        %v562 = vsub.s32 %v559, %v561
        %v563 = vrot.slane %v556, %v562
        %v565 = vunpack.c.l.s4 1966171168
        %v566 = vunpack.c.0.s8 %v565
        %v567 = vlaneseq
        %v568 = vshrl.u32 %v567, 7
        %v569 = vsub.s32 %v566, %v568
        %v570 = vrot.slane %v563, %v569
        %v572 = vmul.f32 %v553, %v570
        %v573 = vadd.f32 %v528, %v572
        %574 = vrot.lane.b32.xlu0 %v461, 49
        %v575 = vpop.permute.xlu0 %574
        %576 = vrot.lane.b32.xlu0 %v462, 49
        %v577 = vpop.permute.xlu0 %576
        %vm578 = vcmp.lt.s32.totalorder %v488, 49
        %v579 = vsel %vm578, %v575, %v577
        %v580 = vsel %vm578, %v577, %v575
        %581 = vrot.lane.b32.xlu0 %v471, 49
        %v582 = vpop.permute.xlu0 %581
        %583 = vrot.lane.b32.xlu0 %v480, 49
        %v584 = vpop.permute.xlu0 %583
        %v585 = vsel %vm578, %v582, %v584
        %v586 = vsel %vm578, %v584, %v582
        %s587 = sld [smem:[#allocation7 + $0x2]]
        %v588 = vstv %s587
        %v589 = vmul.f32 %v588, %v580
        %v590 = vmul.f32 %v588, %v579
        %s591 = sld [smem:[#allocation7 + $0x82]]
        %v592 = vstv %s591
        %v593 = vmul.f32 %v592, %v586
        %v594 = vmul.f32 %v592, %v585
        %v595 = vadd.f32 %v589, %v593
        %v596 = vadd.f32 %v590, %v594
        %s597 = scalar_lea.vmem %s5, 2
        %v598 = vld [vmem:[%s597] ss:$8 sm:$0x3]
        %v601 = vcombine.low %v595, %v596
        %v603 = vunpack.c.l.s4 1966171168
        %v604 = vunpack.c.0.s8 %v603
        %v605 = vlaneseq
        %v606 = vshrl.u32 %v605, 7
        %v607 = vsub.s32 %v604, %v606
        %v608 = vrot.slane %v601, %v607
        %v610 = vunpack.c.l.s4 1966171168
        %v611 = vunpack.c.0.s8 %v610
        %v612 = vlaneseq
        %v613 = vshrl.u32 %v612, 7
        %v614 = vsub.s32 %v611, %v613
        %v615 = vrot.slane %v608, %v614
        %v617 = vmul.f32 %v598, %v615
        %v618 = vadd.f32 %v573, %v617
        %619 = vrot.lane.b32.xlu0 %v461, 48
        %v620 = vpop.permute.xlu0 %619
        %621 = vrot.lane.b32.xlu0 %v462, 48
        %v622 = vpop.permute.xlu0 %621
        %vm623 = vcmp.lt.s32.totalorder %v488, 48
        %v624 = vsel %vm623, %v620, %v622
        %v625 = vsel %vm623, %v622, %v620
        %626 = vrot.lane.b32.xlu0 %v471, 48
        %v627 = vpop.permute.xlu0 %626
        %628 = vrot.lane.b32.xlu0 %v480, 48
        %v629 = vpop.permute.xlu0 %628
        %v630 = vsel %vm623, %v627, %v629
        %v631 = vsel %vm623, %v629, %v627
        %s632 = sld [smem:[#allocation7 + $0x3]]
        %v633 = vstv %s632
        %v634 = vmul.f32 %v633, %v625
        %v635 = vmul.f32 %v633, %v624
        %s636 = sld [smem:[#allocation7 + $0x83]]
        %v637 = vstv %s636
        %v638 = vmul.f32 %v637, %v631
        %v639 = vmul.f32 %v637, %v630
        %v640 = vadd.f32 %v634, %v638
        %v641 = vadd.f32 %v635, %v639
        %s642 = scalar_lea.vmem %s5, 3
        %v643 = vld [vmem:[%s642] ss:$8 sm:$0x3]
        %v646 = vcombine.low %v640, %v641
        %v648 = vunpack.c.l.s4 1966171168
        %v649 = vunpack.c.0.s8 %v648
        %v650 = vlaneseq
        %v651 = vshrl.u32 %v650, 7
        %v652 = vsub.s32 %v649, %v651
        %v653 = vrot.slane %v646, %v652
        %v655 = vunpack.c.l.s4 1966171168
        %v656 = vunpack.c.0.s8 %v655
        %v657 = vlaneseq
        %v658 = vshrl.u32 %v657, 7
        %v659 = vsub.s32 %v656, %v658
        %v660 = vrot.slane %v653, %v659
        %v662 = vmul.f32 %v643, %v660
        %v663 = vadd.f32 %v618, %v662
        %664 = vrot.lane.b32.xlu0 %v461, 47
        %v665 = vpop.permute.xlu0 %664
        %666 = vrot.lane.b32.xlu0 %v462, 47
        %v667 = vpop.permute.xlu0 %666
        %vm668 = vcmp.lt.s32.totalorder %v488, 47
        %v669 = vsel %vm668, %v665, %v667
        %v670 = vsel %vm668, %v667, %v665
        %671 = vrot.lane.b32.xlu0 %v471, 47
        %v672 = vpop.permute.xlu0 %671
        %673 = vrot.lane.b32.xlu0 %v480, 47
        %v674 = vpop.permute.xlu0 %673
        %v675 = vsel %vm668, %v672, %v674
        %v676 = vsel %vm668, %v674, %v672
        %s677 = sld [smem:[#allocation7 + $0x4]]
        %v678 = vstv %s677
        %v679 = vmul.f32 %v678, %v670
        %v680 = vmul.f32 %v678, %v669
        %s681 = sld [smem:[#allocation7 + $0x84]]
        %v682 = vstv %s681
        %v683 = vmul.f32 %v682, %v676
        %v684 = vmul.f32 %v682, %v675
        %v685 = vadd.f32 %v679, %v683
        %v686 = vadd.f32 %v680, %v684
        %s687 = scalar_lea.vmem %s5, 4
        %v688 = vld [vmem:[%s687] ss:$8 sm:$0x3]
        %v691 = vcombine.low %v685, %v686
        %v693 = vunpack.c.l.s4 1966171168
        %v694 = vunpack.c.0.s8 %v693
        %v695 = vlaneseq
        %v696 = vshrl.u32 %v695, 7
        %v697 = vsub.s32 %v694, %v696
        %v698 = vrot.slane %v691, %v697
        %v700 = vunpack.c.l.s4 1966171168
        %v701 = vunpack.c.0.s8 %v700
        %v702 = vlaneseq
        %v703 = vshrl.u32 %v702, 7
        %v704 = vsub.s32 %v701, %v703
        %v705 = vrot.slane %v698, %v704
        %v707 = vmul.f32 %v688, %v705
        %v708 = vadd.f32 %v663, %v707
        %709 = vrot.lane.b32.xlu0 %v461, 46
        %v710 = vpop.permute.xlu0 %709
        %711 = vrot.lane.b32.xlu0 %v462, 46
        %v712 = vpop.permute.xlu0 %711
        %vm713 = vcmp.lt.s32.totalorder %v488, 46
        %v714 = vsel %vm713, %v710, %v712
        %v715 = vsel %vm713, %v712, %v710
        %716 = vrot.lane.b32.xlu0 %v471, 46
        %v717 = vpop.permute.xlu0 %716
        %718 = vrot.lane.b32.xlu0 %v480, 46
        %v719 = vpop.permute.xlu0 %718
        %v720 = vsel %vm713, %v717, %v719
        %v721 = vsel %vm713, %v719, %v717
        %s722 = sld [smem:[#allocation7 + $0x5]]
        %v723 = vstv %s722
        %v724 = vmul.f32 %v723, %v715
        %v725 = vmul.f32 %v723, %v714
        %s726 = sld [smem:[#allocation7 + $0x85]]
        %v727 = vstv %s726
        %v728 = vmul.f32 %v727, %v721
        %v729 = vmul.f32 %v727, %v720
        %v730 = vadd.f32 %v724, %v728
        %v731 = vadd.f32 %v725, %v729
        %s732 = scalar_lea.vmem %s5, 5
        %v733 = vld [vmem:[%s732] ss:$8 sm:$0x3]
        %v736 = vcombine.low %v730, %v731
        %v738 = vunpack.c.l.s4 1966171168
        %v739 = vunpack.c.0.s8 %v738
        %v740 = vlaneseq
        %v741 = vshrl.u32 %v740, 7
        %v742 = vsub.s32 %v739, %v741
        %v743 = vrot.slane %v736, %v742
        %v745 = vunpack.c.l.s4 1966171168
        %v746 = vunpack.c.0.s8 %v745
        %v747 = vlaneseq
        %v748 = vshrl.u32 %v747, 7
        %v749 = vsub.s32 %v746, %v748
        %v750 = vrot.slane %v743, %v749
        %v752 = vmul.f32 %v733, %v750
        %v753 = vadd.f32 %v708, %v752
        %754 = vrot.lane.b32.xlu0 %v461, 45
        %v755 = vpop.permute.xlu0 %754
        %756 = vrot.lane.b32.xlu0 %v462, 45
        %v757 = vpop.permute.xlu0 %756
        %vm758 = vcmp.lt.s32.totalorder %v488, 45
        %v759 = vsel %vm758, %v755, %v757
        %v760 = vsel %vm758, %v757, %v755
        %761 = vrot.lane.b32.xlu0 %v471, 45
        %v762 = vpop.permute.xlu0 %761
        %763 = vrot.lane.b32.xlu0 %v480, 45
        %v764 = vpop.permute.xlu0 %763
        %v765 = vsel %vm758, %v762, %v764
        %v766 = vsel %vm758, %v764, %v762
        %s767 = sld [smem:[#allocation7 + $0x6]]
        %v768 = vstv %s767
        %v769 = vmul.f32 %v768, %v760
        %v770 = vmul.f32 %v768, %v759
        %s771 = sld [smem:[#allocation7 + $0x86]]
        %v772 = vstv %s771
        %v773 = vmul.f32 %v772, %v766
        %v774 = vmul.f32 %v772, %v765
        %v775 = vadd.f32 %v769, %v773
        %v776 = vadd.f32 %v770, %v774
        %s777 = scalar_lea.vmem %s5, 6
        %v778 = vld [vmem:[%s777] ss:$8 sm:$0x3]
        %v781 = vcombine.low %v775, %v776
        %v783 = vunpack.c.l.s4 1966171168
        %v784 = vunpack.c.0.s8 %v783
        %v785 = vlaneseq
        %v786 = vshrl.u32 %v785, 7
        %v787 = vsub.s32 %v784, %v786
        %v788 = vrot.slane %v781, %v787
        %v790 = vunpack.c.l.s4 1966171168
        %v791 = vunpack.c.0.s8 %v790
        %v792 = vlaneseq
        %v793 = vshrl.u32 %v792, 7
        %v794 = vsub.s32 %v791, %v793
        %v795 = vrot.slane %v788, %v794
        %v797 = vmul.f32 %v778, %v795
        %v798 = vadd.f32 %v753, %v797
        %799 = vrot.lane.b32.xlu0 %v461, 35
        %v800 = vpop.permute.xlu0 %799
        %801 = vrot.lane.b32.xlu0 %v462, 35
        %v802 = vpop.permute.xlu0 %801
        %vm803 = vcmp.lt.s32.totalorder %v488, 35
        %v804 = vsel %vm803, %v800, %v802
        %v805 = vsel %vm803, %v802, %v800
        %806 = vrot.lane.b32.xlu0 %v471, 35
        %v807 = vpop.permute.xlu0 %806
        %808 = vrot.lane.b32.xlu0 %v480, 35
        %v809 = vpop.permute.xlu0 %808
        %v810 = vsel %vm803, %v807, %v809
        %v811 = vsel %vm803, %v809, %v807
        %s812 = sld [smem:[#allocation7 + $0x7]]
        %v813 = vstv %s812
        %v814 = vmul.f32 %v813, %v805
        %v815 = vmul.f32 %v813, %v804
        %s816 = sld [smem:[#allocation7 + $0x87]]
        %v817 = vstv %s816
        %v818 = vmul.f32 %v817, %v811
        %v819 = vmul.f32 %v817, %v810
        %v820 = vadd.f32 %v814, %v818
        %v821 = vadd.f32 %v815, %v819
        %s822 = scalar_lea.vmem %s5, 7
        %v823 = vld [vmem:[%s822] ss:$8 sm:$0x3]
        %v826 = vcombine.low %v820, %v821
        %v828 = vunpack.c.l.s4 1966171168
        %v829 = vunpack.c.0.s8 %v828
        %v830 = vlaneseq
        %v831 = vshrl.u32 %v830, 7
        %v832 = vsub.s32 %v829, %v831
        %v833 = vrot.slane %v826, %v832
        %v835 = vunpack.c.l.s4 1966171168
        %v836 = vunpack.c.0.s8 %v835
        %v837 = vlaneseq
        %v838 = vshrl.u32 %v837, 7
        %v839 = vsub.s32 %v836, %v838
        %v840 = vrot.slane %v833, %v839
        %v842 = vmul.f32 %v823, %v840
        %v843 = vadd.f32 %v798, %v842
        %844 = vrot.lane.b32.xlu0 %v461, 34
        %v845 = vpop.permute.xlu0 %844
        %846 = vrot.lane.b32.xlu0 %v462, 34
        %v847 = vpop.permute.xlu0 %846
        %vm848 = vcmp.lt.s32.totalorder %v488, 34
        %v849 = vsel %vm848, %v845, %v847
        %v850 = vsel %vm848, %v847, %v845
        %851 = vrot.lane.b32.xlu0 %v471, 34
        %v852 = vpop.permute.xlu0 %851
        %853 = vrot.lane.b32.xlu0 %v480, 34
        %v854 = vpop.permute.xlu0 %853
        %v855 = vsel %vm848, %v852, %v854
        %v856 = vsel %vm848, %v854, %v852
        %s857 = sld [smem:[#allocation7 + $0x8]]
        %v858 = vstv %s857
        %v859 = vmul.f32 %v858, %v850
        %v860 = vmul.f32 %v858, %v849
        %s861 = sld [smem:[#allocation7 + $0x88]]
        %v862 = vstv %s861
        %v863 = vmul.f32 %v862, %v856
        %v864 = vmul.f32 %v862, %v855
        %v865 = vadd.f32 %v859, %v863
        %v866 = vadd.f32 %v860, %v864
        %s867 = scalar_lea.vmem %s5, 16
        %v868 = vld [vmem:[%s867] ss:$8 sm:$0x3]
        %v871 = vcombine.low %v865, %v866
        %v873 = vunpack.c.l.s4 1966171168
        %v874 = vunpack.c.0.s8 %v873
        %v875 = vlaneseq
        %v876 = vshrl.u32 %v875, 7
        %v877 = vsub.s32 %v874, %v876
        %v878 = vrot.slane %v871, %v877
        %v880 = vunpack.c.l.s4 1966171168
        %v881 = vunpack.c.0.s8 %v880
        %v882 = vlaneseq
        %v883 = vshrl.u32 %v882, 7
        %v884 = vsub.s32 %v881, %v883
        %v885 = vrot.slane %v878, %v884
        %v887 = vmul.f32 %v868, %v885
        %v888 = vadd.f32 %v843, %v887
        %889 = vrot.lane.b32.xlu0 %v461, 33
        %v890 = vpop.permute.xlu0 %889
        %891 = vrot.lane.b32.xlu0 %v462, 33
        %v892 = vpop.permute.xlu0 %891
        %vm893 = vcmp.lt.s32.totalorder %v488, 33
        %v894 = vsel %vm893, %v890, %v892
        %v895 = vsel %vm893, %v892, %v890
        %896 = vrot.lane.b32.xlu0 %v471, 33
        %v897 = vpop.permute.xlu0 %896
        %898 = vrot.lane.b32.xlu0 %v480, 33
        %v899 = vpop.permute.xlu0 %898
        %v900 = vsel %vm893, %v897, %v899
        %v901 = vsel %vm893, %v899, %v897
        %s902 = sld [smem:[#allocation7 + $0x9]]
        %v903 = vstv %s902
        %v904 = vmul.f32 %v903, %v895
        %v905 = vmul.f32 %v903, %v894
        %s906 = sld [smem:[#allocation7 + $0x89]]
        %v907 = vstv %s906
        %v908 = vmul.f32 %v907, %v901
        %v909 = vmul.f32 %v907, %v900
        %v910 = vadd.f32 %v904, %v908
        %v911 = vadd.f32 %v905, %v909
        %s912 = scalar_lea.vmem %s5, 17
        %v913 = vld [vmem:[%s912] ss:$8 sm:$0x3]
        %v916 = vcombine.low %v910, %v911
        %v918 = vunpack.c.l.s4 1966171168
        %v919 = vunpack.c.0.s8 %v918
        %v920 = vlaneseq
        %v921 = vshrl.u32 %v920, 7
        %v922 = vsub.s32 %v919, %v921
        %v923 = vrot.slane %v916, %v922
        %v925 = vunpack.c.l.s4 1966171168
        %v926 = vunpack.c.0.s8 %v925
        %v927 = vlaneseq
        %v928 = vshrl.u32 %v927, 7
        %v929 = vsub.s32 %v926, %v928
        %v930 = vrot.slane %v923, %v929
        %v932 = vmul.f32 %v913, %v930
        %v933 = vadd.f32 %v888, %v932
        %934 = vrot.lane.b32.xlu0 %v461, 32
        %v935 = vpop.permute.xlu0 %934
        %936 = vrot.lane.b32.xlu0 %v462, 32
        %v937 = vpop.permute.xlu0 %936
        %vm938 = vcmp.lt.s32.totalorder %v488, 32
        %v939 = vsel %vm938, %v935, %v937
        %v940 = vsel %vm938, %v937, %v935
        %941 = vrot.lane.b32.xlu0 %v471, 32
        %v942 = vpop.permute.xlu0 %941
        %943 = vrot.lane.b32.xlu0 %v480, 32
        %v944 = vpop.permute.xlu0 %943
        %v945 = vsel %vm938, %v942, %v944
        %v946 = vsel %vm938, %v944, %v942
        %s947 = sld [smem:[#allocation7 + $0xa]]
        %v948 = vstv %s947
        %v949 = vmul.f32 %v948, %v940
        %v950 = vmul.f32 %v948, %v939
        %s951 = sld [smem:[#allocation7 + $0x8a]]
        %v952 = vstv %s951
        %v953 = vmul.f32 %v952, %v946
        %v954 = vmul.f32 %v952, %v945
        %v955 = vadd.f32 %v949, %v953
        %v956 = vadd.f32 %v950, %v954
        %s957 = scalar_lea.vmem %s5, 18
        %v958 = vld [vmem:[%s957] ss:$8 sm:$0x3]
        %v961 = vcombine.low %v955, %v956
        %v963 = vunpack.c.l.s4 1966171168
        %v964 = vunpack.c.0.s8 %v963
        %v965 = vlaneseq
        %v966 = vshrl.u32 %v965, 7
        %v967 = vsub.s32 %v964, %v966
        %v968 = vrot.slane %v961, %v967
        %v970 = vunpack.c.l.s4 1966171168
        %v971 = vunpack.c.0.s8 %v970
        %v972 = vlaneseq
        %v973 = vshrl.u32 %v972, 7
        %v974 = vsub.s32 %v971, %v973
        %v975 = vrot.slane %v968, %v974
        %v977 = vmul.f32 %v958, %v975
        %v978 = vadd.f32 %v933, %v977
        %979 = vrot.lane.b32.xlu0 %v461, 31
        %v980 = vpop.permute.xlu0 %979
        %981 = vrot.lane.b32.xlu0 %v462, 31
        %v982 = vpop.permute.xlu0 %981
        %vm983 = vcmp.lt.s32.totalorder %v488, 31
        %v984 = vsel %vm983, %v980, %v982
        %v985 = vsel %vm983, %v982, %v980
        %986 = vrot.lane.b32.xlu0 %v471, 31
        %v987 = vpop.permute.xlu0 %986
        %988 = vrot.lane.b32.xlu0 %v480, 31
        %v989 = vpop.permute.xlu0 %988
        %v990 = vsel %vm983, %v987, %v989
        %v991 = vsel %vm983, %v989, %v987
        %s992 = sld [smem:[#allocation7 + $0xb]]
        %v993 = vstv %s992
        %v994 = vmul.f32 %v993, %v985
        %v995 = vmul.f32 %v993, %v984
        %s996 = sld [smem:[#allocation7 + $0x8b]]
        %v997 = vstv %s996
        %v998 = vmul.f32 %v997, %v991
        %v999 = vmul.f32 %v997, %v990
        %v1000 = vadd.f32 %v994, %v998
        %v1001 = vadd.f32 %v995, %v999
        %s1002 = scalar_lea.vmem %s5, 19
        %v1003 = vld [vmem:[%s1002] ss:$8 sm:$0x3]
        %v1006 = vcombine.low %v1000, %v1001
        %v1008 = vunpack.c.l.s4 1966171168
        %v1009 = vunpack.c.0.s8 %v1008
        %v1010 = vlaneseq
        %v1011 = vshrl.u32 %v1010, 7
        %v1012 = vsub.s32 %v1009, %v1011
        %v1013 = vrot.slane %v1006, %v1012
        %v1015 = vunpack.c.l.s4 1966171168
        %v1016 = vunpack.c.0.s8 %v1015
        %v1017 = vlaneseq
        %v1018 = vshrl.u32 %v1017, 7
        %v1019 = vsub.s32 %v1016, %v1018
        %v1020 = vrot.slane %v1013, %v1019
        %v1022 = vmul.f32 %v1003, %v1020
        %v1023 = vadd.f32 %v978, %v1022
        %1024 = vrot.lane.b32.xlu0 %v461, 30
        %v1025 = vpop.permute.xlu0 %1024
        %1026 = vrot.lane.b32.xlu0 %v462, 30
        %v1027 = vpop.permute.xlu0 %1026
        %vm1028 = vcmp.lt.s32.totalorder %v488, 30
        %v1029 = vsel %vm1028, %v1025, %v1027
        %v1030 = vsel %vm1028, %v1027, %v1025
        %1031 = vrot.lane.b32.xlu0 %v471, 30
        %v1032 = vpop.permute.xlu0 %1031
        %1033 = vrot.lane.b32.xlu0 %v480, 30
        %v1034 = vpop.permute.xlu0 %1033
        %v1035 = vsel %vm1028, %v1032, %v1034
        %v1036 = vsel %vm1028, %v1034, %v1032
        %s1037 = sld [smem:[#allocation7 + $0xc]]
        %v1038 = vstv %s1037
        %v1039 = vmul.f32 %v1038, %v1030
        %v1040 = vmul.f32 %v1038, %v1029
        %s1041 = sld [smem:[#allocation7 + $0x8c]]
        %v1042 = vstv %s1041
        %v1043 = vmul.f32 %v1042, %v1036
        %v1044 = vmul.f32 %v1042, %v1035
        %v1045 = vadd.f32 %v1039, %v1043
        %v1046 = vadd.f32 %v1040, %v1044
        %s1047 = scalar_lea.vmem %s5, 20
        %v1048 = vld [vmem:[%s1047] ss:$8 sm:$0x3]
        %v1051 = vcombine.low %v1045, %v1046
        %v1053 = vunpack.c.l.s4 1966171168
        %v1054 = vunpack.c.0.s8 %v1053
        %v1055 = vlaneseq
        %v1056 = vshrl.u32 %v1055, 7
        %v1057 = vsub.s32 %v1054, %v1056
        %v1058 = vrot.slane %v1051, %v1057
        %v1060 = vunpack.c.l.s4 1966171168
        %v1061 = vunpack.c.0.s8 %v1060
        %v1062 = vlaneseq
        %v1063 = vshrl.u32 %v1062, 7
        %v1064 = vsub.s32 %v1061, %v1063
        %v1065 = vrot.slane %v1058, %v1064
        %v1067 = vmul.f32 %v1048, %v1065
        %v1068 = vadd.f32 %v1023, %v1067
        %1069 = vrot.lane.b32.xlu0 %v461, 29
        %v1070 = vpop.permute.xlu0 %1069
        %1071 = vrot.lane.b32.xlu0 %v462, 29
        %v1072 = vpop.permute.xlu0 %1071
        %vm1073 = vcmp.lt.s32.totalorder %v488, 29
        %v1074 = vsel %vm1073, %v1070, %v1072
        %v1075 = vsel %vm1073, %v1072, %v1070
        %1076 = vrot.lane.b32.xlu0 %v471, 29
        %v1077 = vpop.permute.xlu0 %1076
        %1078 = vrot.lane.b32.xlu0 %v480, 29
        %v1079 = vpop.permute.xlu0 %1078
        %v1080 = vsel %vm1073, %v1077, %v1079
        %v1081 = vsel %vm1073, %v1079, %v1077
        %s1082 = sld [smem:[#allocation7 + $0xd]]
        %v1083 = vstv %s1082
        %v1084 = vmul.f32 %v1083, %v1075
        %v1085 = vmul.f32 %v1083, %v1074
        %s1086 = sld [smem:[#allocation7 + $0x8d]]
        %v1087 = vstv %s1086
        %v1088 = vmul.f32 %v1087, %v1081
        %v1089 = vmul.f32 %v1087, %v1080
        %v1090 = vadd.f32 %v1084, %v1088
        %v1091 = vadd.f32 %v1085, %v1089
        %s1092 = scalar_lea.vmem %s5, 21
        %v1093 = vld [vmem:[%s1092] ss:$8 sm:$0x3]
        %v1096 = vcombine.low %v1090, %v1091
        %v1098 = vunpack.c.l.s4 1966171168
        %v1099 = vunpack.c.0.s8 %v1098
        %v1100 = vlaneseq
        %v1101 = vshrl.u32 %v1100, 7
        %v1102 = vsub.s32 %v1099, %v1101
        %v1103 = vrot.slane %v1096, %v1102
        %v1105 = vunpack.c.l.s4 1966171168
        %v1106 = vunpack.c.0.s8 %v1105
        %v1107 = vlaneseq
        %v1108 = vshrl.u32 %v1107, 7
        %v1109 = vsub.s32 %v1106, %v1108
        %v1110 = vrot.slane %v1103, %v1109
        %v1112 = vmul.f32 %v1093, %v1110
        %v1113 = vadd.f32 %v1068, %v1112
        %1114 = vrot.lane.b32.xlu0 %v461, 19
        %v1115 = vpop.permute.xlu0 %1114
        %1116 = vrot.lane.b32.xlu0 %v462, 19
        %v1117 = vpop.permute.xlu0 %1116
        %vm1118 = vcmp.lt.s32.totalorder %v488, 19
        %v1119 = vsel %vm1118, %v1115, %v1117
        %v1120 = vsel %vm1118, %v1117, %v1115
        %1121 = vrot.lane.b32.xlu0 %v471, 19
        %v1122 = vpop.permute.xlu0 %1121
        %1123 = vrot.lane.b32.xlu0 %v480, 19
        %v1124 = vpop.permute.xlu0 %1123
        %v1125 = vsel %vm1118, %v1122, %v1124
        %v1126 = vsel %vm1118, %v1124, %v1122
        %s1127 = sld [smem:[#allocation7 + $0xe]]
        %v1128 = vstv %s1127
        %v1129 = vmul.f32 %v1128, %v1120
        %v1130 = vmul.f32 %v1128, %v1119
        %s1131 = sld [smem:[#allocation7 + $0x8e]]
        %v1132 = vstv %s1131
        %v1133 = vmul.f32 %v1132, %v1126
        %v1134 = vmul.f32 %v1132, %v1125
        %v1135 = vadd.f32 %v1129, %v1133
        %v1136 = vadd.f32 %v1130, %v1134
        %s1137 = scalar_lea.vmem %s5, 22
        %v1138 = vld [vmem:[%s1137] ss:$8 sm:$0x3]
        %v1141 = vcombine.low %v1135, %v1136
        %v1143 = vunpack.c.l.s4 1966171168
        %v1144 = vunpack.c.0.s8 %v1143
        %v1145 = vlaneseq
        %v1146 = vshrl.u32 %v1145, 7
        %v1147 = vsub.s32 %v1144, %v1146
        %v1148 = vrot.slane %v1141, %v1147
        %v1150 = vunpack.c.l.s4 1966171168
        %v1151 = vunpack.c.0.s8 %v1150
        %v1152 = vlaneseq
        %v1153 = vshrl.u32 %v1152, 7
        %v1154 = vsub.s32 %v1151, %v1153
        %v1155 = vrot.slane %v1148, %v1154
        %v1157 = vmul.f32 %v1138, %v1155
        %v1158 = vadd.f32 %v1113, %v1157
        %1159 = vrot.lane.b32.xlu0 %v461, 18
        %v1160 = vpop.permute.xlu0 %1159
        %1161 = vrot.lane.b32.xlu0 %v462, 18
        %v1162 = vpop.permute.xlu0 %1161
        %vm1163 = vcmp.lt.s32.totalorder %v488, 18
        %v1164 = vsel %vm1163, %v1160, %v1162
        %v1165 = vsel %vm1163, %v1162, %v1160
        %1166 = vrot.lane.b32.xlu0 %v471, 18
        %v1167 = vpop.permute.xlu0 %1166
        %1168 = vrot.lane.b32.xlu0 %v480, 18
        %v1169 = vpop.permute.xlu0 %1168
        %v1170 = vsel %vm1163, %v1167, %v1169
        %v1171 = vsel %vm1163, %v1169, %v1167
        %s1172 = sld [smem:[#allocation7 + $0xf]]
        %v1173 = vstv %s1172
        %v1174 = vmul.f32 %v1173, %v1165
        %v1175 = vmul.f32 %v1173, %v1164
        %s1176 = sld [smem:[#allocation7 + $0x8f]]
        %v1177 = vstv %s1176
        %v1178 = vmul.f32 %v1177, %v1171
        %v1179 = vmul.f32 %v1177, %v1170
        %v1180 = vadd.f32 %v1174, %v1178
        %v1181 = vadd.f32 %v1175, %v1179
        %s1182 = scalar_lea.vmem %s5, 23
        %v1183 = vld [vmem:[%s1182] ss:$8 sm:$0x3]
        %v1186 = vcombine.low %v1180, %v1181
        %v1188 = vunpack.c.l.s4 1966171168
        %v1189 = vunpack.c.0.s8 %v1188
        %v1190 = vlaneseq
        %v1191 = vshrl.u32 %v1190, 7
        %v1192 = vsub.s32 %v1189, %v1191
        %v1193 = vrot.slane %v1186, %v1192
        %v1195 = vunpack.c.l.s4 1966171168
        %v1196 = vunpack.c.0.s8 %v1195
        %v1197 = vlaneseq
        %v1198 = vshrl.u32 %v1197, 7
        %v1199 = vsub.s32 %v1196, %v1198
        %v1200 = vrot.slane %v1193, %v1199
        %v1202 = vmul.f32 %v1183, %v1200
        %v1203 = vadd.f32 %v1158, %v1202
        %1204 = vrot.lane.b32.xlu0 %v461, 17
        %v1205 = vpop.permute.xlu0 %1204
        %1206 = vrot.lane.b32.xlu0 %v462, 17
        %v1207 = vpop.permute.xlu0 %1206
        %vm1208 = vcmp.lt.s32.totalorder %v488, 17
        %v1209 = vsel %vm1208, %v1205, %v1207
        %v1210 = vsel %vm1208, %v1207, %v1205
        %1211 = vrot.lane.b32.xlu0 %v471, 17
        %v1212 = vpop.permute.xlu0 %1211
        %1213 = vrot.lane.b32.xlu0 %v480, 17
        %v1214 = vpop.permute.xlu0 %1213
        %v1215 = vsel %vm1208, %v1212, %v1214
        %v1216 = vsel %vm1208, %v1214, %v1212
        %s1217 = sld [smem:[#allocation7 + $0x10]]
        %v1218 = vstv %s1217
        %v1219 = vmul.f32 %v1218, %v1210
        %v1220 = vmul.f32 %v1218, %v1209
        %s1221 = sld [smem:[#allocation7 + $0x90]]
        %v1222 = vstv %s1221
        %v1223 = vmul.f32 %v1222, %v1216
        %v1224 = vmul.f32 %v1222, %v1215
        %v1225 = vadd.f32 %v1219, %v1223
        %v1226 = vadd.f32 %v1220, %v1224
        %s1227 = scalar_lea.vmem %s5, 32
        %v1228 = vld [vmem:[%s1227] ss:$8 sm:$0x3]
        %v1231 = vcombine.low %v1225, %v1226
        %v1233 = vunpack.c.l.s4 1966171168
        %v1234 = vunpack.c.0.s8 %v1233
        %v1235 = vlaneseq
        %v1236 = vshrl.u32 %v1235, 7
        %v1237 = vsub.s32 %v1234, %v1236
        %v1238 = vrot.slane %v1231, %v1237
        %v1240 = vunpack.c.l.s4 1966171168
        %v1241 = vunpack.c.0.s8 %v1240
        %v1242 = vlaneseq
        %v1243 = vshrl.u32 %v1242, 7
        %v1244 = vsub.s32 %v1241, %v1243
        %v1245 = vrot.slane %v1238, %v1244
        %v1247 = vmul.f32 %v1228, %v1245
        %v1248 = vadd.f32 %v1203, %v1247
        %1249 = vrot.lane.b32.xlu0 %v461, 16
        %v1250 = vpop.permute.xlu0 %1249
        %1251 = vrot.lane.b32.xlu0 %v462, 16
        %v1252 = vpop.permute.xlu0 %1251
        %vm1253 = vcmp.lt.s32.totalorder %v488, 16
        %v1254 = vsel %vm1253, %v1250, %v1252
        %v1255 = vsel %vm1253, %v1252, %v1250
        %1256 = vrot.lane.b32.xlu0 %v471, 16
        %v1257 = vpop.permute.xlu0 %1256
        %1258 = vrot.lane.b32.xlu0 %v480, 16
        %v1259 = vpop.permute.xlu0 %1258
        %v1260 = vsel %vm1253, %v1257, %v1259
        %v1261 = vsel %vm1253, %v1259, %v1257
        %s1262 = sld [smem:[#allocation7 + $0x11]]
        %v1263 = vstv %s1262
        %v1264 = vmul.f32 %v1263, %v1255
        %v1265 = vmul.f32 %v1263, %v1254
        %s1266 = sld [smem:[#allocation7 + $0x91]]
        %v1267 = vstv %s1266
        %v1268 = vmul.f32 %v1267, %v1261
        %v1269 = vmul.f32 %v1267, %v1260
        %v1270 = vadd.f32 %v1264, %v1268
        %v1271 = vadd.f32 %v1265, %v1269
        %s1272 = scalar_lea.vmem %s5, 33
        %v1273 = vld [vmem:[%s1272] ss:$8 sm:$0x3]
        %v1276 = vcombine.low %v1270, %v1271
        %v1278 = vunpack.c.l.s4 1966171168
        %v1279 = vunpack.c.0.s8 %v1278
        %v1280 = vlaneseq
        %v1281 = vshrl.u32 %v1280, 7
        %v1282 = vsub.s32 %v1279, %v1281
        %v1283 = vrot.slane %v1276, %v1282
        %v1285 = vunpack.c.l.s4 1966171168
        %v1286 = vunpack.c.0.s8 %v1285
        %v1287 = vlaneseq
        %v1288 = vshrl.u32 %v1287, 7
        %v1289 = vsub.s32 %v1286, %v1288
        %v1290 = vrot.slane %v1283, %v1289
        %v1292 = vmul.f32 %v1273, %v1290
        %v1293 = vadd.f32 %v1248, %v1292
        %1294 = vrot.lane.b32.xlu0 %v461, 15
        %v1295 = vpop.permute.xlu0 %1294
        %1296 = vrot.lane.b32.xlu0 %v462, 15
        %v1297 = vpop.permute.xlu0 %1296
        %vm1298 = vcmp.lt.s32.totalorder %v488, 15
        %v1299 = vsel %vm1298, %v1295, %v1297
        %v1300 = vsel %vm1298, %v1297, %v1295
        %1301 = vrot.lane.b32.xlu0 %v471, 15
        %v1302 = vpop.permute.xlu0 %1301
        %1303 = vrot.lane.b32.xlu0 %v480, 15
        %v1304 = vpop.permute.xlu0 %1303
        %v1305 = vsel %vm1298, %v1302, %v1304
        %v1306 = vsel %vm1298, %v1304, %v1302
        %s1307 = sld [smem:[#allocation7 + $0x12]]
        %v1308 = vstv %s1307
        %v1309 = vmul.f32 %v1308, %v1300
        %v1310 = vmul.f32 %v1308, %v1299
        %s1311 = sld [smem:[#allocation7 + $0x92]]
        %v1312 = vstv %s1311
        %v1313 = vmul.f32 %v1312, %v1306
        %v1314 = vmul.f32 %v1312, %v1305
        %v1315 = vadd.f32 %v1309, %v1313
        %v1316 = vadd.f32 %v1310, %v1314
        %s1317 = scalar_lea.vmem %s5, 34
        %v1318 = vld [vmem:[%s1317] ss:$8 sm:$0x3]
        %v1321 = vcombine.low %v1315, %v1316
        %v1323 = vunpack.c.l.s4 1966171168
        %v1324 = vunpack.c.0.s8 %v1323
        %v1325 = vlaneseq
        %v1326 = vshrl.u32 %v1325, 7
        %v1327 = vsub.s32 %v1324, %v1326
        %v1328 = vrot.slane %v1321, %v1327
        %v1330 = vunpack.c.l.s4 1966171168
        %v1331 = vunpack.c.0.s8 %v1330
        %v1332 = vlaneseq
        %v1333 = vshrl.u32 %v1332, 7
        %v1334 = vsub.s32 %v1331, %v1333
        %v1335 = vrot.slane %v1328, %v1334
        %v1337 = vmul.f32 %v1318, %v1335
        %v1338 = vadd.f32 %v1293, %v1337
        %1339 = vrot.lane.b32.xlu0 %v461, 14
        %v1340 = vpop.permute.xlu0 %1339
        %1341 = vrot.lane.b32.xlu0 %v462, 14
        %v1342 = vpop.permute.xlu0 %1341
        %vm1343 = vcmp.lt.s32.totalorder %v488, 14
        %v1344 = vsel %vm1343, %v1340, %v1342
        %v1345 = vsel %vm1343, %v1342, %v1340
        %1346 = vrot.lane.b32.xlu0 %v471, 14
        %v1347 = vpop.permute.xlu0 %1346
        %1348 = vrot.lane.b32.xlu0 %v480, 14
        %v1349 = vpop.permute.xlu0 %1348
        %v1350 = vsel %vm1343, %v1347, %v1349
        %v1351 = vsel %vm1343, %v1349, %v1347
        %s1352 = sld [smem:[#allocation7 + $0x13]]
        %v1353 = vstv %s1352
        %v1354 = vmul.f32 %v1353, %v1345
        %v1355 = vmul.f32 %v1353, %v1344
        %s1356 = sld [smem:[#allocation7 + $0x93]]
        %v1357 = vstv %s1356
        %v1358 = vmul.f32 %v1357, %v1351
        %v1359 = vmul.f32 %v1357, %v1350
        %v1360 = vadd.f32 %v1354, %v1358
        %v1361 = vadd.f32 %v1355, %v1359
        %s1362 = scalar_lea.vmem %s5, 35
        %v1363 = vld [vmem:[%s1362] ss:$8 sm:$0x3]
        %v1366 = vcombine.low %v1360, %v1361
        %v1368 = vunpack.c.l.s4 1966171168
        %v1369 = vunpack.c.0.s8 %v1368
        %v1370 = vlaneseq
        %v1371 = vshrl.u32 %v1370, 7
        %v1372 = vsub.s32 %v1369, %v1371
        %v1373 = vrot.slane %v1366, %v1372
        %v1375 = vunpack.c.l.s4 1966171168
        %v1376 = vunpack.c.0.s8 %v1375
        %v1377 = vlaneseq
        %v1378 = vshrl.u32 %v1377, 7
        %v1379 = vsub.s32 %v1376, %v1378
        %v1380 = vrot.slane %v1373, %v1379
        %v1382 = vmul.f32 %v1363, %v1380
        %v1383 = vadd.f32 %v1338, %v1382
        %1384 = vrot.lane.b32.xlu0 %v461, 13
        %v1385 = vpop.permute.xlu0 %1384
        %1386 = vrot.lane.b32.xlu0 %v462, 13
        %v1387 = vpop.permute.xlu0 %1386
        %vm1388 = vcmp.lt.s32.totalorder %v488, 13
        %v1389 = vsel %vm1388, %v1385, %v1387
        %v1390 = vsel %vm1388, %v1387, %v1385
        %1391 = vrot.lane.b32.xlu0 %v471, 13
        %v1392 = vpop.permute.xlu0 %1391
        %1393 = vrot.lane.b32.xlu0 %v480, 13
        %v1394 = vpop.permute.xlu0 %1393
        %v1395 = vsel %vm1388, %v1392, %v1394
        %v1396 = vsel %vm1388, %v1394, %v1392
        %s1397 = sld [smem:[#allocation7 + $0x14]]
        %v1398 = vstv %s1397
        %v1399 = vmul.f32 %v1398, %v1390
        %v1400 = vmul.f32 %v1398, %v1389
        %s1401 = sld [smem:[#allocation7 + $0x94]]
        %v1402 = vstv %s1401
        %v1403 = vmul.f32 %v1402, %v1396
        %v1404 = vmul.f32 %v1402, %v1395
        %v1405 = vadd.f32 %v1399, %v1403
        %v1406 = vadd.f32 %v1400, %v1404
        %s1407 = scalar_lea.vmem %s5, 36
        %v1408 = vld [vmem:[%s1407] ss:$8 sm:$0x3]
        %v1411 = vcombine.low %v1405, %v1406
        %v1413 = vunpack.c.l.s4 1966171168
        %v1414 = vunpack.c.0.s8 %v1413
        %v1415 = vlaneseq
        %v1416 = vshrl.u32 %v1415, 7
        %v1417 = vsub.s32 %v1414, %v1416
        %v1418 = vrot.slane %v1411, %v1417
        %v1420 = vunpack.c.l.s4 1966171168
        %v1421 = vunpack.c.0.s8 %v1420
        %v1422 = vlaneseq
        %v1423 = vshrl.u32 %v1422, 7
        %v1424 = vsub.s32 %v1421, %v1423
        %v1425 = vrot.slane %v1418, %v1424
        %v1427 = vmul.f32 %v1408, %v1425
        %v1428 = vadd.f32 %v1383, %v1427
        %1429 = vrot.lane.b32.xlu0 %v461, 3
        %v1430 = vpop.permute.xlu0 %1429
        %1431 = vrot.lane.b32.xlu0 %v462, 3
        %v1432 = vpop.permute.xlu0 %1431
        %vm1433 = vcmp.lt.s32.totalorder %v488, 3
        %v1434 = vsel %vm1433, %v1430, %v1432
        %v1435 = vsel %vm1433, %v1432, %v1430
        %1436 = vrot.lane.b32.xlu0 %v471, 3
        %v1437 = vpop.permute.xlu0 %1436
        %1438 = vrot.lane.b32.xlu0 %v480, 3
        %v1439 = vpop.permute.xlu0 %1438
        %v1440 = vsel %vm1433, %v1437, %v1439
        %v1441 = vsel %vm1433, %v1439, %v1437
        %s1442 = sld [smem:[#allocation7 + $0x15]]
        %v1443 = vstv %s1442
        %v1444 = vmul.f32 %v1443, %v1435
        %v1445 = vmul.f32 %v1443, %v1434
        %s1446 = sld [smem:[#allocation7 + $0x95]]
        %v1447 = vstv %s1446
        %v1448 = vmul.f32 %v1447, %v1441
        %v1449 = vmul.f32 %v1447, %v1440
        %v1450 = vadd.f32 %v1444, %v1448
        %v1451 = vadd.f32 %v1445, %v1449
        %s1452 = scalar_lea.vmem %s5, 37
        %v1453 = vld [vmem:[%s1452] ss:$8 sm:$0x3]
        %v1456 = vcombine.low %v1450, %v1451
        %v1458 = vunpack.c.l.s4 1966171168
        %v1459 = vunpack.c.0.s8 %v1458
        %v1460 = vlaneseq
        %v1461 = vshrl.u32 %v1460, 7
        %v1462 = vsub.s32 %v1459, %v1461
        %v1463 = vrot.slane %v1456, %v1462
        %v1465 = vunpack.c.l.s4 1966171168
        %v1466 = vunpack.c.0.s8 %v1465
        %v1467 = vlaneseq
        %v1468 = vshrl.u32 %v1467, 7
        %v1469 = vsub.s32 %v1466, %v1468
        %v1470 = vrot.slane %v1463, %v1469
        %v1472 = vmul.f32 %v1453, %v1470
        %v1473 = vadd.f32 %v1428, %v1472
        %1474 = vrot.lane.b32.xlu0 %v461, 2
        %v1475 = vpop.permute.xlu0 %1474
        %1476 = vrot.lane.b32.xlu0 %v462, 2
        %v1477 = vpop.permute.xlu0 %1476
        %vm1478 = vcmp.lt.s32.totalorder %v488, 2
        %v1479 = vsel %vm1478, %v1475, %v1477
        %v1480 = vsel %vm1478, %v1477, %v1475
        %1481 = vrot.lane.b32.xlu0 %v471, 2
        %v1482 = vpop.permute.xlu0 %1481
        %1483 = vrot.lane.b32.xlu0 %v480, 2
        %v1484 = vpop.permute.xlu0 %1483
        %v1485 = vsel %vm1478, %v1482, %v1484
        %v1486 = vsel %vm1478, %v1484, %v1482
        %s1487 = sld [smem:[#allocation7 + $0x16]]
        %v1488 = vstv %s1487
        %v1489 = vmul.f32 %v1488, %v1480
        %v1490 = vmul.f32 %v1488, %v1479
        %s1491 = sld [smem:[#allocation7 + $0x96]]
        %v1492 = vstv %s1491
        %v1493 = vmul.f32 %v1492, %v1486
        %v1494 = vmul.f32 %v1492, %v1485
        %v1495 = vadd.f32 %v1489, %v1493
        %v1496 = vadd.f32 %v1490, %v1494
        %s1497 = scalar_lea.vmem %s5, 38
        %v1498 = vld [vmem:[%s1497] ss:$8 sm:$0x3]
        %v1501 = vcombine.low %v1495, %v1496
        %v1503 = vunpack.c.l.s4 1966171168
        %v1504 = vunpack.c.0.s8 %v1503
        %v1505 = vlaneseq
        %v1506 = vshrl.u32 %v1505, 7
        %v1507 = vsub.s32 %v1504, %v1506
        %v1508 = vrot.slane %v1501, %v1507
        %v1510 = vunpack.c.l.s4 1966171168
        %v1511 = vunpack.c.0.s8 %v1510
        %v1512 = vlaneseq
        %v1513 = vshrl.u32 %v1512, 7
        %v1514 = vsub.s32 %v1511, %v1513
        %v1515 = vrot.slane %v1508, %v1514
        %v1517 = vmul.f32 %v1498, %v1515
        %v1518 = vadd.f32 %v1473, %v1517
        %1519 = vrot.lane.b32.xlu0 %v461, 1
        %v1520 = vpop.permute.xlu0 %1519
        %1521 = vrot.lane.b32.xlu0 %v462, 1
        %v1522 = vpop.permute.xlu0 %1521
        %vm1523 = vcmp.lt.s32.totalorder %v488, 1
        %v1524 = vsel %vm1523, %v1520, %v1522
        %v1525 = vsel %vm1523, %v1522, %v1520
        %1526 = vrot.lane.b32.xlu0 %v471, 1
        %v1527 = vpop.permute.xlu0 %1526
        %1528 = vrot.lane.b32.xlu0 %v480, 1
        %v1529 = vpop.permute.xlu0 %1528
        %v1530 = vsel %vm1523, %v1527, %v1529
        %v1531 = vsel %vm1523, %v1529, %v1527
        %s1532 = sld [smem:[#allocation7 + $0x17]]
        %v1533 = vstv %s1532
        %v1534 = vmul.f32 %v1533, %v1525
        %v1535 = vmul.f32 %v1533, %v1524
        %s1536 = sld [smem:[#allocation7 + $0x97]]
        %v1537 = vstv %s1536
        %v1538 = vmul.f32 %v1537, %v1531
        %v1539 = vmul.f32 %v1537, %v1530
        %v1540 = vadd.f32 %v1534, %v1538
        %v1541 = vadd.f32 %v1535, %v1539
        %s1542 = scalar_lea.vmem %s5, 39
        %v1543 = vld [vmem:[%s1542] ss:$8 sm:$0x3]
        %v1546 = vcombine.low %v1540, %v1541
        %v1548 = vunpack.c.l.s4 1966171168
        %v1549 = vunpack.c.0.s8 %v1548
        %v1550 = vlaneseq
        %v1551 = vshrl.u32 %v1550, 7
        %v1552 = vsub.s32 %v1549, %v1551
        %v1553 = vrot.slane %v1546, %v1552
        %v1555 = vunpack.c.l.s4 1966171168
        %v1556 = vunpack.c.0.s8 %v1555
        %v1557 = vlaneseq
        %v1558 = vshrl.u32 %v1557, 7
        %v1559 = vsub.s32 %v1556, %v1558
        %v1560 = vrot.slane %v1553, %v1559
        %v1562 = vmul.f32 %v1543, %v1560
        %v1563 = vadd.f32 %v1518, %v1562
        %s1564 = sld [smem:[#allocation7 + $0x18]]
        %v1565 = vstv %s1564
        %v1566 = vmul.f32 %v1565, %v461
        %v1567 = vmul.f32 %v1565, %v462
        %s1568 = sld [smem:[#allocation7 + $0x98]]
        %v1569 = vstv %s1568
        %v1570 = vmul.f32 %v1569, %v471
        %v1571 = vmul.f32 %v1569, %v480
        %v1572 = vadd.f32 %v1566, %v1570
        %v1573 = vadd.f32 %v1567, %v1571
        %s1574 = scalar_lea.vmem %s5, 48
        %v1575 = vld [vmem:[%s1574] ss:$8 sm:$0x3]
        %v1578 = vcombine.low %v1572, %v1573
        %v1580 = vunpack.c.l.s4 1966171168
        %v1581 = vunpack.c.0.s8 %v1580
        %v1582 = vlaneseq
        %v1583 = vshrl.u32 %v1582, 7
        %v1584 = vsub.s32 %v1581, %v1583
        %v1585 = vrot.slane %v1578, %v1584
        %v1587 = vunpack.c.l.s4 1966171168
        %v1588 = vunpack.c.0.s8 %v1587
        %v1589 = vlaneseq
        %v1590 = vshrl.u32 %v1589, 7
        %v1591 = vsub.s32 %v1588, %v1590
        %v1592 = vrot.slane %v1585, %v1591
        %v1594 = vmul.f32 %v1575, %v1592
        %v1595 = vadd.f32 %v1563, %v1594
        %1596 = vrot.lane.b32.xlu0 %v461, 127
        %v1597 = vpop.permute.xlu0 %1596
        %1598 = vrot.lane.b32.xlu0 %v462, 127
        %v1599 = vpop.permute.xlu0 %1598
        %vm1600 = vcmp.lt.s32.totalorder %v488, 127
        %v1601 = vsel %vm1600, %v1597, %v1599
        %v1602 = vsel %vm1600, %v1599, %v1597
        %1603 = vrot.lane.b32.xlu0 %v471, 127
        %v1604 = vpop.permute.xlu0 %1603
        %1605 = vrot.lane.b32.xlu0 %v480, 127
        %v1606 = vpop.permute.xlu0 %1605
        %v1607 = vsel %vm1600, %v1604, %v1606
        %v1608 = vsel %vm1600, %v1606, %v1604
        %s1609 = sld [smem:[#allocation7 + $0x19]]
        %v1610 = vstv %s1609
        %v1611 = vmul.f32 %v1610, %v1601
        %v1612 = vmul.f32 %v1610, %v1602
        %s1613 = sld [smem:[#allocation7 + $0x99]]
        %v1614 = vstv %s1613
        %v1615 = vmul.f32 %v1614, %v1607
        %v1616 = vmul.f32 %v1614, %v1608
        %v1617 = vadd.f32 %v1611, %v1615
        %v1618 = vadd.f32 %v1612, %v1616
        %s1619 = scalar_lea.vmem %s5, 49
        %v1620 = vld [vmem:[%s1619] ss:$8 sm:$0x3]
        %v1623 = vcombine.low %v1617, %v1618
        %v1625 = vunpack.c.l.s4 1966171168
        %v1626 = vunpack.c.0.s8 %v1625
        %v1627 = vlaneseq
        %v1628 = vshrl.u32 %v1627, 7
        %v1629 = vsub.s32 %v1626, %v1628
        %v1630 = vrot.slane %v1623, %v1629
        %v1632 = vunpack.c.l.s4 1966171168
        %v1633 = vunpack.c.0.s8 %v1632
        %v1634 = vlaneseq
        %v1635 = vshrl.u32 %v1634, 7
        %v1636 = vsub.s32 %v1633, %v1635
        %v1637 = vrot.slane %v1630, %v1636
        %v1639 = vmul.f32 %v1620, %v1637
        %v1640 = vadd.f32 %v1595, %v1639
        %1641 = vrot.lane.b32.xlu0 %v461, 126
        %v1642 = vpop.permute.xlu0 %1641
        %1643 = vrot.lane.b32.xlu0 %v462, 126
        %v1644 = vpop.permute.xlu0 %1643
        %vm1645 = vcmp.lt.s32.totalorder %v488, 126
        %v1646 = vsel %vm1645, %v1642, %v1644
        %v1647 = vsel %vm1645, %v1644, %v1642
        %1648 = vrot.lane.b32.xlu0 %v471, 126
        %v1649 = vpop.permute.xlu0 %1648
        %1650 = vrot.lane.b32.xlu0 %v480, 126
        %v1651 = vpop.permute.xlu0 %1650
        %v1652 = vsel %vm1645, %v1649, %v1651
        %v1653 = vsel %vm1645, %v1651, %v1649
        %s1654 = sld [smem:[#allocation7 + $0x1a]]
        %v1655 = vstv %s1654
        %v1656 = vmul.f32 %v1655, %v1646
        %v1657 = vmul.f32 %v1655, %v1647
        %s1658 = sld [smem:[#allocation7 + $0x9a]]
        %v1659 = vstv %s1658
        %v1660 = vmul.f32 %v1659, %v1652
        %v1661 = vmul.f32 %v1659, %v1653
        %v1662 = vadd.f32 %v1656, %v1660
        %v1663 = vadd.f32 %v1657, %v1661
        %s1664 = scalar_lea.vmem %s5, 50
        %v1665 = vld [vmem:[%s1664] ss:$8 sm:$0x3]
        %v1668 = vcombine.low %v1662, %v1663
        %v1670 = vunpack.c.l.s4 1966171168
        %v1671 = vunpack.c.0.s8 %v1670
        %v1672 = vlaneseq
        %v1673 = vshrl.u32 %v1672, 7
        %v1674 = vsub.s32 %v1671, %v1673
        %v1675 = vrot.slane %v1668, %v1674
        %v1677 = vunpack.c.l.s4 1966171168
        %v1678 = vunpack.c.0.s8 %v1677
        %v1679 = vlaneseq
        %v1680 = vshrl.u32 %v1679, 7
        %v1681 = vsub.s32 %v1678, %v1680
        %v1682 = vrot.slane %v1675, %v1681
        %v1684 = vmul.f32 %v1665, %v1682
        %v1685 = vadd.f32 %v1640, %v1684
        %1686 = vrot.lane.b32.xlu0 %v461, 125
        %v1687 = vpop.permute.xlu0 %1686
        %1688 = vrot.lane.b32.xlu0 %v462, 125
        %v1689 = vpop.permute.xlu0 %1688
        %vm1690 = vcmp.lt.s32.totalorder %v488, 125
        %v1691 = vsel %vm1690, %v1687, %v1689
        %v1692 = vsel %vm1690, %v1689, %v1687
        %1693 = vrot.lane.b32.xlu0 %v471, 125
        %v1694 = vpop.permute.xlu0 %1693
        %1695 = vrot.lane.b32.xlu0 %v480, 125
        %v1696 = vpop.permute.xlu0 %1695
        %v1697 = vsel %vm1690, %v1694, %v1696
        %v1698 = vsel %vm1690, %v1696, %v1694
        %s1699 = sld [smem:[#allocation7 + $0x1b]]
        %v1700 = vstv %s1699
        %v1701 = vmul.f32 %v1700, %v1691
        %v1702 = vmul.f32 %v1700, %v1692
        %s1703 = sld [smem:[#allocation7 + $0x9b]]
        %v1704 = vstv %s1703
        %v1705 = vmul.f32 %v1704, %v1697
        %v1706 = vmul.f32 %v1704, %v1698
        %v1707 = vadd.f32 %v1701, %v1705
        %v1708 = vadd.f32 %v1702, %v1706
        %s1709 = scalar_lea.vmem %s5, 51
        %v1710 = vld [vmem:[%s1709] ss:$8 sm:$0x3]
        %v1713 = vcombine.low %v1707, %v1708
        %v1715 = vunpack.c.l.s4 1966171168
        %v1716 = vunpack.c.0.s8 %v1715
        %v1717 = vlaneseq
        %v1718 = vshrl.u32 %v1717, 7
        %v1719 = vsub.s32 %v1716, %v1718
        %v1720 = vrot.slane %v1713, %v1719
        %v1722 = vunpack.c.l.s4 1966171168
        %v1723 = vunpack.c.0.s8 %v1722
        %v1724 = vlaneseq
        %v1725 = vshrl.u32 %v1724, 7
        %v1726 = vsub.s32 %v1723, %v1725
        %v1727 = vrot.slane %v1720, %v1726
        %v1729 = vmul.f32 %v1710, %v1727
        %v1730 = vadd.f32 %v1685, %v1729
        %1731 = vrot.lane.b32.xlu0 %v461, 115
        %v1732 = vpop.permute.xlu0 %1731
        %1733 = vrot.lane.b32.xlu0 %v462, 115
        %v1734 = vpop.permute.xlu0 %1733
        %vm1735 = vcmp.lt.s32.totalorder %v488, 115
        %v1736 = vsel %vm1735, %v1732, %v1734
        %v1737 = vsel %vm1735, %v1734, %v1732
        %1738 = vrot.lane.b32.xlu0 %v471, 115
        %v1739 = vpop.permute.xlu0 %1738
        %1740 = vrot.lane.b32.xlu0 %v480, 115
        %v1741 = vpop.permute.xlu0 %1740
        %v1742 = vsel %vm1735, %v1739, %v1741
        %v1743 = vsel %vm1735, %v1741, %v1739
        %s1744 = sld [smem:[#allocation7 + $0x1c]]
        %v1745 = vstv %s1744
        %v1746 = vmul.f32 %v1745, %v1736
        %v1747 = vmul.f32 %v1745, %v1737
        %s1748 = sld [smem:[#allocation7 + $0x9c]]
        %v1749 = vstv %s1748
        %v1750 = vmul.f32 %v1749, %v1742
        %v1751 = vmul.f32 %v1749, %v1743
        %v1752 = vadd.f32 %v1746, %v1750
        %v1753 = vadd.f32 %v1747, %v1751
        %s1754 = scalar_lea.vmem %s5, 52
        %v1755 = vld [vmem:[%s1754] ss:$8 sm:$0x3]
        %v1758 = vcombine.low %v1752, %v1753
        %v1760 = vunpack.c.l.s4 1966171168
        %v1761 = vunpack.c.0.s8 %v1760
        %v1762 = vlaneseq
        %v1763 = vshrl.u32 %v1762, 7
        %v1764 = vsub.s32 %v1761, %v1763
        %v1765 = vrot.slane %v1758, %v1764
        %v1767 = vunpack.c.l.s4 1966171168
        %v1768 = vunpack.c.0.s8 %v1767
        %v1769 = vlaneseq
        %v1770 = vshrl.u32 %v1769, 7
        %v1771 = vsub.s32 %v1768, %v1770
        %v1772 = vrot.slane %v1765, %v1771
        %v1774 = vmul.f32 %v1755, %v1772
        %v1775 = vadd.f32 %v1730, %v1774
        %1776 = vrot.lane.b32.xlu0 %v461, 114
        %v1777 = vpop.permute.xlu0 %1776
        %1778 = vrot.lane.b32.xlu0 %v462, 114
        %v1779 = vpop.permute.xlu0 %1778
        %vm1780 = vcmp.lt.s32.totalorder %v488, 114
        %v1781 = vsel %vm1780, %v1777, %v1779
        %v1782 = vsel %vm1780, %v1779, %v1777
        %1783 = vrot.lane.b32.xlu0 %v471, 114
        %v1784 = vpop.permute.xlu0 %1783
        %1785 = vrot.lane.b32.xlu0 %v480, 114
        %v1786 = vpop.permute.xlu0 %1785
        %v1787 = vsel %vm1780, %v1784, %v1786
        %v1788 = vsel %vm1780, %v1786, %v1784
        %s1789 = sld [smem:[#allocation7 + $0x1d]]
        %v1790 = vstv %s1789
        %v1791 = vmul.f32 %v1790, %v1781
        %v1792 = vmul.f32 %v1790, %v1782
        %s1793 = sld [smem:[#allocation7 + $0x9d]]
        %v1794 = vstv %s1793
        %v1795 = vmul.f32 %v1794, %v1787
        %v1796 = vmul.f32 %v1794, %v1788
        %v1797 = vadd.f32 %v1791, %v1795
        %v1798 = vadd.f32 %v1792, %v1796
        %s1799 = scalar_lea.vmem %s5, 53
        %v1800 = vld [vmem:[%s1799] ss:$8 sm:$0x3]
        %v1803 = vcombine.low %v1797, %v1798
        %v1805 = vunpack.c.l.s4 1966171168
        %v1806 = vunpack.c.0.s8 %v1805
        %v1807 = vlaneseq
        %v1808 = vshrl.u32 %v1807, 7
        %v1809 = vsub.s32 %v1806, %v1808
        %v1810 = vrot.slane %v1803, %v1809
        %v1812 = vunpack.c.l.s4 1966171168
        %v1813 = vunpack.c.0.s8 %v1812
        %v1814 = vlaneseq
        %v1815 = vshrl.u32 %v1814, 7
        %v1816 = vsub.s32 %v1813, %v1815
        %v1817 = vrot.slane %v1810, %v1816
        %v1819 = vmul.f32 %v1800, %v1817
        %v1820 = vadd.f32 %v1775, %v1819
        %1821 = vrot.lane.b32.xlu0 %v461, 113
        %v1822 = vpop.permute.xlu0 %1821
        %1823 = vrot.lane.b32.xlu0 %v462, 113
        %v1824 = vpop.permute.xlu0 %1823
        %vm1825 = vcmp.lt.s32.totalorder %v488, 113
        %v1826 = vsel %vm1825, %v1822, %v1824
        %v1827 = vsel %vm1825, %v1824, %v1822
        %1828 = vrot.lane.b32.xlu0 %v471, 113
        %v1829 = vpop.permute.xlu0 %1828
        %1830 = vrot.lane.b32.xlu0 %v480, 113
        %v1831 = vpop.permute.xlu0 %1830
        %v1832 = vsel %vm1825, %v1829, %v1831
        %v1833 = vsel %vm1825, %v1831, %v1829
        %s1834 = sld [smem:[#allocation7 + $0x1e]]
        %v1835 = vstv %s1834
        %v1836 = vmul.f32 %v1835, %v1826
        %v1837 = vmul.f32 %v1835, %v1827
        %s1838 = sld [smem:[#allocation7 + $0x9e]]
        %v1839 = vstv %s1838
        %v1840 = vmul.f32 %v1839, %v1832
        %v1841 = vmul.f32 %v1839, %v1833
        %v1842 = vadd.f32 %v1836, %v1840
        %v1843 = vadd.f32 %v1837, %v1841
        %s1844 = scalar_lea.vmem %s5, 54
        %v1845 = vld [vmem:[%s1844] ss:$8 sm:$0x3]
        %v1848 = vcombine.low %v1842, %v1843
        %v1850 = vunpack.c.l.s4 1966171168
        %v1851 = vunpack.c.0.s8 %v1850
        %v1852 = vlaneseq
        %v1853 = vshrl.u32 %v1852, 7
        %v1854 = vsub.s32 %v1851, %v1853
        %v1855 = vrot.slane %v1848, %v1854
        %v1857 = vunpack.c.l.s4 1966171168
        %v1858 = vunpack.c.0.s8 %v1857
        %v1859 = vlaneseq
        %v1860 = vshrl.u32 %v1859, 7
        %v1861 = vsub.s32 %v1858, %v1860
        %v1862 = vrot.slane %v1855, %v1861
        %v1864 = vmul.f32 %v1845, %v1862
        %v1865 = vadd.f32 %v1820, %v1864
        %1866 = vrot.lane.b32.xlu0 %v461, 112
        %v1867 = vpop.permute.xlu0 %1866
        %1868 = vrot.lane.b32.xlu0 %v462, 112
        %v1869 = vpop.permute.xlu0 %1868
        %vm1870 = vcmp.lt.s32.totalorder %v488, 112
        %v1871 = vsel %vm1870, %v1867, %v1869
        %v1872 = vsel %vm1870, %v1869, %v1867
        %1873 = vrot.lane.b32.xlu0 %v471, 112
        %v1874 = vpop.permute.xlu0 %1873
        %1875 = vrot.lane.b32.xlu0 %v480, 112
        %v1876 = vpop.permute.xlu0 %1875
        %v1877 = vsel %vm1870, %v1874, %v1876
        %v1878 = vsel %vm1870, %v1876, %v1874
        %s1879 = sld [smem:[#allocation7 + $0x1f]]
        %v1880 = vstv %s1879
        %v1881 = vmul.f32 %v1880, %v1871
        %v1882 = vmul.f32 %v1880, %v1872
        %s1883 = sld [smem:[#allocation7 + $0x9f]]
        %v1884 = vstv %s1883
        %v1885 = vmul.f32 %v1884, %v1877
        %v1886 = vmul.f32 %v1884, %v1878
        %v1887 = vadd.f32 %v1881, %v1885
        %v1888 = vadd.f32 %v1882, %v1886
        %s1889 = scalar_lea.vmem %s5, 55
        %v1890 = vld [vmem:[%s1889] ss:$8 sm:$0x3]
        %v1893 = vcombine.low %v1887, %v1888
        %v1895 = vunpack.c.l.s4 1966171168
        %v1896 = vunpack.c.0.s8 %v1895
        %v1897 = vlaneseq
        %v1898 = vshrl.u32 %v1897, 7
        %v1899 = vsub.s32 %v1896, %v1898
        %v1900 = vrot.slane %v1893, %v1899
        %v1902 = vunpack.c.l.s4 1966171168
        %v1903 = vunpack.c.0.s8 %v1902
        %v1904 = vlaneseq
        %v1905 = vshrl.u32 %v1904, 7
        %v1906 = vsub.s32 %v1903, %v1905
        %v1907 = vrot.slane %v1900, %v1906
        %v1909 = vmul.f32 %v1890, %v1907
        %v1910 = vadd.f32 %v1865, %v1909
        %1911 = vrot.lane.b32.xlu0 %v461, 111
        %v1912 = vpop.permute.xlu0 %1911
        %1913 = vrot.lane.b32.xlu0 %v462, 111
        %v1914 = vpop.permute.xlu0 %1913
        %vm1915 = vcmp.lt.s32.totalorder %v488, 111
        %v1916 = vsel %vm1915, %v1912, %v1914
        %v1917 = vsel %vm1915, %v1914, %v1912
        %1918 = vrot.lane.b32.xlu0 %v471, 111
        %v1919 = vpop.permute.xlu0 %1918
        %1920 = vrot.lane.b32.xlu0 %v480, 111
        %v1921 = vpop.permute.xlu0 %1920
        %v1922 = vsel %vm1915, %v1919, %v1921
        %v1923 = vsel %vm1915, %v1921, %v1919
        %s1924 = sld [smem:[#allocation7 + $0x20]]
        %v1925 = vstv %s1924
        %v1926 = vmul.f32 %v1925, %v1916
        %v1927 = vmul.f32 %v1925, %v1917
        %s1928 = sld [smem:[#allocation7 + $0xa0]]
        %v1929 = vstv %s1928
        %v1930 = vmul.f32 %v1929, %v1922
        %v1931 = vmul.f32 %v1929, %v1923
        %v1932 = vadd.f32 %v1926, %v1930
        %v1933 = vadd.f32 %v1927, %v1931
        %s1934 = scalar_lea.vmem %s5, 64
        %v1935 = vld [vmem:[%s1934] ss:$8 sm:$0x3]
        %v1938 = vcombine.low %v1932, %v1933
        %v1940 = vunpack.c.l.s4 1966171168
        %v1941 = vunpack.c.0.s8 %v1940
        %v1942 = vlaneseq
        %v1943 = vshrl.u32 %v1942, 7
        %v1944 = vsub.s32 %v1941, %v1943
        %v1945 = vrot.slane %v1938, %v1944
        %v1947 = vunpack.c.l.s4 1966171168
        %v1948 = vunpack.c.0.s8 %v1947
        %v1949 = vlaneseq
        %v1950 = vshrl.u32 %v1949, 7
        %v1951 = vsub.s32 %v1948, %v1950
        %v1952 = vrot.slane %v1945, %v1951
        %v1954 = vmul.f32 %v1935, %v1952
        %v1955 = vadd.f32 %v1910, %v1954
        %1956 = vrot.lane.b32.xlu0 %v461, 110
        %v1957 = vpop.permute.xlu0 %1956
        %1958 = vrot.lane.b32.xlu0 %v462, 110
        %v1959 = vpop.permute.xlu0 %1958
        %vm1960 = vcmp.lt.s32.totalorder %v488, 110
        %v1961 = vsel %vm1960, %v1957, %v1959
        %v1962 = vsel %vm1960, %v1959, %v1957
        %1963 = vrot.lane.b32.xlu0 %v471, 110
        %v1964 = vpop.permute.xlu0 %1963
        %1965 = vrot.lane.b32.xlu0 %v480, 110
        %v1966 = vpop.permute.xlu0 %1965
        %v1967 = vsel %vm1960, %v1964, %v1966
        %v1968 = vsel %vm1960, %v1966, %v1964
        %s1969 = sld [smem:[#allocation7 + $0x21]]
        %v1970 = vstv %s1969
        %v1971 = vmul.f32 %v1970, %v1961
        %v1972 = vmul.f32 %v1970, %v1962
        %s1973 = sld [smem:[#allocation7 + $0xa1]]
        %v1974 = vstv %s1973
        %v1975 = vmul.f32 %v1974, %v1967
        %v1976 = vmul.f32 %v1974, %v1968
        %v1977 = vadd.f32 %v1971, %v1975
        %v1978 = vadd.f32 %v1972, %v1976
        %s1979 = scalar_lea.vmem %s5, 65
        %v1980 = vld [vmem:[%s1979] ss:$8 sm:$0x3]
        %v1983 = vcombine.low %v1977, %v1978
        %v1985 = vunpack.c.l.s4 1966171168
        %v1986 = vunpack.c.0.s8 %v1985
        %v1987 = vlaneseq
        %v1988 = vshrl.u32 %v1987, 7
        %v1989 = vsub.s32 %v1986, %v1988
        %v1990 = vrot.slane %v1983, %v1989
        %v1992 = vunpack.c.l.s4 1966171168
        %v1993 = vunpack.c.0.s8 %v1992
        %v1994 = vlaneseq
        %v1995 = vshrl.u32 %v1994, 7
        %v1996 = vsub.s32 %v1993, %v1995
        %v1997 = vrot.slane %v1990, %v1996
        %v1999 = vmul.f32 %v1980, %v1997
        %v2000 = vadd.f32 %v1955, %v1999
        %2001 = vrot.lane.b32.xlu0 %v461, 109
        %v2002 = vpop.permute.xlu0 %2001
        %2003 = vrot.lane.b32.xlu0 %v462, 109
        %v2004 = vpop.permute.xlu0 %2003
        %vm2005 = vcmp.lt.s32.totalorder %v488, 109
        %v2006 = vsel %vm2005, %v2002, %v2004
        %v2007 = vsel %vm2005, %v2004, %v2002
        %2008 = vrot.lane.b32.xlu0 %v471, 109
        %v2009 = vpop.permute.xlu0 %2008
        %2010 = vrot.lane.b32.xlu0 %v480, 109
        %v2011 = vpop.permute.xlu0 %2010
        %v2012 = vsel %vm2005, %v2009, %v2011
        %v2013 = vsel %vm2005, %v2011, %v2009
        %s2014 = sld [smem:[#allocation7 + $0x22]]
        %v2015 = vstv %s2014
        %v2016 = vmul.f32 %v2015, %v2006
        %v2017 = vmul.f32 %v2015, %v2007
        %s2018 = sld [smem:[#allocation7 + $0xa2]]
        %v2019 = vstv %s2018
        %v2020 = vmul.f32 %v2019, %v2012
        %v2021 = vmul.f32 %v2019, %v2013
        %v2022 = vadd.f32 %v2016, %v2020
        %v2023 = vadd.f32 %v2017, %v2021
        %s2024 = scalar_lea.vmem %s5, 66
        %v2025 = vld [vmem:[%s2024] ss:$8 sm:$0x3]
        %v2028 = vcombine.low %v2022, %v2023
        %v2030 = vunpack.c.l.s4 1966171168
        %v2031 = vunpack.c.0.s8 %v2030
        %v2032 = vlaneseq
        %v2033 = vshrl.u32 %v2032, 7
        %v2034 = vsub.s32 %v2031, %v2033
        %v2035 = vrot.slane %v2028, %v2034
        %v2037 = vunpack.c.l.s4 1966171168
        %v2038 = vunpack.c.0.s8 %v2037
        %v2039 = vlaneseq
        %v2040 = vshrl.u32 %v2039, 7
        %v2041 = vsub.s32 %v2038, %v2040
        %v2042 = vrot.slane %v2035, %v2041
        %v2044 = vmul.f32 %v2025, %v2042
        %v2045 = vadd.f32 %v2000, %v2044
        %2046 = vrot.lane.b32.xlu0 %v461, 99
        %v2047 = vpop.permute.xlu0 %2046
        %2048 = vrot.lane.b32.xlu0 %v462, 99
        %v2049 = vpop.permute.xlu0 %2048
        %vm2050 = vcmp.lt.s32.totalorder %v488, 99
        %v2051 = vsel %vm2050, %v2047, %v2049
        %v2052 = vsel %vm2050, %v2049, %v2047
        %2053 = vrot.lane.b32.xlu0 %v471, 99
        %v2054 = vpop.permute.xlu0 %2053
        %2055 = vrot.lane.b32.xlu0 %v480, 99
        %v2056 = vpop.permute.xlu0 %2055
        %v2057 = vsel %vm2050, %v2054, %v2056
        %v2058 = vsel %vm2050, %v2056, %v2054
        %s2059 = sld [smem:[#allocation7 + $0x23]]
        %v2060 = vstv %s2059
        %v2061 = vmul.f32 %v2060, %v2051
        %v2062 = vmul.f32 %v2060, %v2052
        %s2063 = sld [smem:[#allocation7 + $0xa3]]
        %v2064 = vstv %s2063
        %v2065 = vmul.f32 %v2064, %v2057
        %v2066 = vmul.f32 %v2064, %v2058
        %v2067 = vadd.f32 %v2061, %v2065
        %v2068 = vadd.f32 %v2062, %v2066
        %s2069 = scalar_lea.vmem %s5, 67
        %v2070 = vld [vmem:[%s2069] ss:$8 sm:$0x3]
        %v2073 = vcombine.low %v2067, %v2068
        %v2075 = vunpack.c.l.s4 1966171168
        %v2076 = vunpack.c.0.s8 %v2075
        %v2077 = vlaneseq
        %v2078 = vshrl.u32 %v2077, 7
        %v2079 = vsub.s32 %v2076, %v2078
        %v2080 = vrot.slane %v2073, %v2079
        %v2082 = vunpack.c.l.s4 1966171168
        %v2083 = vunpack.c.0.s8 %v2082
        %v2084 = vlaneseq
        %v2085 = vshrl.u32 %v2084, 7
        %v2086 = vsub.s32 %v2083, %v2085
        %v2087 = vrot.slane %v2080, %v2086
        %v2089 = vmul.f32 %v2070, %v2087
        %v2090 = vadd.f32 %v2045, %v2089
        %2091 = vrot.lane.b32.xlu0 %v461, 98
        %v2092 = vpop.permute.xlu0 %2091
        %2093 = vrot.lane.b32.xlu0 %v462, 98
        %v2094 = vpop.permute.xlu0 %2093
        %vm2095 = vcmp.lt.s32.totalorder %v488, 98
        %v2096 = vsel %vm2095, %v2092, %v2094
        %v2097 = vsel %vm2095, %v2094, %v2092
        %2098 = vrot.lane.b32.xlu0 %v471, 98
        %v2099 = vpop.permute.xlu0 %2098
        %2100 = vrot.lane.b32.xlu0 %v480, 98
        %v2101 = vpop.permute.xlu0 %2100
        %v2102 = vsel %vm2095, %v2099, %v2101
        %v2103 = vsel %vm2095, %v2101, %v2099
        %s2104 = sld [smem:[#allocation7 + $0x24]]
        %v2105 = vstv %s2104
        %v2106 = vmul.f32 %v2105, %v2096
        %v2107 = vmul.f32 %v2105, %v2097
        %s2108 = sld [smem:[#allocation7 + $0xa4]]
        %v2109 = vstv %s2108
        %v2110 = vmul.f32 %v2109, %v2102
        %v2111 = vmul.f32 %v2109, %v2103
        %v2112 = vadd.f32 %v2106, %v2110
        %v2113 = vadd.f32 %v2107, %v2111
        %s2114 = scalar_lea.vmem %s5, 68
        %v2115 = vld [vmem:[%s2114] ss:$8 sm:$0x3]
        %v2118 = vcombine.low %v2112, %v2113
        %v2120 = vunpack.c.l.s4 1966171168
        %v2121 = vunpack.c.0.s8 %v2120
        %v2122 = vlaneseq
        %v2123 = vshrl.u32 %v2122, 7
        %v2124 = vsub.s32 %v2121, %v2123
        %v2125 = vrot.slane %v2118, %v2124
        %v2127 = vunpack.c.l.s4 1966171168
        %v2128 = vunpack.c.0.s8 %v2127
        %v2129 = vlaneseq
        %v2130 = vshrl.u32 %v2129, 7
        %v2131 = vsub.s32 %v2128, %v2130
        %v2132 = vrot.slane %v2125, %v2131
        %v2134 = vmul.f32 %v2115, %v2132
        %v2135 = vadd.f32 %v2090, %v2134
        %2136 = vrot.lane.b32.xlu0 %v461, 97
        %v2137 = vpop.permute.xlu0 %2136
        %2138 = vrot.lane.b32.xlu0 %v462, 97
        %v2139 = vpop.permute.xlu0 %2138
        %vm2140 = vcmp.lt.s32.totalorder %v488, 97
        %v2141 = vsel %vm2140, %v2137, %v2139
        %v2142 = vsel %vm2140, %v2139, %v2137
        %2143 = vrot.lane.b32.xlu0 %v471, 97
        %v2144 = vpop.permute.xlu0 %2143
        %2145 = vrot.lane.b32.xlu0 %v480, 97
        %v2146 = vpop.permute.xlu0 %2145
        %v2147 = vsel %vm2140, %v2144, %v2146
        %v2148 = vsel %vm2140, %v2146, %v2144
        %s2149 = sld [smem:[#allocation7 + $0x25]]
        %v2150 = vstv %s2149
        %v2151 = vmul.f32 %v2150, %v2141
        %v2152 = vmul.f32 %v2150, %v2142
        %s2153 = sld [smem:[#allocation7 + $0xa5]]
        %v2154 = vstv %s2153
        %v2155 = vmul.f32 %v2154, %v2147
        %v2156 = vmul.f32 %v2154, %v2148
        %v2157 = vadd.f32 %v2151, %v2155
        %v2158 = vadd.f32 %v2152, %v2156
        %s2159 = scalar_lea.vmem %s5, 69
        %v2160 = vld [vmem:[%s2159] ss:$8 sm:$0x3]
        %v2163 = vcombine.low %v2157, %v2158
        %v2165 = vunpack.c.l.s4 1966171168
        %v2166 = vunpack.c.0.s8 %v2165
        %v2167 = vlaneseq
        %v2168 = vshrl.u32 %v2167, 7
        %v2169 = vsub.s32 %v2166, %v2168
        %v2170 = vrot.slane %v2163, %v2169
        %v2172 = vunpack.c.l.s4 1966171168
        %v2173 = vunpack.c.0.s8 %v2172
        %v2174 = vlaneseq
        %v2175 = vshrl.u32 %v2174, 7
        %v2176 = vsub.s32 %v2173, %v2175
        %v2177 = vrot.slane %v2170, %v2176
        %v2179 = vmul.f32 %v2160, %v2177
        %v2180 = vadd.f32 %v2135, %v2179
        %2181 = vrot.lane.b32.xlu0 %v461, 96
        %v2182 = vpop.permute.xlu0 %2181
        %2183 = vrot.lane.b32.xlu0 %v462, 96
        %v2184 = vpop.permute.xlu0 %2183
        %vm2185 = vcmp.lt.s32.totalorder %v488, 96
        %v2186 = vsel %vm2185, %v2182, %v2184
        %v2187 = vsel %vm2185, %v2184, %v2182
        %2188 = vrot.lane.b32.xlu0 %v471, 96
        %v2189 = vpop.permute.xlu0 %2188
        %2190 = vrot.lane.b32.xlu0 %v480, 96
        %v2191 = vpop.permute.xlu0 %2190
        %v2192 = vsel %vm2185, %v2189, %v2191
        %v2193 = vsel %vm2185, %v2191, %v2189
        %s2194 = sld [smem:[#allocation7 + $0x26]]
        %v2195 = vstv %s2194
        %v2196 = vmul.f32 %v2195, %v2186
        %v2197 = vmul.f32 %v2195, %v2187
        %s2198 = sld [smem:[#allocation7 + $0xa6]]
        %v2199 = vstv %s2198
        %v2200 = vmul.f32 %v2199, %v2192
        %v2201 = vmul.f32 %v2199, %v2193
        %v2202 = vadd.f32 %v2196, %v2200
        %v2203 = vadd.f32 %v2197, %v2201
        %s2204 = scalar_lea.vmem %s5, 70
        %v2205 = vld [vmem:[%s2204] ss:$8 sm:$0x3]
        %v2208 = vcombine.low %v2202, %v2203
        %v2210 = vunpack.c.l.s4 1966171168
        %v2211 = vunpack.c.0.s8 %v2210
        %v2212 = vlaneseq
        %v2213 = vshrl.u32 %v2212, 7
        %v2214 = vsub.s32 %v2211, %v2213
        %v2215 = vrot.slane %v2208, %v2214
        %v2217 = vunpack.c.l.s4 1966171168
        %v2218 = vunpack.c.0.s8 %v2217
        %v2219 = vlaneseq
        %v2220 = vshrl.u32 %v2219, 7
        %v2221 = vsub.s32 %v2218, %v2220
        %v2222 = vrot.slane %v2215, %v2221
        %v2224 = vmul.f32 %v2205, %v2222
        %v2225 = vadd.f32 %v2180, %v2224
        %2226 = vrot.lane.b32.xlu0 %v461, 95
        %v2227 = vpop.permute.xlu0 %2226
        %2228 = vrot.lane.b32.xlu0 %v462, 95
        %v2229 = vpop.permute.xlu0 %2228
        %vm2230 = vcmp.lt.s32.totalorder %v488, 95
        %v2231 = vsel %vm2230, %v2227, %v2229
        %v2232 = vsel %vm2230, %v2229, %v2227
        %2233 = vrot.lane.b32.xlu0 %v471, 95
        %v2234 = vpop.permute.xlu0 %2233
        %2235 = vrot.lane.b32.xlu0 %v480, 95
        %v2236 = vpop.permute.xlu0 %2235
        %v2237 = vsel %vm2230, %v2234, %v2236
        %v2238 = vsel %vm2230, %v2236, %v2234
        %s2239 = sld [smem:[#allocation7 + $0x27]]
        %v2240 = vstv %s2239
        %v2241 = vmul.f32 %v2240, %v2231
        %v2242 = vmul.f32 %v2240, %v2232
        %s2243 = sld [smem:[#allocation7 + $0xa7]]
        %v2244 = vstv %s2243
        %v2245 = vmul.f32 %v2244, %v2237
        %v2246 = vmul.f32 %v2244, %v2238
        %v2247 = vadd.f32 %v2241, %v2245
        %v2248 = vadd.f32 %v2242, %v2246
        %s2249 = scalar_lea.vmem %s5, 71
        %v2250 = vld [vmem:[%s2249] ss:$8 sm:$0x3]
        %v2253 = vcombine.low %v2247, %v2248
        %v2255 = vunpack.c.l.s4 1966171168
        %v2256 = vunpack.c.0.s8 %v2255
        %v2257 = vlaneseq
        %v2258 = vshrl.u32 %v2257, 7
        %v2259 = vsub.s32 %v2256, %v2258
        %v2260 = vrot.slane %v2253, %v2259
        %v2262 = vunpack.c.l.s4 1966171168
        %v2263 = vunpack.c.0.s8 %v2262
        %v2264 = vlaneseq
        %v2265 = vshrl.u32 %v2264, 7
        %v2266 = vsub.s32 %v2263, %v2265
        %v2267 = vrot.slane %v2260, %v2266
        %v2269 = vmul.f32 %v2250, %v2267
        %v2270 = vadd.f32 %v2225, %v2269
        %2271 = vrot.lane.b32.xlu0 %v461, 94
        %v2272 = vpop.permute.xlu0 %2271
        %2273 = vrot.lane.b32.xlu0 %v462, 94
        %v2274 = vpop.permute.xlu0 %2273
        %vm2275 = vcmp.lt.s32.totalorder %v488, 94
        %v2276 = vsel %vm2275, %v2272, %v2274
        %v2277 = vsel %vm2275, %v2274, %v2272
        %2278 = vrot.lane.b32.xlu0 %v471, 94
        %v2279 = vpop.permute.xlu0 %2278
        %2280 = vrot.lane.b32.xlu0 %v480, 94
        %v2281 = vpop.permute.xlu0 %2280
        %v2282 = vsel %vm2275, %v2279, %v2281
        %v2283 = vsel %vm2275, %v2281, %v2279
        %s2284 = sld [smem:[#allocation7 + $0x28]]
        %v2285 = vstv %s2284
        %v2286 = vmul.f32 %v2285, %v2276
        %v2287 = vmul.f32 %v2285, %v2277
        %s2288 = sld [smem:[#allocation7 + $0xa8]]
        %v2289 = vstv %s2288
        %v2290 = vmul.f32 %v2289, %v2282
        %v2291 = vmul.f32 %v2289, %v2283
        %v2292 = vadd.f32 %v2286, %v2290
        %v2293 = vadd.f32 %v2287, %v2291
        %s2294 = scalar_lea.vmem %s5, 80
        %v2295 = vld [vmem:[%s2294] ss:$8 sm:$0x3]
        %v2298 = vcombine.low %v2292, %v2293
        %v2300 = vunpack.c.l.s4 1966171168
        %v2301 = vunpack.c.0.s8 %v2300
        %v2302 = vlaneseq
        %v2303 = vshrl.u32 %v2302, 7
        %v2304 = vsub.s32 %v2301, %v2303
        %v2305 = vrot.slane %v2298, %v2304
        %v2307 = vunpack.c.l.s4 1966171168
        %v2308 = vunpack.c.0.s8 %v2307
        %v2309 = vlaneseq
        %v2310 = vshrl.u32 %v2309, 7
        %v2311 = vsub.s32 %v2308, %v2310
        %v2312 = vrot.slane %v2305, %v2311
        %v2314 = vmul.f32 %v2295, %v2312
        %v2315 = vadd.f32 %v2270, %v2314
        %2316 = vrot.lane.b32.xlu0 %v461, 93
        %v2317 = vpop.permute.xlu0 %2316
        %2318 = vrot.lane.b32.xlu0 %v462, 93
        %v2319 = vpop.permute.xlu0 %2318
        %vm2320 = vcmp.lt.s32.totalorder %v488, 93
        %v2321 = vsel %vm2320, %v2317, %v2319
        %v2322 = vsel %vm2320, %v2319, %v2317
        %2323 = vrot.lane.b32.xlu0 %v471, 93
        %v2324 = vpop.permute.xlu0 %2323
        %2325 = vrot.lane.b32.xlu0 %v480, 93
        %v2326 = vpop.permute.xlu0 %2325
        %v2327 = vsel %vm2320, %v2324, %v2326
        %v2328 = vsel %vm2320, %v2326, %v2324
        %s2329 = sld [smem:[#allocation7 + $0x29]]
        %v2330 = vstv %s2329
        %v2331 = vmul.f32 %v2330, %v2321
        %v2332 = vmul.f32 %v2330, %v2322
        %s2333 = sld [smem:[#allocation7 + $0xa9]]
        %v2334 = vstv %s2333
        %v2335 = vmul.f32 %v2334, %v2327
        %v2336 = vmul.f32 %v2334, %v2328
        %v2337 = vadd.f32 %v2331, %v2335
        %v2338 = vadd.f32 %v2332, %v2336
        %s2339 = scalar_lea.vmem %s5, 81
        %v2340 = vld [vmem:[%s2339] ss:$8 sm:$0x3]
        %v2343 = vcombine.low %v2337, %v2338
        %v2345 = vunpack.c.l.s4 1966171168
        %v2346 = vunpack.c.0.s8 %v2345
        %v2347 = vlaneseq
        %v2348 = vshrl.u32 %v2347, 7
        %v2349 = vsub.s32 %v2346, %v2348
        %v2350 = vrot.slane %v2343, %v2349
        %v2352 = vunpack.c.l.s4 1966171168
        %v2353 = vunpack.c.0.s8 %v2352
        %v2354 = vlaneseq
        %v2355 = vshrl.u32 %v2354, 7
        %v2356 = vsub.s32 %v2353, %v2355
        %v2357 = vrot.slane %v2350, %v2356
        %v2359 = vmul.f32 %v2340, %v2357
        %v2360 = vadd.f32 %v2315, %v2359
        %2361 = vrot.lane.b32.xlu0 %v461, 83
        %v2362 = vpop.permute.xlu0 %2361
        %2363 = vrot.lane.b32.xlu0 %v462, 83
        %v2364 = vpop.permute.xlu0 %2363
        %vm2365 = vcmp.lt.s32.totalorder %v488, 83
        %v2366 = vsel %vm2365, %v2362, %v2364
        %v2367 = vsel %vm2365, %v2364, %v2362
        %2368 = vrot.lane.b32.xlu0 %v471, 83
        %v2369 = vpop.permute.xlu0 %2368
        %2370 = vrot.lane.b32.xlu0 %v480, 83
        %v2371 = vpop.permute.xlu0 %2370
        %v2372 = vsel %vm2365, %v2369, %v2371
        %v2373 = vsel %vm2365, %v2371, %v2369
        %s2374 = sld [smem:[#allocation7 + $0x2a]]
        %v2375 = vstv %s2374
        %v2376 = vmul.f32 %v2375, %v2366
        %v2377 = vmul.f32 %v2375, %v2367
        %s2378 = sld [smem:[#allocation7 + $0xaa]]
        %v2379 = vstv %s2378
        %v2380 = vmul.f32 %v2379, %v2372
        %v2381 = vmul.f32 %v2379, %v2373
        %v2382 = vadd.f32 %v2376, %v2380
        %v2383 = vadd.f32 %v2377, %v2381
        %s2384 = scalar_lea.vmem %s5, 82
        %v2385 = vld [vmem:[%s2384] ss:$8 sm:$0x3]
        %v2388 = vcombine.low %v2382, %v2383
        %v2390 = vunpack.c.l.s4 1966171168
        %v2391 = vunpack.c.0.s8 %v2390
        %v2392 = vlaneseq
        %v2393 = vshrl.u32 %v2392, 7
        %v2394 = vsub.s32 %v2391, %v2393
        %v2395 = vrot.slane %v2388, %v2394
        %v2397 = vunpack.c.l.s4 1966171168
        %v2398 = vunpack.c.0.s8 %v2397
        %v2399 = vlaneseq
        %v2400 = vshrl.u32 %v2399, 7
        %v2401 = vsub.s32 %v2398, %v2400
        %v2402 = vrot.slane %v2395, %v2401
        %v2404 = vmul.f32 %v2385, %v2402
        %v2405 = vadd.f32 %v2360, %v2404
        %2406 = vrot.lane.b32.xlu0 %v461, 82
        %v2407 = vpop.permute.xlu0 %2406
        %2408 = vrot.lane.b32.xlu0 %v462, 82
        %v2409 = vpop.permute.xlu0 %2408
        %vm2410 = vcmp.lt.s32.totalorder %v488, 82
        %v2411 = vsel %vm2410, %v2407, %v2409
        %v2412 = vsel %vm2410, %v2409, %v2407
        %2413 = vrot.lane.b32.xlu0 %v471, 82
        %v2414 = vpop.permute.xlu0 %2413
        %2415 = vrot.lane.b32.xlu0 %v480, 82
        %v2416 = vpop.permute.xlu0 %2415
        %v2417 = vsel %vm2410, %v2414, %v2416
        %v2418 = vsel %vm2410, %v2416, %v2414
        %s2419 = sld [smem:[#allocation7 + $0x2b]]
        %v2420 = vstv %s2419
        %v2421 = vmul.f32 %v2420, %v2411
        %v2422 = vmul.f32 %v2420, %v2412
        %s2423 = sld [smem:[#allocation7 + $0xab]]
        %v2424 = vstv %s2423
        %v2425 = vmul.f32 %v2424, %v2417
        %v2426 = vmul.f32 %v2424, %v2418
        %v2427 = vadd.f32 %v2421, %v2425
        %v2428 = vadd.f32 %v2422, %v2426
        %s2429 = scalar_lea.vmem %s5, 83
        %v2430 = vld [vmem:[%s2429] ss:$8 sm:$0x3]
        %v2433 = vcombine.low %v2427, %v2428
        %v2435 = vunpack.c.l.s4 1966171168
        %v2436 = vunpack.c.0.s8 %v2435
        %v2437 = vlaneseq
        %v2438 = vshrl.u32 %v2437, 7
        %v2439 = vsub.s32 %v2436, %v2438
        %v2440 = vrot.slane %v2433, %v2439
        %v2442 = vunpack.c.l.s4 1966171168
        %v2443 = vunpack.c.0.s8 %v2442
        %v2444 = vlaneseq
        %v2445 = vshrl.u32 %v2444, 7
        %v2446 = vsub.s32 %v2443, %v2445
        %v2447 = vrot.slane %v2440, %v2446
        %v2449 = vmul.f32 %v2430, %v2447
        %v2450 = vadd.f32 %v2405, %v2449
        %2451 = vrot.lane.b32.xlu0 %v461, 81
        %v2452 = vpop.permute.xlu0 %2451
        %2453 = vrot.lane.b32.xlu0 %v462, 81
        %v2454 = vpop.permute.xlu0 %2453
        %vm2455 = vcmp.lt.s32.totalorder %v488, 81
        %v2456 = vsel %vm2455, %v2452, %v2454
        %v2457 = vsel %vm2455, %v2454, %v2452
        %2458 = vrot.lane.b32.xlu0 %v471, 81
        %v2459 = vpop.permute.xlu0 %2458
        %2460 = vrot.lane.b32.xlu0 %v480, 81
        %v2461 = vpop.permute.xlu0 %2460
        %v2462 = vsel %vm2455, %v2459, %v2461
        %v2463 = vsel %vm2455, %v2461, %v2459
        %s2464 = sld [smem:[#allocation7 + $0x2c]]
        %v2465 = vstv %s2464
        %v2466 = vmul.f32 %v2465, %v2456
        %v2467 = vmul.f32 %v2465, %v2457
        %s2468 = sld [smem:[#allocation7 + $0xac]]
        %v2469 = vstv %s2468
        %v2470 = vmul.f32 %v2469, %v2462
        %v2471 = vmul.f32 %v2469, %v2463
        %v2472 = vadd.f32 %v2466, %v2470
        %v2473 = vadd.f32 %v2467, %v2471
        %s2474 = scalar_lea.vmem %s5, 84
        %v2475 = vld [vmem:[%s2474] ss:$8 sm:$0x3]
        %v2478 = vcombine.low %v2472, %v2473
        %v2480 = vunpack.c.l.s4 1966171168
        %v2481 = vunpack.c.0.s8 %v2480
        %v2482 = vlaneseq
        %v2483 = vshrl.u32 %v2482, 7
        %v2484 = vsub.s32 %v2481, %v2483
        %v2485 = vrot.slane %v2478, %v2484
        %v2487 = vunpack.c.l.s4 1966171168
        %v2488 = vunpack.c.0.s8 %v2487
        %v2489 = vlaneseq
        %v2490 = vshrl.u32 %v2489, 7
        %v2491 = vsub.s32 %v2488, %v2490
        %v2492 = vrot.slane %v2485, %v2491
        %v2494 = vmul.f32 %v2475, %v2492
        %v2495 = vadd.f32 %v2450, %v2494
        %2496 = vrot.lane.b32.xlu0 %v461, 80
        %v2497 = vpop.permute.xlu0 %2496
        %2498 = vrot.lane.b32.xlu0 %v462, 80
        %v2499 = vpop.permute.xlu0 %2498
        %vm2500 = vcmp.lt.s32.totalorder %v488, 80
        %v2501 = vsel %vm2500, %v2497, %v2499
        %v2502 = vsel %vm2500, %v2499, %v2497
        %2503 = vrot.lane.b32.xlu0 %v471, 80
        %v2504 = vpop.permute.xlu0 %2503
        %2505 = vrot.lane.b32.xlu0 %v480, 80
        %v2506 = vpop.permute.xlu0 %2505
        %v2507 = vsel %vm2500, %v2504, %v2506
        %v2508 = vsel %vm2500, %v2506, %v2504
        %s2509 = sld [smem:[#allocation7 + $0x2d]]
        %v2510 = vstv %s2509
        %v2511 = vmul.f32 %v2510, %v2501
        %v2512 = vmul.f32 %v2510, %v2502
        %s2513 = sld [smem:[#allocation7 + $0xad]]
        %v2514 = vstv %s2513
        %v2515 = vmul.f32 %v2514, %v2507
        %v2516 = vmul.f32 %v2514, %v2508
        %v2517 = vadd.f32 %v2511, %v2515
        %v2518 = vadd.f32 %v2512, %v2516
        %s2519 = scalar_lea.vmem %s5, 85
        %v2520 = vld [vmem:[%s2519] ss:$8 sm:$0x3]
        %v2523 = vcombine.low %v2517, %v2518
        %v2525 = vunpack.c.l.s4 1966171168
        %v2526 = vunpack.c.0.s8 %v2525
        %v2527 = vlaneseq
        %v2528 = vshrl.u32 %v2527, 7
        %v2529 = vsub.s32 %v2526, %v2528
        %v2530 = vrot.slane %v2523, %v2529
        %v2532 = vunpack.c.l.s4 1966171168
        %v2533 = vunpack.c.0.s8 %v2532
        %v2534 = vlaneseq
        %v2535 = vshrl.u32 %v2534, 7
        %v2536 = vsub.s32 %v2533, %v2535
        %v2537 = vrot.slane %v2530, %v2536
        %v2539 = vmul.f32 %v2520, %v2537
        %v2540 = vadd.f32 %v2495, %v2539
        %2541 = vrot.lane.b32.xlu0 %v461, 79
        %v2542 = vpop.permute.xlu0 %2541
        %2543 = vrot.lane.b32.xlu0 %v462, 79
        %v2544 = vpop.permute.xlu0 %2543
        %vm2545 = vcmp.lt.s32.totalorder %v488, 79
        %v2546 = vsel %vm2545, %v2542, %v2544
        %v2547 = vsel %vm2545, %v2544, %v2542
        %2548 = vrot.lane.b32.xlu0 %v471, 79
        %v2549 = vpop.permute.xlu0 %2548
        %2550 = vrot.lane.b32.xlu0 %v480, 79
        %v2551 = vpop.permute.xlu0 %2550
        %v2552 = vsel %vm2545, %v2549, %v2551
        %v2553 = vsel %vm2545, %v2551, %v2549
        %s2554 = sld [smem:[#allocation7 + $0x2e]]
        %v2555 = vstv %s2554
        %v2556 = vmul.f32 %v2555, %v2546
        %v2557 = vmul.f32 %v2555, %v2547
        %s2558 = sld [smem:[#allocation7 + $0xae]]
        %v2559 = vstv %s2558
        %v2560 = vmul.f32 %v2559, %v2552
        %v2561 = vmul.f32 %v2559, %v2553
        %v2562 = vadd.f32 %v2556, %v2560
        %v2563 = vadd.f32 %v2557, %v2561
        %s2564 = scalar_lea.vmem %s5, 86
        %v2565 = vld [vmem:[%s2564] ss:$8 sm:$0x3]
        %v2568 = vcombine.low %v2562, %v2563
        %v2570 = vunpack.c.l.s4 1966171168
        %v2571 = vunpack.c.0.s8 %v2570
        %v2572 = vlaneseq
        %v2573 = vshrl.u32 %v2572, 7
        %v2574 = vsub.s32 %v2571, %v2573
        %v2575 = vrot.slane %v2568, %v2574
        %v2577 = vunpack.c.l.s4 1966171168
        %v2578 = vunpack.c.0.s8 %v2577
        %v2579 = vlaneseq
        %v2580 = vshrl.u32 %v2579, 7
        %v2581 = vsub.s32 %v2578, %v2580
        %v2582 = vrot.slane %v2575, %v2581
        %v2584 = vmul.f32 %v2565, %v2582
        %v2585 = vadd.f32 %v2540, %v2584
        %2586 = vrot.lane.b32.xlu0 %v461, 78
        %v2587 = vpop.permute.xlu0 %2586
        %2588 = vrot.lane.b32.xlu0 %v462, 78
        %v2589 = vpop.permute.xlu0 %2588
        %vm2590 = vcmp.lt.s32.totalorder %v488, 78
        %v2591 = vsel %vm2590, %v2587, %v2589
        %v2592 = vsel %vm2590, %v2589, %v2587
        %2593 = vrot.lane.b32.xlu0 %v471, 78
        %v2594 = vpop.permute.xlu0 %2593
        %2595 = vrot.lane.b32.xlu0 %v480, 78
        %v2596 = vpop.permute.xlu0 %2595
        %v2597 = vsel %vm2590, %v2594, %v2596
        %v2598 = vsel %vm2590, %v2596, %v2594
        %s2599 = sld [smem:[#allocation7 + $0x2f]]
        %v2600 = vstv %s2599
        %v2601 = vmul.f32 %v2600, %v2591
        %v2602 = vmul.f32 %v2600, %v2592
        %s2603 = sld [smem:[#allocation7 + $0xaf]]
        %v2604 = vstv %s2603
        %v2605 = vmul.f32 %v2604, %v2597
        %v2606 = vmul.f32 %v2604, %v2598
        %v2607 = vadd.f32 %v2601, %v2605
        %v2608 = vadd.f32 %v2602, %v2606
        %s2609 = scalar_lea.vmem %s5, 87
        %v2610 = vld [vmem:[%s2609] ss:$8 sm:$0x3]
        %v2613 = vcombine.low %v2607, %v2608
        %v2615 = vunpack.c.l.s4 1966171168
        %v2616 = vunpack.c.0.s8 %v2615
        %v2617 = vlaneseq
        %v2618 = vshrl.u32 %v2617, 7
        %v2619 = vsub.s32 %v2616, %v2618
        %v2620 = vrot.slane %v2613, %v2619
        %v2622 = vunpack.c.l.s4 1966171168
        %v2623 = vunpack.c.0.s8 %v2622
        %v2624 = vlaneseq
        %v2625 = vshrl.u32 %v2624, 7
        %v2626 = vsub.s32 %v2623, %v2625
        %v2627 = vrot.slane %v2620, %v2626
        %v2629 = vmul.f32 %v2610, %v2627
        %v2630 = vadd.f32 %v2585, %v2629
        %2631 = vrot.lane.b32.xlu0 %v461, 77
        %v2632 = vpop.permute.xlu0 %2631
        %2633 = vrot.lane.b32.xlu0 %v462, 77
        %v2634 = vpop.permute.xlu0 %2633
        %vm2635 = vcmp.lt.s32.totalorder %v488, 77
        %v2636 = vsel %vm2635, %v2632, %v2634
        %v2637 = vsel %vm2635, %v2634, %v2632
        %2638 = vrot.lane.b32.xlu0 %v471, 77
        %v2639 = vpop.permute.xlu0 %2638
        %2640 = vrot.lane.b32.xlu0 %v480, 77
        %v2641 = vpop.permute.xlu0 %2640
        %v2642 = vsel %vm2635, %v2639, %v2641
        %v2643 = vsel %vm2635, %v2641, %v2639
        %s2644 = sld [smem:[#allocation7 + $0x30]]
        %v2645 = vstv %s2644
        %v2646 = vmul.f32 %v2645, %v2636
        %v2647 = vmul.f32 %v2645, %v2637
        %s2648 = sld [smem:[#allocation7 + $0xb0]]
        %v2649 = vstv %s2648
        %v2650 = vmul.f32 %v2649, %v2642
        %v2651 = vmul.f32 %v2649, %v2643
        %v2652 = vadd.f32 %v2646, %v2650
        %v2653 = vadd.f32 %v2647, %v2651
        %s2654 = scalar_lea.vmem %s5, 96
        %v2655 = vld [vmem:[%s2654] ss:$8 sm:$0x3]
        %v2658 = vcombine.low %v2652, %v2653
        %v2660 = vunpack.c.l.s4 1966171168
        %v2661 = vunpack.c.0.s8 %v2660
        %v2662 = vlaneseq
        %v2663 = vshrl.u32 %v2662, 7
        %v2664 = vsub.s32 %v2661, %v2663
        %v2665 = vrot.slane %v2658, %v2664
        %v2667 = vunpack.c.l.s4 1966171168
        %v2668 = vunpack.c.0.s8 %v2667
        %v2669 = vlaneseq
        %v2670 = vshrl.u32 %v2669, 7
        %v2671 = vsub.s32 %v2668, %v2670
        %v2672 = vrot.slane %v2665, %v2671
        %v2674 = vmul.f32 %v2655, %v2672
        %v2675 = vadd.f32 %v2630, %v2674
        %v2676 = vsub.f32 0.0, %v2675
        %v2677 = vmul.f32 %v2676, 1.442695
        %v2678 = vpow.pop %v2677
        %v2679 = vadd.f32 %v2678, 1.0
        %v2680 = vrcp.pop %v2679
        %2682 = vset.pattern.permute.xlu0 0
        %2683 = vperm.xlu0 %2682, %v438
        %v2684 = vpop.permute.xlu0 %2683
        %2687 = vset.pattern.permute.xlu0 0
        %2688 = vperm.xlu0 %2687, %v439
        %v2689 = vpop.permute.xlu0 %2688
        %2692 = vset.pattern.permute.xlu0 0
        %2693 = vperm.xlu0 %2692, %v440
        %v2694 = vpop.permute.xlu0 %2693
        %2697 = vset.pattern.permute.xlu0 0
        %2698 = vperm.xlu0 %2697, %v441
        %v2699 = vpop.permute.xlu0 %2698
        %v2701 = vmul.f32 %v353, %v2684
        %v2702 = vmul.f32 %v354, %v2684
        %v2703 = vmul.f32 %v355, %v2689
        %v2704 = vmul.f32 %v356, %v2689
        %v2705 = vmul.f32 %v357, %v2694
        %v2706 = vmul.f32 %v358, %v2694
        %v2707 = vmul.f32 %v359, %v2699
        %v2708 = vmul.f32 %v360, %v2699
        %v2710 = vlaneseq
        %v2711 = vshrl.u32 %v2710, 7
        %v2712 = vsub.s32 0, %v2711
        %v2713 = vrot.slane %v2680, %v2712
        %v2714 = vlaneseq
        %v2715 = vshrl.u32 %v2714, 7
        %v2716 = vsub.s32 1, %v2715
        %v2717 = vrot.slane %v2680, %v2716
        %v2720 = vadd.f32 %v2701, %v2713
        %v2721 = vadd.f32 %v2702, %v2717
        %v2722 = vadd.f32 %v2703, %v2713
        %v2723 = vadd.f32 %v2704, %v2717
        %v2724 = vadd.f32 %v2705, %v2713
        %v2725 = vadd.f32 %v2706, %v2717
        %v2726 = vadd.f32 %v2707, %v2713
        %v2727 = vadd.f32 %v2708, %v2717
        %2728 = vst [vmem:[%s338] sm:$0xff] %v2720
        %2729 = vst [vmem:[%s338 + $0x8] sm:$0xff] %v2721
        %2730 = vst [vmem:[%s338 + $0x10] sm:$0xff] %v2722
        %2731 = vst [vmem:[%s338 + $0x18] sm:$0xff] %v2723
        %2732 = vst [vmem:[%s338 + $0x20] sm:$0xff] %v2724
        %2733 = vst [vmem:[%s338 + $0x28] sm:$0xff] %v2725
        %2734 = vst [vmem:[%s338 + $0x30] sm:$0xff] %v2726
        %2735 = vst [vmem:[%s338 + $0x38] sm:$0xff] %v2727
        %s2736 = sand.u32 %s208, 1
        %s2737 = scalar_lea.sflag [#allocation5], %s2736
        %s2738 = sand.u32 %s208, 1
        %s2739 = smul.addr %s2738, 64
        %s2740 = scalar_lea.vmem [#allocation8], %s2739
        // Predicated region
        $region61: #{tpu_custom_call.1} parent=51 // pred_check
          %p2741 = pneg %p218
        $region62: #{tpu_custom_call.1} parent=51 // pred_check_branch
          %2743 = sbr.rel (%p2741) target = $region64
        $region63: #{tpu_custom_call.1} parent=51 // pred_region
          %s2745 = ssub.s32 1024, 1024
          %2746 = vsyncadd %s2737, %s2745
          %s2747 = smul.addr %s27, 8
          %s2748 = smul.addr %s2747, 128
          %s2749 = scalar_lea.hbm %s8, %s2748
          %s2750 = sshll.u32 %s2740, 4
          %s2751 = int_to_ptr.vmem [resolvable:$true] %s2750
          %2756 = dma.vmem_to_hbm [thread:$0]  %s2751, 1024, %s2749, %s2737, 256, 256, 16
        $region64: #{tpu_custom_call.1} parent=51 // pred_fallthru
          _
      $region52: #{tpu_custom_call.1} parent=5 // pred_fallthru
        _
      %p2757 = scmp.le.s32.totalorder 2, %s22
      // Predicated region
      $region65: #{tpu_custom_call.1} parent=5 // pred_check
        %p2758 = pneg %p2757
      $region66: #{tpu_custom_call.1} parent=5 // pred_check_branch
        %2760 = sbr.rel (%p2758) target = $region68
      $region67: #{tpu_custom_call.1} parent=5 // pred_region
        %s2761 = ssub.s32 %s22, 2
        // Predicated region
        $region69: #{tpu_custom_call.1} parent=67 // pred_check
          %p2762 = pneg %p224
        $region70: #{tpu_custom_call.1} parent=67 // pred_check_branch
          %2764 = sbr.rel (%p2762) target = $region72
        $region71: #{tpu_custom_call.1} parent=67 // pred_region
          %s2765 = sand.u32 %s209, 1
          %s2766 = scalar_lea.sflag [#allocation5], %s2765
          %s2767 = sand.u32 %s209, 1
          %s2768 = smul.addr %s2767, 64
          %s2769 = scalar_lea.vmem [#allocation8], %s2768
          %2770 = dma.done %s2766, 1024
        $region72: #{tpu_custom_call.1} parent=67 // pred_fallthru
          _
      $region68: #{tpu_custom_call.1} parent=5 // pred_fallthru
        _
    $region6: #{tpu_custom_call.1} parent=1 // loop_footer
      %s26 = sadd.s32 1, %s22
    $region7: #{tpu_custom_call.1} parent=1 // loop_footer_branch
      %21 = sbr.rel target = $region3
    $region8: #{tpu_custom_call.1} parent=1 // loop_exit
      _
    %2771 = vsyncpa [#allocation4], 1
    %s2772 = scalar_lea.sflag [#allocation4], 1
    %2773 = vsyncpa %s2772, 1
    %2774 = vsyncpa [#allocation5], 1
    %s2775 = scalar_lea.sflag [#allocation5], 1
    %2776 = vsyncpa %s2775, 1
    %2777 = vsyncpa [#allocation6], 1
    %s2778 = scalar_lea.sflag [#allocation6], 1
    %2779 = vsyncpa %s2778, 1

</llo_original>
